<compile_context>
chip_gen: v7x
topology: tpu7x:2x2x1
jax: 0.10.0
libtpu: 0.0.40
codegen_flags: <defaults>
</compile_context>

<pallas_src>
import math

import jax
import jax.numpy as jnp
from jax.experimental import pallas as pl
from jax.experimental.pallas import tpu as pltpu

_BF16 = jnp.bfloat16


# ----------------------------- kernel helpers -----------------------------
def _elu(v):
    # f32 elementwise on the VPU/EUP.
    return jnp.where(v > 0, v, jnp.exp(v) - 1.0)


def _sigmoid(v):
    # Numerically stable and exact: the gate error compounds through the
    # residual stream over n_res_blocks, so no approx reciprocal here.
    e = jnp.exp(-jnp.abs(v))          # in (0, 1], never overflows
    r = 1.0 / (1.0 + e)               # denominator in (1, 2]
    return jnp.where(v >= 0.0, r, e * r)


# ------------------------------ Pallas kernel ------------------------------
def decoder_kernel(x_ref,
                   w1_ref, b1_ref, w2g_ref, b2g_ref,
                   wqkv_ref, bqkv_ref,
                   wtc_ref, wtm_ref, wtp_ref, bt_ref,
                   out_ref):
    Bt, L, C = x_ref.shape
    N = Bt * L
    P = out_ref.shape[2]
    n_blocks = w1_ref.shape[0]
    dq = (wqkv_ref.shape[1] - C) // 2

    # Batch folded into the sublane axis.
    h = x_ref[...].reshape(N, C).astype(jnp.float32)

    # Position of each folded row within its example (no modulo needed).
    pos = jax.lax.broadcasted_iota(jnp.int32, (Bt, L, 1), 1).reshape(N, 1)
    # Boundary masks for every shift used below, hoisted out of the block loop.
    masks = {s: jnp.logical_and(pos - s >= 0, pos - s < L)
             for s in (3, -3, 1, -1)}

    def tap(v, s):
        """out[m] = v[m - s] within each length-L segment, zero outside."""
        if s == 0:
            return v
        # pltpu.roll -> XLU slot (off the VALU / vst path); mask -> VPU select.
        return jnp.where(masks[s], pltpu.roll(v, shift=s % N, axis=0), 0.0)

    def conv(v, shifts, w_taps_ref, b_taps_ref, blk):
        # Per-tap matmuls accumulated in f32: no lane-axis concat copies; on
        # v7x the MRB accumulates in place, on v5e/v6e the adds are cheap VPU.
        acc = b_taps_ref[blk]                                  # (1, Cout) f32
        for t, s in enumerate(shifts):
            acc = acc + jnp.dot(tap(v, s).astype(_BF16), w_taps_ref[blk, t],
                                preferred_element_type=jnp.float32)
        return acc

    S1 = (3, 0, -3)      # conv1: kernel 3, dilation 3, padding 3
    S2 = (1, 0, -1)      # conv2 / gate: kernel 3, dilation 1, padding 1

    # --- GatedResBlock stack ---
    # TODO(synk): switch to lax.fori_loop over blocks at large n_res_blocks to
    # bound vreg live ranges (the weight refs already carry the block axis).
    for blk in range(n_blocks):
        a = _elu(h)
        u = _elu(conv(a, S1, w1_ref, b1_ref, blk))
        cg = conv(u, S2, w2g_ref, b2g_ref, blk)                # conv2 | gate fused
        h = h + cg[:, :C] * _sigmoid(cg[:, C:])

    # --- single-head scaled dot-product attention (batched over Bt) ---
    # 1/sqrt(dq) is folded into wq/bq at fuse time.
    qkv = jnp.dot(h.astype(_BF16), wqkv_ref[...],
                  preferred_element_type=jnp.float32) + bqkv_ref[...]
    qkv = qkv.reshape(Bt, L, 2 * dq + C)
    # TODO(synk): at production channel sizes pad dq so these lane splits are
    # 128-aligned (free views instead of relayouts).
    q = qkv[:, :, :dq]
    k = qkv[:, :, dq:2 * dq]
    v = qkv[:, :, 2 * dq:]
    scores = jnp.einsum("bqd,bkd->bqk", q.astype(_BF16), k.astype(_BF16),
                        preferred_element_type=jnp.float32)
    scores = scores - jnp.max(scores, axis=-1, keepdims=True)
    p = jnp.exp(scores)
    p = p * pl.reciprocal(jnp.sum(p, axis=-1, keepdims=True), approx=True)
    # TODO(synk): flash-style online softmax over a tiled KV axis once L grows
    # (the (Bt, L, L) score slab must stay inside v7x's 64 MiB VMEM).
    ctx = jnp.einsum("bqk,bkd->bqd", p.astype(_BF16), v.astype(_BF16),
                     preferred_element_type=jnp.float32)
    h = h + ctx.reshape(N, C)

    # --- ConvTranspose1d(C, Cout, kernel=4, stride=2, padding=1) ---
    #   even phase y[2m]   = h[m]@W1 + h[m-1]@W3 + b   -> lanes [:Co]
    #   odd  phase y[2m+1] = h[m]@W2 + h[m+1]@W0 + b   -> lanes [Co:2Co]
    # Weights are zero-padded to a lane-dense width P (multiple of 128) so the
    # single output store is an unmasked vst.
    y = (jnp.dot(h.astype(_BF16), wtc_ref[...], preferred_element_type=jnp.float32)
         + jnp.dot(tap(h, 1).astype(_BF16), wtm_ref[...],
                   preferred_element_type=jnp.float32)
         + jnp.dot(tap(h, -1).astype(_BF16), wtp_ref[...],
                   preferred_element_type=jnp.float32)
         + bt_ref[...])
    out_ref[...] = y.reshape(Bt, L, P)


# ------------------------------ JAX wrapper --------------------------------
def decoder_forward(x_ncl, kp):
    """x_ncl: (B, C, L) f32 in PyTorch NCL layout. Returns (B, Co, 2L) f32."""
    B, C, L = x_ncl.shape
    Co = kp["co"]
    P = kp["wtc"].shape[1]

    x = jnp.transpose(x_ncl, (0, 2, 1)).astype(jnp.float32)        # (B, L, C)

    # Fold the batch into sublanes; keep >= 2 grid steps so both v7x
    # TensorCores get work under dimension_semantics=("parallel",).
    steps = 2 if (B % 2 == 0 and B >= 2) else B
    Bt = B // steps
    # TODO(synk): at large B*L*C re-tile (smaller Bt / extra grid axis) to stay
    # inside the per-step VMEM budget.

    weight_args = [kp["w1"], kp["b1"], kp["w2g"], kp["b2g"],
                   kp["wqkv"], kp["bqkv"],
                   kp["wtc"], kp["wtm"], kp["wtp"], kp["bt"]]

    def fullspec(a):
        # Grid-invariant weight tile (constant index map -> no re-DMA).
        # TODO(synk): at production channel counts single-buffer these weights
        # (pl.Buffered(1) / resident VMEM) to reclaim v7x VMEM.
        nd = a.ndim
        return pl.BlockSpec(a.shape, lambda g, _nd=nd: (0,) * _nd)

    in_specs = [pl.BlockSpec((Bt, L, C), lambda g: (g, 0, 0))]
    in_specs += [fullspec(a) for a in weight_args]

    y = pl.pallas_call(
        decoder_kernel,
        out_shape=jax.ShapeDtypeStruct((B, L, P), jnp.float32),
        grid_spec=pltpu.PrefetchScalarGridSpec(
            num_scalar_prefetch=0,
            grid=(steps,),
            in_specs=in_specs,
            out_specs=pl.BlockSpec((Bt, L, P), lambda g: (g, 0, 0)),
        ),
        compiler_params=pltpu.CompilerParams(
            dimension_semantics=("parallel",),
            vmem_limit_bytes=32 * 1024 * 1024,
        ),
    )(x, *weight_args)

    # (B, L, P) -> drop lane padding -> interleave even/odd phases -> NCL.
    y = y[:, :, :2 * Co].reshape(B, L, 2, Co)
    return jnp.transpose(y, (0, 3, 1, 2)).reshape(B, Co, 2 * L)


# ---------------------------- parameter setup ------------------------------
def init_params(key, channel, out_channel, res_channel, n_res_blocks,
                k_res=3, k_final=4):
    """Returns PyTorch-layout parameters (used by the reference)."""
    C, R, Co = channel, res_channel, out_channel
    keys = jax.random.split(key, 14)
    s = 0.1
    return dict(
        w1=jax.random.normal(keys[0], (n_res_blocks, R, C, k_res)) * s,   # Conv1d(C->R)
        b1=jax.random.normal(keys[1], (n_res_blocks, R)) * s,
        w2=jax.random.normal(keys[2], (n_res_blocks, C, R, k_res)) * s,   # Conv1d(R->C)
        b2=jax.random.normal(keys[3], (n_res_blocks, C)) * s,
        wg=jax.random.normal(keys[4], (n_res_blocks, C, R, k_res)) * s,   # Conv1d(R->C)
        bg=jax.random.normal(keys[5], (n_res_blocks, C)) * s,
        wq=jax.random.normal(keys[6], (C, C // 4)) * s,
        bq=jax.random.normal(keys[7], (C // 4,)) * s,
        wk=jax.random.normal(keys[8], (C, C // 4)) * s,
        bk=jax.random.normal(keys[9], (C // 4,)) * s,
        wv=jax.random.normal(keys[10], (C, C)) * s,
        bv=jax.random.normal(keys[11], (C,)) * s,
        wt=jax.random.normal(keys[12], (C, Co, k_final)) * s,             # ConvTranspose1d
        bt=jax.random.normal(keys[13], (Co,)) * s,
    )


def fuse_params(tp):
    """Pre-fuse / pre-layout weights (host side, one-time) for the kernel.

    MXU operands are stored as bf16 (f32 accumulation in-kernel); biases stay
    f32 and are added after accumulation.
    """
    nb, R, C, k = tp["w1"].shape
    Co = tp["wt"].shape[1]
    dq = tp["wq"].shape[1]
    P = ((2 * Co + 127) // 128) * 128          # lane-dense output width

    # conv1, per-tap layout: (nb, k, C, R)
    w1 = jnp.transpose(tp["w1"], (0, 3, 2, 1)).astype(_BF16)
    b1 = tp["b1"][:, None, :].astype(jnp.float32)                 # (nb, 1, R)

    # conv2 || gate, per-tap with fused output columns: (nb, k, R, 2C)
    w2 = jnp.transpose(tp["w2"], (0, 3, 2, 1))
    wg = jnp.transpose(tp["wg"], (0, 3, 2, 1))
    w2g = jnp.concatenate([w2, wg], axis=-1).astype(_BF16)
    b2g = jnp.concatenate([tp["b2"], tp["bg"]],
                          axis=-1)[:, None, :].astype(jnp.float32)

    # fused q | k | v projection; fold the 1/sqrt(dq) scale into wq / bq.
    scale = 1.0 / math.sqrt(dq)
    wqkv = jnp.concatenate([tp["wq"] * scale, tp["wk"], tp["wv"]],
                           axis=1).astype(_BF16)
    bqkv = jnp.concatenate([tp["bq"] * scale, tp["bk"],
                            tp["bv"]])[None, :].astype(jnp.float32)

    # ConvTranspose1d taps, zero-padded to P lanes for one unmasked store:
    #   even (lanes [:Co]):    h[m]@W1 + h[m-1]@W3
    #   odd  (lanes [Co:2Co]): h[m]@W2 + h[m+1]@W0
    W = tp["wt"]                                                  # (C, Co, 4)
    wtc = jnp.zeros((C, P), jnp.float32)
    wtc = wtc.at[:, :Co].set(W[:, :, 1]).at[:, Co:2 * Co].set(W[:, :, 2])
    wtm = jnp.zeros((C, P), jnp.float32).at[:, :Co].set(W[:, :, 3])        # h[m-1]
    wtp = jnp.zeros((C, P), jnp.float32).at[:, Co:2 * Co].set(W[:, :, 0])  # h[m+1]
    bt = jnp.zeros((1, P), jnp.float32)
    bt = bt.at[0, :Co].set(tp["bt"]).at[0, Co:2 * Co].set(tp["bt"])
    # TODO(synk): at production Co (multiple of 128) split the neighbor taps
    # into unpadded per-phase matmuls + two lane-aligned stores instead of the
    # zero-padded fused weights.

    return dict(w1=w1, b1=b1, w2g=w2g, b2g=b2g, wqkv=wqkv, bqkv=bqkv,
                wtc=wtc.astype(_BF16), wtm=wtm.astype(_BF16),
                wtp=wtp.astype(_BF16), bt=bt, co=int(Co))


# ------------------------- pure-JAX reference (NCL) -------------------------
def ref_decoder(x, tp, n_res_blocks):
    hp = jax.lax.Precision.HIGHEST

    def elu(v):
        return jnp.where(v > 0, v, jnp.exp(v) - 1.0)

    def conv1d(v, w, b, padding, dilation):
        y = jax.lax.conv_general_dilated(
            v, w, window_strides=(1,), padding=[(padding, padding)],
            rhs_dilation=(dilation,),
            dimension_numbers=("NCH", "OIH", "NCH"), precision=hp)
        return y + b[None, :, None]

    h = x
    for i in range(n_res_blocks):
        a = elu(h)
        u = elu(conv1d(a, tp["w1"][i], tp["b1"][i], 3, 3))
        c2 = conv1d(u, tp["w2"][i], tp["b2"][i], 1, 1)
        g = conv1d(u, tp["wg"][i], tp["bg"][i], 1, 1)
        h = h + c2 * jax.nn.sigmoid(g)

    q = jnp.einsum("bcl,cq->bql", h, tp["wq"], precision=hp) + tp["bq"][None, :, None]
    k = jnp.einsum("bcl,cq->bql", h, tp["wk"], precision=hp) + tp["bk"][None, :, None]
    v = jnp.einsum("bcl,cv->bvl", h, tp["wv"], precision=hp) + tp["bv"][None, :, None]
    scores = jnp.einsum("bqi,bqj->bij", q, k, precision=hp) / math.sqrt(q.shape[1])
    attn = jax.nn.softmax(scores, axis=-1)
    h = h + jnp.einsum("bij,bcj->bci", attn, v, precision=hp)

    w = tp["wt"]
    kk = w.shape[2]
    y = jax.lax.conv_general_dilated(
        h, jnp.flip(w, axis=2), window_strides=(1,),
        padding=[(kk - 2, kk - 2)], lhs_dilation=(2,),
        dimension_numbers=("NCH", "IOH", "NCH"), precision=hp)
    return y + tp["bt"][None, :, None]


if __name__ == "__main__":
    B, C, L = 8, 16, 16          # batch, channel, sequence length
    Co, R, n_blocks = 8, 32, 2   # out_channel, res_channel, n_res_blocks
    key = jax.random.PRNGKey(0)
    kx, kparam = jax.random.split(key)
    x = jax.random.normal(kx, (B, C, L), jnp.float32)       # PyTorch NCL input
    torch_params = init_params(kparam, C, Co, R, n_blocks)
    kernel_params = fuse_params(torch_params)

    out = decoder_forward(x, kernel_params)
    out = jax.block_until_ready(out)
    assert out.shape == (B, Co, 2 * L), out.shape

    ref = ref_decoder(x, torch_params, n_blocks)
    err = float(jnp.max(jnp.abs(out - ref)))
    # Gap vs the f32 reference is dominated by bf16 MXU-input quantization
    # (accumulation stays f32); expected well under 5% of the output scale.
    tol = 0.05 * max(1.0, float(jnp.max(jnp.abs(ref))))
    assert err <= tol, f"max abs err {err:.4g} > tol {tol:.4g}"

    print("KERNEL_OK")
</pallas_src>

<mosaic_0001>
module attributes {stable_mosaic.version = 11 : i64} {
  func.func @decoder_kernel(%arg0: i32, %arg1: memref<4x16x16xf32, #tpu.memory_space<vmem>>, %arg2: memref<2x3x16x32xbf16, #tpu.memory_space<vmem>>, %arg3: memref<2x1x32xf32, #tpu.memory_space<vmem>>, %arg4: memref<2x3x32x32xbf16, #tpu.memory_space<vmem>>, %arg5: memref<2x1x32xf32, #tpu.memory_space<vmem>>, %arg6: memref<16x24xbf16, #tpu.memory_space<vmem>>, %arg7: memref<1x24xf32, #tpu.memory_space<vmem>>, %arg8: memref<16x128xbf16, #tpu.memory_space<vmem>>, %arg9: memref<16x128xbf16, #tpu.memory_space<vmem>>, %arg10: memref<16x128xbf16, #tpu.memory_space<vmem>>, %arg11: memref<1x128xf32, #tpu.memory_space<vmem>>, %arg12: memref<4x16x128xf32, #tpu.memory_space<vmem>>) attributes {dimension_semantics = [#tpu.dimension_semantics<parallel>], iteration_bounds = array<i64: 2>, scalar_prefetch = 0 : i64, scratch_operands = 0 : i64, tpu.core_type = #tpu.core_type<tc>, window_params = [{transform_indices = @transform_0, window_bounds = array<i64: 4, 16, 16>}, {pipeline_mode = #tpu.pipeline_mode<synchronous>, transform_indices = @transform_1, window_bounds = array<i64: 2, 3, 16, 32>}, {pipeline_mode = #tpu.pipeline_mode<synchronous>, transform_indices = @transform_2, window_bounds = array<i64: 2, 1, 32>}, {pipeline_mode = #tpu.pipeline_mode<synchronous>, transform_indices = @transform_3, window_bounds = array<i64: 2, 3, 32, 32>}, {pipeline_mode = #tpu.pipeline_mode<synchronous>, transform_indices = @transform_4, window_bounds = array<i64: 2, 1, 32>}, {pipeline_mode = #tpu.pipeline_mode<synchronous>, transform_indices = @transform_5, window_bounds = array<i64: 16, 24>}, {pipeline_mode = #tpu.pipeline_mode<synchronous>, transform_indices = @transform_6, window_bounds = array<i64: 1, 24>}, {pipeline_mode = #tpu.pipeline_mode<synchronous>, transform_indices = @transform_7, window_bounds = array<i64: 16, 128>}, {pipeline_mode = #tpu.pipeline_mode<synchronous>, transform_indices = @transform_8, window_bounds = array<i64: 16, 128>}, {pipeline_mode = #tpu.pipeline_mode<synchronous>, transform_indices = @transform_9, window_bounds = array<i64: 16, 128>}, {pipeline_mode = #tpu.pipeline_mode<synchronous>, transform_indices = @transform_10, window_bounds = array<i64: 1, 128>}, {transform_indices = @transform_11, window_bounds = array<i64: 4, 16, 128>}]} {
    %c0 = arith.constant 0 : index
    %c0_0 = arith.constant 0 : index
    %c0_1 = arith.constant 0 : index
    %0 = vector.load %arg1[%c0, %c0_0, %c0_1] : memref<4x16x16xf32, #tpu.memory_space<vmem>>, vector<4x16x16xf32>
    %1 = vector.shape_cast %0 : vector<4x16x16xf32> to vector<64x16xf32>
    %2 = tpu.iota {dimensions = array<i32: 1>} : vector<4x16x1xi32>
    %3 = vector.shape_cast %2 : vector<4x16x1xi32> to vector<64x1xi32>
    %c3_i32 = arith.constant 3 : i32
    %4 = vector.broadcast %c3_i32 : i32 to vector<64x1xi32>
    %5 = arith.subi %3, %4 : vector<64x1xi32>
    %c0_i32 = arith.constant 0 : i32
    %6 = vector.broadcast %c0_i32 : i32 to vector<64x1xi32>
    %7 = arith.cmpi sge, %5, %6 : vector<64x1xi32>
    %c3_i32_2 = arith.constant 3 : i32
    %8 = vector.broadcast %c3_i32_2 : i32 to vector<64x1xi32>
    %9 = arith.subi %3, %8 : vector<64x1xi32>
    %c16_i32 = arith.constant 16 : i32
    %10 = vector.broadcast %c16_i32 : i32 to vector<64x1xi32>
    %11 = arith.cmpi slt, %9, %10 : vector<64x1xi32>
    %12 = arith.andi %7, %11 : vector<64x1xi1>
    %c-3_i32 = arith.constant -3 : i32
    %13 = vector.broadcast %c-3_i32 : i32 to vector<64x1xi32>
    %14 = arith.subi %3, %13 : vector<64x1xi32>
    %c0_i32_3 = arith.constant 0 : i32
    %15 = vector.broadcast %c0_i32_3 : i32 to vector<64x1xi32>
    %16 = arith.cmpi sge, %14, %15 : vector<64x1xi32>
    %c-3_i32_4 = arith.constant -3 : i32
    %17 = vector.broadcast %c-3_i32_4 : i32 to vector<64x1xi32>
    %18 = arith.subi %3, %17 : vector<64x1xi32>
    %c16_i32_5 = arith.constant 16 : i32
    %19 = vector.broadcast %c16_i32_5 : i32 to vector<64x1xi32>
    %20 = arith.cmpi slt, %18, %19 : vector<64x1xi32>
    %21 = arith.andi %16, %20 : vector<64x1xi1>
    %c1_i32 = arith.constant 1 : i32
    %22 = vector.broadcast %c1_i32 : i32 to vector<64x1xi32>
    %23 = arith.subi %3, %22 : vector<64x1xi32>
    %c0_i32_6 = arith.constant 0 : i32
    %24 = vector.broadcast %c0_i32_6 : i32 to vector<64x1xi32>
    %25 = arith.cmpi sge, %23, %24 : vector<64x1xi32>
    %c1_i32_7 = arith.constant 1 : i32
    %26 = vector.broadcast %c1_i32_7 : i32 to vector<64x1xi32>
    %27 = arith.subi %3, %26 : vector<64x1xi32>
    %c16_i32_8 = arith.constant 16 : i32
    %28 = vector.broadcast %c16_i32_8 : i32 to vector<64x1xi32>
    %29 = arith.cmpi slt, %27, %28 : vector<64x1xi32>
    %30 = arith.andi %25, %29 : vector<64x1xi1>
    %c-1_i32 = arith.constant -1 : i32
    %31 = vector.broadcast %c-1_i32 : i32 to vector<64x1xi32>
    %32 = arith.subi %3, %31 : vector<64x1xi32>
    %c0_i32_9 = arith.constant 0 : i32
    %33 = vector.broadcast %c0_i32_9 : i32 to vector<64x1xi32>
    %34 = arith.cmpi sge, %32, %33 : vector<64x1xi32>
    %c-1_i32_10 = arith.constant -1 : i32
    %35 = vector.broadcast %c-1_i32_10 : i32 to vector<64x1xi32>
    %36 = arith.subi %3, %35 : vector<64x1xi32>
    %c16_i32_11 = arith.constant 16 : i32
    %37 = vector.broadcast %c16_i32_11 : i32 to vector<64x1xi32>
    %38 = arith.cmpi slt, %36, %37 : vector<64x1xi32>
    %39 = arith.andi %34, %38 : vector<64x1xi1>
    %cst = arith.constant 0.000000e+00 : f32
    %40 = vector.broadcast %cst : f32 to vector<64x16xf32>
    %41 = arith.cmpf ogt, %1, %40 : vector<64x16xf32>
    %42 = math.exp %1 : vector<64x16xf32>
    %cst_12 = arith.constant 1.000000e+00 : f32
    %43 = vector.broadcast %cst_12 : f32 to vector<64x16xf32>
    %44 = arith.subf %42, %43 : vector<64x16xf32>
    %45 = arith.select %41, %1, %44 : vector<64x16xi1>, vector<64x16xf32>
    %c0_13 = arith.constant 0 : index
    %c0_14 = arith.constant 0 : index
    %c0_15 = arith.constant 0 : index
    %46 = vector.load %arg3[%c0_13, %c0_14, %c0_15] : memref<2x1x32xf32, #tpu.memory_space<vmem>>, vector<1x1x32xf32>
    %47 = vector.shape_cast %46 : vector<1x1x32xf32> to vector<1x32xf32>
    %c3_i32_16 = arith.constant 3 : i32
    %48 = tpu.dynamic_rotate %45 by %c3_i32_16 dim 0 : vector<64x16xf32>, i32 -> vector<64x16xf32>
    %cst_17 = arith.constant 0.000000e+00 : f32
    %49 = vector.shape_cast %12 : vector<64x1xi1> to vector<64x1xi1>
    %50 = vector.broadcast %49 : vector<64x1xi1> to vector<64x16xi1>
    %51 = vector.broadcast %cst_17 : f32 to vector<64x16xf32>
    %52 = arith.select %50, %48, %51 : vector<64x16xi1>, vector<64x16xf32>
    %53 = arith.truncf %52 : vector<64x16xf32> to vector<64x16xbf16>
    %c0_18 = arith.constant 0 : index
    %c0_19 = arith.constant 0 : index
    %c0_20 = arith.constant 0 : index
    %c0_21 = arith.constant 0 : index
    %54 = vector.load %arg2[%c0_18, %c0_19, %c0_20, %c0_21] : memref<2x3x16x32xbf16, #tpu.memory_space<vmem>>, vector<1x1x16x32xbf16>
    %55 = vector.shape_cast %54 : vector<1x1x16x32xbf16> to vector<16x32xbf16>
    %cst_22 = arith.constant dense<0.000000e+00> : vector<64x32xf32>
    %56 = tpu.matmul %53, %55, %cst_22 {dimension_numbers = #tpu.dot_dimension_numbers<[1], [0], [0], [1], [0, 0, 1, 1], [], []>} : vector<64x16xbf16>, vector<16x32xbf16>, vector<64x32xf32> -> vector<64x32xf32>
    %57 = vector.broadcast %47 : vector<1x32xf32> to vector<64x32xf32>
    %58 = arith.addf %57, %56 : vector<64x32xf32>
    %59 = arith.truncf %45 : vector<64x16xf32> to vector<64x16xbf16>
    %c0_23 = arith.constant 0 : index
    %c1 = arith.constant 1 : index
    %c0_24 = arith.constant 0 : index
    %c0_25 = arith.constant 0 : index
    %60 = vector.load %arg2[%c0_23, %c1, %c0_24, %c0_25] : memref<2x3x16x32xbf16, #tpu.memory_space<vmem>>, vector<1x1x16x32xbf16>
    %61 = vector.shape_cast %60 : vector<1x1x16x32xbf16> to vector<16x32xbf16>
    %cst_26 = arith.constant dense<0.000000e+00> : vector<64x32xf32>
    %62 = tpu.matmul %59, %61, %cst_26 {dimension_numbers = #tpu.dot_dimension_numbers<[1], [0], [0], [1], [0, 0, 1, 1], [], []>} : vector<64x16xbf16>, vector<16x32xbf16>, vector<64x32xf32> -> vector<64x32xf32>
    %63 = arith.addf %58, %62 : vector<64x32xf32>
    %c61_i32 = arith.constant 61 : i32
    %64 = tpu.dynamic_rotate %45 by %c61_i32 dim 0 : vector<64x16xf32>, i32 -> vector<64x16xf32>
    %cst_27 = arith.constant 0.000000e+00 : f32
    %65 = vector.shape_cast %21 : vector<64x1xi1> to vector<64x1xi1>
    %66 = vector.broadcast %65 : vector<64x1xi1> to vector<64x16xi1>
    %67 = vector.broadcast %cst_27 : f32 to vector<64x16xf32>
    %68 = arith.select %66, %64, %67 : vector<64x16xi1>, vector<64x16xf32>
    %69 = arith.truncf %68 : vector<64x16xf32> to vector<64x16xbf16>
    %c0_28 = arith.constant 0 : index
    %c2 = arith.constant 2 : index
    %c0_29 = arith.constant 0 : index
    %c0_30 = arith.constant 0 : index
    %70 = vector.load %arg2[%c0_28, %c2, %c0_29, %c0_30] : memref<2x3x16x32xbf16, #tpu.memory_space<vmem>>, vector<1x1x16x32xbf16>
    %71 = vector.shape_cast %70 : vector<1x1x16x32xbf16> to vector<16x32xbf16>
    %cst_31 = arith.constant dense<0.000000e+00> : vector<64x32xf32>
    %72 = tpu.matmul %69, %71, %cst_31 {dimension_numbers = #tpu.dot_dimension_numbers<[1], [0], [0], [1], [0, 0, 1, 1], [], []>} : vector<64x16xbf16>, vector<16x32xbf16>, vector<64x32xf32> -> vector<64x32xf32>
    %73 = arith.addf %63, %72 : vector<64x32xf32>
    %cst_32 = arith.constant 0.000000e+00 : f32
    %74 = vector.broadcast %cst_32 : f32 to vector<64x32xf32>
    %75 = arith.cmpf ogt, %73, %74 : vector<64x32xf32>
    %76 = math.exp %73 : vector<64x32xf32>
    %cst_33 = arith.constant 1.000000e+00 : f32
    %77 = vector.broadcast %cst_33 : f32 to vector<64x32xf32>
    %78 = arith.subf %76, %77 : vector<64x32xf32>
    %79 = arith.select %75, %73, %78 : vector<64x32xi1>, vector<64x32xf32>
    %c0_34 = arith.constant 0 : index
    %c0_35 = arith.constant 0 : index
    %c0_36 = arith.constant 0 : index
    %80 = vector.load %arg5[%c0_34, %c0_35, %c0_36] : memref<2x1x32xf32, #tpu.memory_space<vmem>>, vector<1x1x32xf32>
    %81 = vector.shape_cast %80 : vector<1x1x32xf32> to vector<1x32xf32>
    %c1_i32_37 = arith.constant 1 : i32
    %82 = tpu.dynamic_rotate %79 by %c1_i32_37 dim 0 : vector<64x32xf32>, i32 -> vector<64x32xf32>
    %cst_38 = arith.constant 0.000000e+00 : f32
    %83 = vector.shape_cast %30 : vector<64x1xi1> to vector<64x1xi1>
    %84 = vector.broadcast %83 : vector<64x1xi1> to vector<64x32xi1>
    %85 = vector.broadcast %cst_38 : f32 to vector<64x32xf32>
    %86 = arith.select %84, %82, %85 : vector<64x32xi1>, vector<64x32xf32>
    %87 = arith.truncf %86 : vector<64x32xf32> to vector<64x32xbf16>
    %c0_39 = arith.constant 0 : index
    %c0_40 = arith.constant 0 : index
    %c0_41 = arith.constant 0 : index
    %c0_42 = arith.constant 0 : index
    %88 = vector.load %arg4[%c0_39, %c0_40, %c0_41, %c0_42] : memref<2x3x32x32xbf16, #tpu.memory_space<vmem>>, vector<1x1x32x32xbf16>
    %89 = vector.shape_cast %88 : vector<1x1x32x32xbf16> to vector<32x32xbf16>
    %cst_43 = arith.constant dense<0.000000e+00> : vector<64x32xf32>
    %90 = tpu.matmul %87, %89, %cst_43 {dimension_numbers = #tpu.dot_dimension_numbers<[1], [0], [0], [1], [0, 0, 1, 1], [], []>} : vector<64x32xbf16>, vector<32x32xbf16>, vector<64x32xf32> -> vector<64x32xf32>
    %91 = vector.broadcast %81 : vector<1x32xf32> to vector<64x32xf32>
    %92 = arith.addf %91, %90 : vector<64x32xf32>
    %93 = arith.truncf %79 : vector<64x32xf32> to vector<64x32xbf16>
    %c0_44 = arith.constant 0 : index
    %c1_45 = arith.constant 1 : index
    %c0_46 = arith.constant 0 : index
    %c0_47 = arith.constant 0 : index
    %94 = vector.load %arg4[%c0_44, %c1_45, %c0_46, %c0_47] : memref<2x3x32x32xbf16, #tpu.memory_space<vmem>>, vector<1x1x32x32xbf16>
    %95 = vector.shape_cast %94 : vector<1x1x32x32xbf16> to vector<32x32xbf16>
    %cst_48 = arith.constant dense<0.000000e+00> : vector<64x32xf32>
    %96 = tpu.matmul %93, %95, %cst_48 {dimension_numbers = #tpu.dot_dimension_numbers<[1], [0], [0], [1], [0, 0, 1, 1], [], []>} : vector<64x32xbf16>, vector<32x32xbf16>, vector<64x32xf32> -> vector<64x32xf32>
    %97 = arith.addf %92, %96 : vector<64x32xf32>
    %c63_i32 = arith.constant 63 : i32
    %98 = tpu.dynamic_rotate %79 by %c63_i32 dim 0 : vector<64x32xf32>, i32 -> vector<64x32xf32>
    %cst_49 = arith.constant 0.000000e+00 : f32
    %99 = vector.shape_cast %39 : vector<64x1xi1> to vector<64x1xi1>
    %100 = vector.broadcast %99 : vector<64x1xi1> to vector<64x32xi1>
    %101 = vector.broadcast %cst_49 : f32 to vector<64x32xf32>
    %102 = arith.select %100, %98, %101 : vector<64x32xi1>, vector<64x32xf32>
    %103 = arith.truncf %102 : vector<64x32xf32> to vector<64x32xbf16>
    %c0_50 = arith.constant 0 : index
    %c2_51 = arith.constant 2 : index
    %c0_52 = arith.constant 0 : index
    %c0_53 = arith.constant 0 : index
    %104 = vector.load %arg4[%c0_50, %c2_51, %c0_52, %c0_53] : memref<2x3x32x32xbf16, #tpu.memory_space<vmem>>, vector<1x1x32x32xbf16>
    %105 = vector.shape_cast %104 : vector<1x1x32x32xbf16> to vector<32x32xbf16>
    %cst_54 = arith.constant dense<0.000000e+00> : vector<64x32xf32>
    %106 = tpu.matmul %103, %105, %cst_54 {dimension_numbers = #tpu.dot_dimension_numbers<[1], [0], [0], [1], [0, 0, 1, 1], [], []>} : vector<64x32xbf16>, vector<32x32xbf16>, vector<64x32xf32> -> vector<64x32xf32>
    %107 = arith.addf %97, %106 : vector<64x32xf32>
    %108 = vector.extract_strided_slice %107 {offsets = [0, 0], sizes = [64, 16], strides = [1, 1]} : vector<64x32xf32> to vector<64x16xf32>
    %109 = vector.extract_strided_slice %107 {offsets = [0, 16], sizes = [64, 16], strides = [1, 1]} : vector<64x32xf32> to vector<64x16xf32>
    %110 = math.absf %109 : vector<64x16xf32>
    %cst_55 = arith.constant 0.000000e+00 : f32
    %111 = vector.broadcast %cst_55 : f32 to vector<64x16xf32>
    %112 = arith.subf %111, %110 : vector<64x16xf32>
    %113 = math.exp %112 : vector<64x16xf32>
    %cst_56 = arith.constant 1.000000e+00 : f32
    %114 = vector.broadcast %cst_56 : f32 to vector<64x16xf32>
    %115 = arith.addf %114, %113 : vector<64x16xf32>
    %cst_57 = arith.constant 1.000000e+00 : f32
    %116 = vector.broadcast %cst_57 : f32 to vector<64x16xf32>
    %117 = arith.divf %116, %115 : vector<64x16xf32>
    %cst_58 = arith.constant 0.000000e+00 : f32
    %118 = vector.broadcast %cst_58 : f32 to vector<64x16xf32>
    %119 = arith.cmpf oge, %109, %118 : vector<64x16xf32>
    %120 = arith.mulf %113, %117 : vector<64x16xf32>
    %121 = arith.select %119, %117, %120 : vector<64x16xi1>, vector<64x16xf32>
    %122 = arith.mulf %108, %121 : vector<64x16xf32>
    %123 = arith.addf %1, %122 : vector<64x16xf32>
    %cst_59 = arith.constant 0.000000e+00 : f32
    %124 = vector.broadcast %cst_59 : f32 to vector<64x16xf32>
    %125 = arith.cmpf ogt, %123, %124 : vector<64x16xf32>
    %126 = math.exp %123 : vector<64x16xf32>
    %cst_60 = arith.constant 1.000000e+00 : f32
    %127 = vector.broadcast %cst_60 : f32 to vector<64x16xf32>
    %128 = arith.subf %126, %127 : vector<64x16xf32>
    %129 = arith.select %125, %123, %128 : vector<64x16xi1>, vector<64x16xf32>
    %c1_61 = arith.constant 1 : index
    %c0_62 = arith.constant 0 : index
    %c0_63 = arith.constant 0 : index
    %130 = vector.load %arg3[%c1_61, %c0_62, %c0_63] : memref<2x1x32xf32, #tpu.memory_space<vmem>>, vector<1x1x32xf32>
    %131 = vector.shape_cast %130 : vector<1x1x32xf32> to vector<1x32xf32>
    %c3_i32_64 = arith.constant 3 : i32
    %132 = tpu.dynamic_rotate %129 by %c3_i32_64 dim 0 : vector<64x16xf32>, i32 -> vector<64x16xf32>
    %cst_65 = arith.constant 0.000000e+00 : f32
    %133 = vector.shape_cast %12 : vector<64x1xi1> to vector<64x1xi1>
    %134 = vector.broadcast %133 : vector<64x1xi1> to vector<64x16xi1>
    %135 = vector.broadcast %cst_65 : f32 to vector<64x16xf32>
    %136 = arith.select %134, %132, %135 : vector<64x16xi1>, vector<64x16xf32>
    %137 = arith.truncf %136 : vector<64x16xf32> to vector<64x16xbf16>
    %c1_66 = arith.constant 1 : index
    %c0_67 = arith.constant 0 : index
    %c0_68 = arith.constant 0 : index
    %c0_69 = arith.constant 0 : index
    %138 = vector.load %arg2[%c1_66, %c0_67, %c0_68, %c0_69] : memref<2x3x16x32xbf16, #tpu.memory_space<vmem>>, vector<1x1x16x32xbf16>
    %139 = vector.shape_cast %138 : vector<1x1x16x32xbf16> to vector<16x32xbf16>
    %cst_70 = arith.constant dense<0.000000e+00> : vector<64x32xf32>
    %140 = tpu.matmul %137, %139, %cst_70 {dimension_numbers = #tpu.dot_dimension_numbers<[1], [0], [0], [1], [0, 0, 1, 1], [], []>} : vector<64x16xbf16>, vector<16x32xbf16>, vector<64x32xf32> -> vector<64x32xf32>
    %141 = vector.broadcast %131 : vector<1x32xf32> to vector<64x32xf32>
    %142 = arith.addf %141, %140 : vector<64x32xf32>
    %143 = arith.truncf %129 : vector<64x16xf32> to vector<64x16xbf16>
    %c1_71 = arith.constant 1 : index
    %c1_72 = arith.constant 1 : index
    %c0_73 = arith.constant 0 : index
    %c0_74 = arith.constant 0 : index
    %144 = vector.load %arg2[%c1_71, %c1_72, %c0_73, %c0_74] : memref<2x3x16x32xbf16, #tpu.memory_space<vmem>>, vector<1x1x16x32xbf16>
    %145 = vector.shape_cast %144 : vector<1x1x16x32xbf16> to vector<16x32xbf16>
    %cst_75 = arith.constant dense<0.000000e+00> : vector<64x32xf32>
    %146 = tpu.matmul %143, %145, %cst_75 {dimension_numbers = #tpu.dot_dimension_numbers<[1], [0], [0], [1], [0, 0, 1, 1], [], []>} : vector<64x16xbf16>, vector<16x32xbf16>, vector<64x32xf32> -> vector<64x32xf32>
    %147 = arith.addf %142, %146 : vector<64x32xf32>
    %c61_i32_76 = arith.constant 61 : i32
    %148 = tpu.dynamic_rotate %129 by %c61_i32_76 dim 0 : vector<64x16xf32>, i32 -> vector<64x16xf32>
    %cst_77 = arith.constant 0.000000e+00 : f32
    %149 = vector.shape_cast %21 : vector<64x1xi1> to vector<64x1xi1>
    %150 = vector.broadcast %149 : vector<64x1xi1> to vector<64x16xi1>
    %151 = vector.broadcast %cst_77 : f32 to vector<64x16xf32>
    %152 = arith.select %150, %148, %151 : vector<64x16xi1>, vector<64x16xf32>
    %153 = arith.truncf %152 : vector<64x16xf32> to vector<64x16xbf16>
    %c1_78 = arith.constant 1 : index
    %c2_79 = arith.constant 2 : index
    %c0_80 = arith.constant 0 : index
    %c0_81 = arith.constant 0 : index
    %154 = vector.load %arg2[%c1_78, %c2_79, %c0_80, %c0_81] : memref<2x3x16x32xbf16, #tpu.memory_space<vmem>>, vector<1x1x16x32xbf16>
    %155 = vector.shape_cast %154 : vector<1x1x16x32xbf16> to vector<16x32xbf16>
    %cst_82 = arith.constant dense<0.000000e+00> : vector<64x32xf32>
    %156 = tpu.matmul %153, %155, %cst_82 {dimension_numbers = #tpu.dot_dimension_numbers<[1], [0], [0], [1], [0, 0, 1, 1], [], []>} : vector<64x16xbf16>, vector<16x32xbf16>, vector<64x32xf32> -> vector<64x32xf32>
    %157 = arith.addf %147, %156 : vector<64x32xf32>
    %cst_83 = arith.constant 0.000000e+00 : f32
    %158 = vector.broadcast %cst_83 : f32 to vector<64x32xf32>
    %159 = arith.cmpf ogt, %157, %158 : vector<64x32xf32>
    %160 = math.exp %157 : vector<64x32xf32>
    %cst_84 = arith.constant 1.000000e+00 : f32
    %161 = vector.broadcast %cst_84 : f32 to vector<64x32xf32>
    %162 = arith.subf %160, %161 : vector<64x32xf32>
    %163 = arith.select %159, %157, %162 : vector<64x32xi1>, vector<64x32xf32>
    %c1_85 = arith.constant 1 : index
    %c0_86 = arith.constant 0 : index
    %c0_87 = arith.constant 0 : index
    %164 = vector.load %arg5[%c1_85, %c0_86, %c0_87] : memref<2x1x32xf32, #tpu.memory_space<vmem>>, vector<1x1x32xf32>
    %165 = vector.shape_cast %164 : vector<1x1x32xf32> to vector<1x32xf32>
    %c1_i32_88 = arith.constant 1 : i32
    %166 = tpu.dynamic_rotate %163 by %c1_i32_88 dim 0 : vector<64x32xf32>, i32 -> vector<64x32xf32>
    %cst_89 = arith.constant 0.000000e+00 : f32
    %167 = vector.shape_cast %30 : vector<64x1xi1> to vector<64x1xi1>
    %168 = vector.broadcast %167 : vector<64x1xi1> to vector<64x32xi1>
    %169 = vector.broadcast %cst_89 : f32 to vector<64x32xf32>
    %170 = arith.select %168, %166, %169 : vector<64x32xi1>, vector<64x32xf32>
    %171 = arith.truncf %170 : vector<64x32xf32> to vector<64x32xbf16>
    %c1_90 = arith.constant 1 : index
    %c0_91 = arith.constant 0 : index
    %c0_92 = arith.constant 0 : index
    %c0_93 = arith.constant 0 : index
    %172 = vector.load %arg4[%c1_90, %c0_91, %c0_92, %c0_93] : memref<2x3x32x32xbf16, #tpu.memory_space<vmem>>, vector<1x1x32x32xbf16>
    %173 = vector.shape_cast %172 : vector<1x1x32x32xbf16> to vector<32x32xbf16>
    %cst_94 = arith.constant dense<0.000000e+00> : vector<64x32xf32>
    %174 = tpu.matmul %171, %173, %cst_94 {dimension_numbers = #tpu.dot_dimension_numbers<[1], [0], [0], [1], [0, 0, 1, 1], [], []>} : vector<64x32xbf16>, vector<32x32xbf16>, vector<64x32xf32> -> vector<64x32xf32>
    %175 = vector.broadcast %165 : vector<1x32xf32> to vector<64x32xf32>
    %176 = arith.addf %175, %174 : vector<64x32xf32>
    %177 = arith.truncf %163 : vector<64x32xf32> to vector<64x32xbf16>
    %c1_95 = arith.constant 1 : index
    %c1_96 = arith.constant 1 : index
    %c0_97 = arith.constant 0 : index
    %c0_98 = arith.constant 0 : index
    %178 = vector.load %arg4[%c1_95, %c1_96, %c0_97, %c0_98] : memref<2x3x32x32xbf16, #tpu.memory_space<vmem>>, vector<1x1x32x32xbf16>
    %179 = vector.shape_cast %178 : vector<1x1x32x32xbf16> to vector<32x32xbf16>
    %cst_99 = arith.constant dense<0.000000e+00> : vector<64x32xf32>
    %180 = tpu.matmul %177, %179, %cst_99 {dimension_numbers = #tpu.dot_dimension_numbers<[1], [0], [0], [1], [0, 0, 1, 1], [], []>} : vector<64x32xbf16>, vector<32x32xbf16>, vector<64x32xf32> -> vector<64x32xf32>
    %181 = arith.addf %176, %180 : vector<64x32xf32>
    %c63_i32_100 = arith.constant 63 : i32
    %182 = tpu.dynamic_rotate %163 by %c63_i32_100 dim 0 : vector<64x32xf32>, i32 -> vector<64x32xf32>
    %cst_101 = arith.constant 0.000000e+00 : f32
    %183 = vector.shape_cast %39 : vector<64x1xi1> to vector<64x1xi1>
    %184 = vector.broadcast %183 : vector<64x1xi1> to vector<64x32xi1>
    %185 = vector.broadcast %cst_101 : f32 to vector<64x32xf32>
    %186 = arith.select %184, %182, %185 : vector<64x32xi1>, vector<64x32xf32>
    %187 = arith.truncf %186 : vector<64x32xf32> to vector<64x32xbf16>
    %c1_102 = arith.constant 1 : index
    %c2_103 = arith.constant 2 : index
    %c0_104 = arith.constant 0 : index
    %c0_105 = arith.constant 0 : index
    %188 = vector.load %arg4[%c1_102, %c2_103, %c0_104, %c0_105] : memref<2x3x32x32xbf16, #tpu.memory_space<vmem>>, vector<1x1x32x32xbf16>
    %189 = vector.shape_cast %188 : vector<1x1x32x32xbf16> to vector<32x32xbf16>
    %cst_106 = arith.constant dense<0.000000e+00> : vector<64x32xf32>
    %190 = tpu.matmul %187, %189, %cst_106 {dimension_numbers = #tpu.dot_dimension_numbers<[1], [0], [0], [1], [0, 0, 1, 1], [], []>} : vector<64x32xbf16>, vector<32x32xbf16>, vector<64x32xf32> -> vector<64x32xf32>
    %191 = arith.addf %181, %190 : vector<64x32xf32>
    %192 = vector.extract_strided_slice %191 {offsets = [0, 0], sizes = [64, 16], strides = [1, 1]} : vector<64x32xf32> to vector<64x16xf32>
    %193 = vector.extract_strided_slice %191 {offsets = [0, 16], sizes = [64, 16], strides = [1, 1]} : vector<64x32xf32> to vector<64x16xf32>
    %194 = math.absf %193 : vector<64x16xf32>
    %cst_107 = arith.constant 0.000000e+00 : f32
    %195 = vector.broadcast %cst_107 : f32 to vector<64x16xf32>
    %196 = arith.subf %195, %194 : vector<64x16xf32>
    %197 = math.exp %196 : vector<64x16xf32>
    %cst_108 = arith.constant 1.000000e+00 : f32
    %198 = vector.broadcast %cst_108 : f32 to vector<64x16xf32>
    %199 = arith.addf %198, %197 : vector<64x16xf32>
    %cst_109 = arith.constant 1.000000e+00 : f32
    %200 = vector.broadcast %cst_109 : f32 to vector<64x16xf32>
    %201 = arith.divf %200, %199 : vector<64x16xf32>
    %cst_110 = arith.constant 0.000000e+00 : f32
    %202 = vector.broadcast %cst_110 : f32 to vector<64x16xf32>
    %203 = arith.cmpf oge, %193, %202 : vector<64x16xf32>
    %204 = arith.mulf %197, %201 : vector<64x16xf32>
    %205 = arith.select %203, %201, %204 : vector<64x16xi1>, vector<64x16xf32>
    %206 = arith.mulf %192, %205 : vector<64x16xf32>
    %207 = arith.addf %123, %206 : vector<64x16xf32>
    %208 = arith.truncf %207 : vector<64x16xf32> to vector<64x16xbf16>
    %c0_111 = arith.constant 0 : index
    %c0_112 = arith.constant 0 : index
    %209 = vector.load %arg6[%c0_111, %c0_112] : memref<16x24xbf16, #tpu.memory_space<vmem>>, vector<16x24xbf16>
    %cst_113 = arith.constant dense<0.000000e+00> : vector<64x24xf32>
    %210 = tpu.matmul %208, %209, %cst_113 {dimension_numbers = #tpu.dot_dimension_numbers<[1], [0], [0], [1], [0, 0, 1, 1], [], []>} : vector<64x16xbf16>, vector<16x24xbf16>, vector<64x24xf32> -> vector<64x24xf32>
    %c0_114 = arith.constant 0 : index
    %c0_115 = arith.constant 0 : index
    %211 = vector.load %arg7[%c0_114, %c0_115] : memref<1x24xf32, #tpu.memory_space<vmem>>, vector<1x24xf32>
    %212 = vector.broadcast %211 : vector<1x24xf32> to vector<64x24xf32>
    %213 = arith.addf %210, %212 : vector<64x24xf32>
    %214 = vector.shape_cast %213 : vector<64x24xf32> to vector<4x16x24xf32>
    %215 = vector.extract_strided_slice %214 {offsets = [0, 0, 0], sizes = [4, 16, 4], strides = [1, 1, 1]} : vector<4x16x24xf32> to vector<4x16x4xf32>
    %216 = vector.extract_strided_slice %214 {offsets = [0, 0, 4], sizes = [4, 16, 4], strides = [1, 1, 1]} : vector<4x16x24xf32> to vector<4x16x4xf32>
    %217 = vector.extract_strided_slice %214 {offsets = [0, 0, 8], sizes = [4, 16, 16], strides = [1, 1, 1]} : vector<4x16x24xf32> to vector<4x16x16xf32>
    %218 = arith.truncf %215 : vector<4x16x4xf32> to vector<4x16x4xbf16>
    %219 = arith.truncf %216 : vector<4x16x4xf32> to vector<4x16x4xbf16>
    "tpu.trace_start"() <{level = 10 : i32, message = "bqd,bkd->bqk"}> : () -> ()
    %cst_116 = arith.constant dense<0.000000e+00> : vector<4x16x16xf32>
    %220 = tpu.matmul %218, %219, %cst_116 {dimension_numbers = #tpu.dot_dimension_numbers<[2], [2], [1], [1], [0, 0, 0, 1, 1, 1], [0], [0]>} : vector<4x16x4xbf16>, vector<4x16x4xbf16>, vector<4x16x16xf32> -> vector<4x16x16xf32>
    "tpu.trace_stop"() : () -> ()
    %cst_117 = arith.constant dense<0xFF800000> : vector<4x16xf32>
    %221 = vector.multi_reduction <maximumf>, %220, %cst_117 [2] : vector<4x16x16xf32> to vector<4x16xf32>
    %222 = vector.shape_cast %221 : vector<4x16xf32> to vector<4x16x1xf32>
    %223 = vector.broadcast %222 : vector<4x16x1xf32> to vector<4x16x16xf32>
    %224 = arith.subf %220, %223 : vector<4x16x16xf32>
    %225 = math.exp %224 : vector<4x16x16xf32>
    %cst_118 = arith.constant dense<0.000000e+00> : vector<4x16xf32>
    %226 = vector.multi_reduction <add>, %225, %cst_118 [2] : vector<4x16x16xf32> to vector<4x16xf32>
    %227 = vector.shape_cast %226 : vector<4x16xf32> to vector<4x16x1xf32>
    %228 = tpu.reciprocal %227 {approx = true} : vector<4x16x1xf32> -> vector<4x16x1xf32>
    %229 = vector.broadcast %228 : vector<4x16x1xf32> to vector<4x16x16xf32>
    %230 = arith.mulf %225, %229 : vector<4x16x16xf32>
    %231 = arith.truncf %230 : vector<4x16x16xf32> to vector<4x16x16xbf16>
    %232 = arith.truncf %217 : vector<4x16x16xf32> to vector<4x16x16xbf16>
    "tpu.trace_start"() <{level = 10 : i32, message = "bqk,bkd->bqd"}> : () -> ()
    %cst_119 = arith.constant dense<0.000000e+00> : vector<4x16x16xf32>
    %233 = tpu.matmul %231, %232, %cst_119 {dimension_numbers = #tpu.dot_dimension_numbers<[2], [1], [1], [2], [0, 0, 0, 1, 1, 2], [0], [0]>} : vector<4x16x16xbf16>, vector<4x16x16xbf16>, vector<4x16x16xf32> -> vector<4x16x16xf32>
    "tpu.trace_stop"() : () -> ()
    %234 = vector.shape_cast %233 : vector<4x16x16xf32> to vector<64x16xf32>
    %235 = arith.addf %207, %234 : vector<64x16xf32>
    %236 = arith.truncf %235 : vector<64x16xf32> to vector<64x16xbf16>
    %c0_120 = arith.constant 0 : index
    %c0_121 = arith.constant 0 : index
    %237 = vector.load %arg8[%c0_120, %c0_121] : memref<16x128xbf16, #tpu.memory_space<vmem>>, vector<16x128xbf16>
    %cst_122 = arith.constant dense<0.000000e+00> : vector<64x128xf32>
    %238 = tpu.matmul %236, %237, %cst_122 {dimension_numbers = #tpu.dot_dimension_numbers<[1], [0], [0], [1], [0, 0, 1, 1], [], []>} : vector<64x16xbf16>, vector<16x128xbf16>, vector<64x128xf32> -> vector<64x128xf32>
    %c1_i32_123 = arith.constant 1 : i32
    %239 = tpu.dynamic_rotate %235 by %c1_i32_123 dim 0 : vector<64x16xf32>, i32 -> vector<64x16xf32>
    %cst_124 = arith.constant 0.000000e+00 : f32
    %240 = vector.shape_cast %30 : vector<64x1xi1> to vector<64x1xi1>
    %241 = vector.broadcast %240 : vector<64x1xi1> to vector<64x16xi1>
    %242 = vector.broadcast %cst_124 : f32 to vector<64x16xf32>
    %243 = arith.select %241, %239, %242 : vector<64x16xi1>, vector<64x16xf32>
    %244 = arith.truncf %243 : vector<64x16xf32> to vector<64x16xbf16>
    %c0_125 = arith.constant 0 : index
    %c0_126 = arith.constant 0 : index
    %245 = vector.load %arg9[%c0_125, %c0_126] : memref<16x128xbf16, #tpu.memory_space<vmem>>, vector<16x128xbf16>
    %cst_127 = arith.constant dense<0.000000e+00> : vector<64x128xf32>
    %246 = tpu.matmul %244, %245, %cst_127 {dimension_numbers = #tpu.dot_dimension_numbers<[1], [0], [0], [1], [0, 0, 1, 1], [], []>} : vector<64x16xbf16>, vector<16x128xbf16>, vector<64x128xf32> -> vector<64x128xf32>
    %247 = arith.addf %238, %246 : vector<64x128xf32>
    %c63_i32_128 = arith.constant 63 : i32
    %248 = tpu.dynamic_rotate %235 by %c63_i32_128 dim 0 : vector<64x16xf32>, i32 -> vector<64x16xf32>
    %cst_129 = arith.constant 0.000000e+00 : f32
    %249 = vector.shape_cast %39 : vector<64x1xi1> to vector<64x1xi1>
    %250 = vector.broadcast %249 : vector<64x1xi1> to vector<64x16xi1>
    %251 = vector.broadcast %cst_129 : f32 to vector<64x16xf32>
    %252 = arith.select %250, %248, %251 : vector<64x16xi1>, vector<64x16xf32>
    %253 = arith.truncf %252 : vector<64x16xf32> to vector<64x16xbf16>
    %c0_130 = arith.constant 0 : index
    %c0_131 = arith.constant 0 : index
    %254 = vector.load %arg10[%c0_130, %c0_131] : memref<16x128xbf16, #tpu.memory_space<vmem>>, vector<16x128xbf16>
    %cst_132 = arith.constant dense<0.000000e+00> : vector<64x128xf32>
    %255 = tpu.matmul %253, %254, %cst_132 {dimension_numbers = #tpu.dot_dimension_numbers<[1], [0], [0], [1], [0, 0, 1, 1], [], []>} : vector<64x16xbf16>, vector<16x128xbf16>, vector<64x128xf32> -> vector<64x128xf32>
    %256 = arith.addf %247, %255 : vector<64x128xf32>
    %c0_133 = arith.constant 0 : index
    %c0_134 = arith.constant 0 : index
    %257 = vector.load %arg11[%c0_133, %c0_134] : memref<1x128xf32, #tpu.memory_space<vmem>>, vector<1x128xf32>
    %258 = vector.broadcast %257 : vector<1x128xf32> to vector<64x128xf32>
    %259 = arith.addf %256, %258 : vector<64x128xf32>
    %260 = vector.shape_cast %259 : vector<64x128xf32> to vector<4x16x128xf32>
    %c0_135 = arith.constant 0 : index
    %c0_136 = arith.constant 0 : index
    %c0_137 = arith.constant 0 : index
    %261 = vector.load %arg12[%c0_135, %c0_136, %c0_137] : memref<4x16x128xf32, #tpu.memory_space<vmem>>, vector<4x16x128xf32>
    tpu.vector_store %arg12[%c0_135, %c0_136, %c0_137], %260 {strides = array<i32>} : memref<4x16x128xf32, #tpu.memory_space<vmem>>, vector<4x16x128xf32>,
    return
  }
  func.func @transform_0(%arg0: i32) -> (i32, i32, i32) {
    %c0_i32 = arith.constant 0 : i32
    %c0_i32_0 = arith.constant 0 : i32
    %c0_i32_1 = arith.constant 0 : i32
    return %arg0, %c0_i32, %c0_i32_0 : i32, i32, i32
  }
  func.func @transform_1(%arg0: i32) -> (i32, i32, i32, i32) {
    %c0_i32 = arith.constant 0 : i32
    %c0_i32_0 = arith.constant 0 : i32
    %c0_i32_1 = arith.constant 0 : i32
    %c0_i32_2 = arith.constant 0 : i32
    %c0_i32_3 = arith.constant 0 : i32
    return %c0_i32, %c0_i32_0, %c0_i32_1, %c0_i32_2 : i32, i32, i32, i32
  }
  func.func @transform_2(%arg0: i32) -> (i32, i32, i32) {
    %c0_i32 = arith.constant 0 : i32
    %c0_i32_0 = arith.constant 0 : i32
    %c0_i32_1 = arith.constant 0 : i32
    %c0_i32_2 = arith.constant 0 : i32
    return %c0_i32, %c0_i32_0, %c0_i32_1 : i32, i32, i32
  }
  func.func @transform_3(%arg0: i32) -> (i32, i32, i32, i32) {
    %c0_i32 = arith.constant 0 : i32
    %c0_i32_0 = arith.constant 0 : i32
    %c0_i32_1 = arith.constant 0 : i32
    %c0_i32_2 = arith.constant 0 : i32
    %c0_i32_3 = arith.constant 0 : i32
    return %c0_i32, %c0_i32_0, %c0_i32_1, %c0_i32_2 : i32, i32, i32, i32
  }
  func.func @transform_4(%arg0: i32) -> (i32, i32, i32) {
    %c0_i32 = arith.constant 0 : i32
    %c0_i32_0 = arith.constant 0 : i32
    %c0_i32_1 = arith.constant 0 : i32
    %c0_i32_2 = arith.constant 0 : i32
    return %c0_i32, %c0_i32_0, %c0_i32_1 : i32, i32, i32
  }
  func.func @transform_5(%arg0: i32) -> (i32, i32) {
    %c0_i32 = arith.constant 0 : i32
    %c0_i32_0 = arith.constant 0 : i32
    %c0_i32_1 = arith.constant 0 : i32
    return %c0_i32, %c0_i32_0 : i32, i32
  }
  func.func @transform_6(%arg0: i32) -> (i32, i32) {
    %c0_i32 = arith.constant 0 : i32
    %c0_i32_0 = arith.constant 0 : i32
    %c0_i32_1 = arith.constant 0 : i32
    return %c0_i32, %c0_i32_0 : i32, i32
  }
  func.func @transform_7(%arg0: i32) -> (i32, i32) {
    %c0_i32 = arith.constant 0 : i32
    %c0_i32_0 = arith.constant 0 : i32
    %c0_i32_1 = arith.constant 0 : i32
    return %c0_i32, %c0_i32_0 : i32, i32
  }
  func.func @transform_8(%arg0: i32) -> (i32, i32) {
    %c0_i32 = arith.constant 0 : i32
    %c0_i32_0 = arith.constant 0 : i32
    %c0_i32_1 = arith.constant 0 : i32
    return %c0_i32, %c0_i32_0 : i32, i32
  }
  func.func @transform_9(%arg0: i32) -> (i32, i32) {
    %c0_i32 = arith.constant 0 : i32
    %c0_i32_0 = arith.constant 0 : i32
    %c0_i32_1 = arith.constant 0 : i32
    return %c0_i32, %c0_i32_0 : i32, i32
  }
  func.func @transform_10(%arg0: i32) -> (i32, i32) {
    %c0_i32 = arith.constant 0 : i32
    %c0_i32_0 = arith.constant 0 : i32
    %c0_i32_1 = arith.constant 0 : i32
    return %c0_i32, %c0_i32_0 : i32, i32
  }
  func.func @transform_11(%arg0: i32) -> (i32, i32, i32) {
    %c0_i32 = arith.constant 0 : i32
    %c0_i32_0 = arith.constant 0 : i32
    %c0_i32_1 = arith.constant 0 : i32
    return %arg0, %c0_i32, %c0_i32_0 : i32, i32, i32
  }
}

</mosaic_0001>

<llo_original>
// kernel: tpu_custom_call.1
$region0: #{tpu_custom_call.1}
  #allocation0 [shape = 'u32[]', space=smem, size = 0x4, offset = 0x4, fixed_abs, tag = 'smem constant byte address 0x4 - core index']
  #allocation1 [shape = 'u32[144,128]{1,0:T(1,128)}', space=vmem, size = 0x12000, scoped, tag = 'internal scratch']
  %s0 = inlined_call_operand.hbm [shape: f32[8,16,16], index: 0, kind: input, shape index: {}]
  %s1 = inlined_call_operand.hbm [shape: bf16[2,3,16,32], index: 1, kind: input, shape index: {}]
  %s2 = inlined_call_operand.vmem [shape: f32[2,1,32], index: 2, kind: input, shape index: {}]
  %s3 = inlined_call_operand.hbm [shape: bf16[2,3,32,32], index: 3, kind: input, shape index: {}]
  %s4 = inlined_call_operand.hbm [shape: f32[2,1,32], index: 4, kind: input, shape index: {}]
  %s5 = inlined_call_operand.vmem [shape: bf16[16,24], index: 5, kind: input, shape index: {}]
  %s6 = inlined_call_operand.hbm [shape: f32[1,24], index: 6, kind: input, shape index: {}]
  %s7 = inlined_call_operand.vmem [shape: bf16[16,128], index: 7, kind: input, shape index: {}]
  %s8 = inlined_call_operand.vmem [shape: bf16[16,128], index: 8, kind: input, shape index: {}]
  %s9 = inlined_call_operand.vmem [shape: bf16[16,128], index: 9, kind: input, shape index: {}]
  %s10 = inlined_call_operand.vmem [shape: f32[1,128], index: 10, kind: input, shape index: {}]
  %s11 = inlined_call_operand.hbm [shape: f32[8,16,128], index: 11, kind: output, shape index: {}]
  %s12 = sld [smem:[#allocation0]]
  $region97: #{tpu_custom_call.1} parent=0
    _
  %s14 = ssub.s32 1, %s12
  %s15 = scalar_select 0, %s14, %s12
  $region1: #{tpu_custom_call.1} parent=0
    #allocation2 [shape = 'u8[65536]{0}', space=vmem, size = 0x10000, scoped, tag = 'input window, operand 0']
    #allocation3 [shape = 's32[2]{0}', space=sflag, size = 0x8, scoped, tag = 'scoped memory for tpu_custom_call.1']
    #allocation4 [shape = 's32[2]{0}', space=sflag, size = 0x8, scoped, tag = 'scoped memory for tpu_custom_call.1']
    #allocation5 [shape = 'u8[24576]{0}', space=vmem, size = 0x6000, scoped, tag = 'input window, operand 1, single buffered']
    #allocation6 [shape = 's32[1]{0}', space=sflag, size = 0x4, scoped, tag = 'scoped memory for tpu_custom_call.1']
    #allocation7 [shape = 'u8[49152]{0}', space=vmem, size = 0xc000, scoped, tag = 'input window, operand 3, single buffered']
    #allocation8 [shape = 'u8[1024]{0}', space=vmem, size = 0x400, scoped, tag = 'input window, operand 4, single buffered']
    #allocation9 [shape = 's32[1]{0}', space=sflag, size = 0x4, scoped, tag = 'scoped memory for tpu_custom_call.1']
    #allocation10 [shape = 'u8[512]{0}', space=vmem, size = 0x400, scoped, tag = 'input window, operand 6, single buffered']
    #allocation11 [shape = 'u8[65536]{0}', space=vmem, size = 0x10000, scoped, tag = 'output window, operand 0']
    %16 = vsyncpa [#allocation3], 0
    %s17 = scalar_lea.sflag [#allocation3], 1
    %18 = vsyncpa %s17, 0
    %19 = vsyncpa [#allocation6], 0
    %20 = vsyncpa [#allocation9], 0
    %21 = vsyncpa [#allocation4], 0
    %s22 = scalar_lea.sflag [#allocation4], 1
    %23 = vsyncpa %s22, 0
    loop: start=0, step=1, limit=4
    $region2: #{tpu_custom_call.1} parent=1 // loop_pre_header
      _
    $region3: #{tpu_custom_call.1} parent=1 // loop_header
      %s25 = sphi 0, %s29
      %p26 = scmp.ge.s32.totalorder %s25, 4
      %s35 = sphi 0, %s37
      %s38 = sphi 0, %s35
      %s39 = sphi 0, %s38
      %s55 = sphi 0, %s39
      %s59 = sphi 0, %s59
      %s61 = sphi 0, %s59
      %s62 = sphi 0, %s61
      %s76 = sphi 0, %s62
      %s80 = sphi 0, %s80
      %s82 = sphi 0, %s80
      %s83 = sphi 0, %s82
      %s97 = sphi 0, %s83
      %s101 = sphi 0, %s101
      %s103 = sphi 0, %s101
      %s104 = sphi 0, %s103
      %s118 = sphi 0, %s104
      %s122 = sphi 0, %s122
      %s124 = sphi 0, %s122
      %s125 = sphi 0, %s124
      %s139 = sphi 0, %s125
      %s143 = sphi 0, %s143
      %s145 = sphi 0, %s143
      %s146 = sphi 0, %s145
      %s160 = sphi 0, %s146
      %s164 = sphi 0, %s164
      %s166 = sphi 0, %s164
      %s167 = sphi 0, %s166
      %s181 = sphi 0, %s167
      %s185 = sphi 0, %s185
      %s187 = sphi 0, %s185
      %s188 = sphi 0, %s187
      %s202 = sphi 0, %s188
      %s206 = sphi 0, %s206
      %s208 = sphi 0, %s206
      %s209 = sphi 0, %s208
      %s223 = sphi 0, %s209
      %s227 = sphi 0, %s227
      %s229 = sphi 0, %s227
      %s230 = sphi 0, %s229
      %s244 = sphi 0, %s230
      %s248 = sphi 0, %s248
      %s250 = sphi 0, %s248
      %s251 = sphi 0, %s250
      %s265 = sphi 0, %s251
      %s271 = sphi 0, %s273
      %s274 = sphi 0, %s271
      %s275 = sphi 0, %s274
      %s291 = sphi 0, %s275
    $region4: #{tpu_custom_call.1} parent=1 // loop_header_branch
      %28 = sbr.rel (%p26) target = $region8
    $region5: #{tpu_custom_call.1} parent=1 // loop_body
      %s30 = ssub.s32 %s25, 1
      %s31 = ssub.s32 %s25, 2
      %s32 = sadd.s32 %s25, 1
      %s33 = ssub.s32 %s25, %s32
      %p34 = scmp.eq.s32.totalorder %s33, 0
      %s36 = sadd.s32 %s35, 1
      %s37 = scalar_select %p34, %s35, %s36
      %p40 = pneg %p34
      %p41 = scmp.eq.s32.totalorder %s25, 1
      %p42 = por %p40, %p41
      %p43 = scmp.ne.s32.totalorder %s35, %s38
      %p44 = scmp.eq.s32.totalorder %s25, 0
      %p45 = por %p43, %p44
      %p46 = scmp.ne.s32.totalorder %s35, %s38
      %p47 = scmp.eq.s32.totalorder %s30, 1
      %p48 = por %p46, %p47
      %p49 = scmp.ne.s32.totalorder %s38, %s39
      %p50 = scmp.eq.s32.totalorder %s30, 0
      %p51 = por %p49, %p50
      %p52 = scmp.ne.s32.totalorder %s38, %s39
      %p53 = scmp.eq.s32.totalorder %s31, 1
      %p54 = por %p52, %p53
      %p56 = scmp.ne.s32.totalorder %s39, %s55
      %p57 = scmp.eq.s32.totalorder %s31, 0
      %p58 = por %p56, %p57
      %s60 = sadd.s32 %s59, 1
      %p63 = scmp.eq.s32.totalorder %s25, 1
      %p64 = scmp.ne.s32.totalorder %s59, %s61
      %p65 = scmp.eq.s32.totalorder %s25, 0
      %p66 = por %p64, %p65
      %p67 = scmp.ne.s32.totalorder %s59, %s61
      %p68 = scmp.eq.s32.totalorder %s30, 1
      %p69 = por %p67, %p68
      %p70 = scmp.ne.s32.totalorder %s61, %s62
      %p71 = scmp.eq.s32.totalorder %s30, 0
      %p72 = por %p70, %p71
      %p73 = scmp.ne.s32.totalorder %s61, %s62
      %p74 = scmp.eq.s32.totalorder %s31, 1
      %p75 = por %p73, %p74
      %p77 = scmp.ne.s32.totalorder %s62, %s76
      %p78 = scmp.eq.s32.totalorder %s31, 0
      %p79 = por %p77, %p78
      %s81 = sadd.s32 %s80, 1
      %p84 = scmp.eq.s32.totalorder %s25, 1
      %p85 = scmp.ne.s32.totalorder %s80, %s82
      %p86 = scmp.eq.s32.totalorder %s25, 0
      %p87 = por %p85, %p86
      %p88 = scmp.ne.s32.totalorder %s80, %s82
      %p89 = scmp.eq.s32.totalorder %s30, 1
      %p90 = por %p88, %p89
      %p91 = scmp.ne.s32.totalorder %s82, %s83
      %p92 = scmp.eq.s32.totalorder %s30, 0
      %p93 = por %p91, %p92
      %p94 = scmp.ne.s32.totalorder %s82, %s83
      %p95 = scmp.eq.s32.totalorder %s31, 1
      %p96 = por %p94, %p95
      %p98 = scmp.ne.s32.totalorder %s83, %s97
      %p99 = scmp.eq.s32.totalorder %s31, 0
      %p100 = por %p98, %p99
      %s102 = sadd.s32 %s101, 1
      %p105 = scmp.eq.s32.totalorder %s25, 1
      %p106 = scmp.ne.s32.totalorder %s101, %s103
      %p107 = scmp.eq.s32.totalorder %s25, 0
      %p108 = por %p106, %p107
      %p109 = scmp.ne.s32.totalorder %s101, %s103
      %p110 = scmp.eq.s32.totalorder %s30, 1
      %p111 = por %p109, %p110
      %p112 = scmp.ne.s32.totalorder %s103, %s104
      %p113 = scmp.eq.s32.totalorder %s30, 0
      %p114 = por %p112, %p113
      %p115 = scmp.ne.s32.totalorder %s103, %s104
      %p116 = scmp.eq.s32.totalorder %s31, 1
      %p117 = por %p115, %p116
      %p119 = scmp.ne.s32.totalorder %s104, %s118
      %p120 = scmp.eq.s32.totalorder %s31, 0
      %p121 = por %p119, %p120
      %s123 = sadd.s32 %s122, 1
      %p126 = scmp.eq.s32.totalorder %s25, 1
      %p127 = scmp.ne.s32.totalorder %s122, %s124
      %p128 = scmp.eq.s32.totalorder %s25, 0
      %p129 = por %p127, %p128
      %p130 = scmp.ne.s32.totalorder %s122, %s124
      %p131 = scmp.eq.s32.totalorder %s30, 1
      %p132 = por %p130, %p131
      %p133 = scmp.ne.s32.totalorder %s124, %s125
      %p134 = scmp.eq.s32.totalorder %s30, 0
      %p135 = por %p133, %p134
      %p136 = scmp.ne.s32.totalorder %s124, %s125
      %p137 = scmp.eq.s32.totalorder %s31, 1
      %p138 = por %p136, %p137
      %p140 = scmp.ne.s32.totalorder %s125, %s139
      %p141 = scmp.eq.s32.totalorder %s31, 0
      %p142 = por %p140, %p141
      %s144 = sadd.s32 %s143, 1
      %p147 = scmp.eq.s32.totalorder %s25, 1
      %p148 = scmp.ne.s32.totalorder %s143, %s145
      %p149 = scmp.eq.s32.totalorder %s25, 0
      %p150 = por %p148, %p149
      %p151 = scmp.ne.s32.totalorder %s143, %s145
      %p152 = scmp.eq.s32.totalorder %s30, 1
      %p153 = por %p151, %p152
      %p154 = scmp.ne.s32.totalorder %s145, %s146
      %p155 = scmp.eq.s32.totalorder %s30, 0
      %p156 = por %p154, %p155
      %p157 = scmp.ne.s32.totalorder %s145, %s146
      %p158 = scmp.eq.s32.totalorder %s31, 1
      %p159 = por %p157, %p158
      %p161 = scmp.ne.s32.totalorder %s146, %s160
      %p162 = scmp.eq.s32.totalorder %s31, 0
      %p163 = por %p161, %p162
      %s165 = sadd.s32 %s164, 1
      %p168 = scmp.eq.s32.totalorder %s25, 1
      %p169 = scmp.ne.s32.totalorder %s164, %s166
      %p170 = scmp.eq.s32.totalorder %s25, 0
      %p171 = por %p169, %p170
      %p172 = scmp.ne.s32.totalorder %s164, %s166
      %p173 = scmp.eq.s32.totalorder %s30, 1
      %p174 = por %p172, %p173
      %p175 = scmp.ne.s32.totalorder %s166, %s167
      %p176 = scmp.eq.s32.totalorder %s30, 0
      %p177 = por %p175, %p176
      %p178 = scmp.ne.s32.totalorder %s166, %s167
      %p179 = scmp.eq.s32.totalorder %s31, 1
      %p180 = por %p178, %p179
      %p182 = scmp.ne.s32.totalorder %s167, %s181
      %p183 = scmp.eq.s32.totalorder %s31, 0
      %p184 = por %p182, %p183
      %s186 = sadd.s32 %s185, 1
      %p189 = scmp.eq.s32.totalorder %s25, 1
      %p190 = scmp.ne.s32.totalorder %s185, %s187
      %p191 = scmp.eq.s32.totalorder %s25, 0
      %p192 = por %p190, %p191
      %p193 = scmp.ne.s32.totalorder %s185, %s187
      %p194 = scmp.eq.s32.totalorder %s30, 1
      %p195 = por %p193, %p194
      %p196 = scmp.ne.s32.totalorder %s187, %s188
      %p197 = scmp.eq.s32.totalorder %s30, 0
      %p198 = por %p196, %p197
      %p199 = scmp.ne.s32.totalorder %s187, %s188
      %p200 = scmp.eq.s32.totalorder %s31, 1
      %p201 = por %p199, %p200
      %p203 = scmp.ne.s32.totalorder %s188, %s202
      %p204 = scmp.eq.s32.totalorder %s31, 0
      %p205 = por %p203, %p204
      %s207 = sadd.s32 %s206, 1
      %p210 = scmp.eq.s32.totalorder %s25, 1
      %p211 = scmp.ne.s32.totalorder %s206, %s208
      %p212 = scmp.eq.s32.totalorder %s25, 0
      %p213 = por %p211, %p212
      %p214 = scmp.ne.s32.totalorder %s206, %s208
      %p215 = scmp.eq.s32.totalorder %s30, 1
      %p216 = por %p214, %p215
      %p217 = scmp.ne.s32.totalorder %s208, %s209
      %p218 = scmp.eq.s32.totalorder %s30, 0
      %p219 = por %p217, %p218
      %p220 = scmp.ne.s32.totalorder %s208, %s209
      %p221 = scmp.eq.s32.totalorder %s31, 1
      %p222 = por %p220, %p221
      %p224 = scmp.ne.s32.totalorder %s209, %s223
      %p225 = scmp.eq.s32.totalorder %s31, 0
      %p226 = por %p224, %p225
      %s228 = sadd.s32 %s227, 1
      %p231 = scmp.eq.s32.totalorder %s25, 1
      %p232 = scmp.ne.s32.totalorder %s227, %s229
      %p233 = scmp.eq.s32.totalorder %s25, 0
      %p234 = por %p232, %p233
      %p235 = scmp.ne.s32.totalorder %s227, %s229
      %p236 = scmp.eq.s32.totalorder %s30, 1
      %p237 = por %p235, %p236
      %p238 = scmp.ne.s32.totalorder %s229, %s230
      %p239 = scmp.eq.s32.totalorder %s30, 0
      %p240 = por %p238, %p239
      %p241 = scmp.ne.s32.totalorder %s229, %s230
      %p242 = scmp.eq.s32.totalorder %s31, 1
      %p243 = por %p241, %p242
      %p245 = scmp.ne.s32.totalorder %s230, %s244
      %p246 = scmp.eq.s32.totalorder %s31, 0
      %p247 = por %p245, %p246
      %s249 = sadd.s32 %s248, 1
      %p252 = scmp.eq.s32.totalorder %s25, 1
      %p253 = scmp.ne.s32.totalorder %s248, %s250
      %p254 = scmp.eq.s32.totalorder %s25, 0
      %p255 = por %p253, %p254
      %p256 = scmp.ne.s32.totalorder %s248, %s250
      %p257 = scmp.eq.s32.totalorder %s30, 1
      %p258 = por %p256, %p257
      %p259 = scmp.ne.s32.totalorder %s250, %s251
      %p260 = scmp.eq.s32.totalorder %s30, 0
      %p261 = por %p259, %p260
      %p262 = scmp.ne.s32.totalorder %s250, %s251
      %p263 = scmp.eq.s32.totalorder %s31, 1
      %p264 = por %p262, %p263
      %p266 = scmp.ne.s32.totalorder %s251, %s265
      %p267 = scmp.eq.s32.totalorder %s31, 0
      %p268 = por %p266, %p267
      %s269 = ssub.s32 %s25, %s32
      %p270 = scmp.eq.s32.totalorder %s269, 0
      %s272 = sadd.s32 %s271, 1
      %s273 = scalar_select %p270, %s271, %s272
      %p276 = pneg %p270
      %p277 = scmp.eq.s32.totalorder %s25, 1
      %p278 = por %p276, %p277
      %p279 = scmp.ne.s32.totalorder %s271, %s274
      %p280 = scmp.eq.s32.totalorder %s25, 0
      %p281 = por %p279, %p280
      %p282 = scmp.ne.s32.totalorder %s271, %s274
      %p283 = scmp.eq.s32.totalorder %s30, 1
      %p284 = por %p282, %p283
      %p285 = scmp.ne.s32.totalorder %s274, %s275
      %p286 = scmp.eq.s32.totalorder %s30, 0
      %p287 = por %p285, %p286
      %p288 = scmp.ne.s32.totalorder %s274, %s275
      %p289 = scmp.eq.s32.totalorder %s31, 1
      %p290 = por %p288, %p289
      %p292 = scmp.ne.s32.totalorder %s275, %s291
      %p293 = scmp.eq.s32.totalorder %s31, 0
      %p294 = por %p292, %p293
      %p295 = scmp.le.s32.totalorder 1, %s25
      %p296 = scmp.lt.s32.totalorder %s25, 3
      %p297 = pnand %p295, %p296
      %p298 = pneg %p297
      // Predicated region
      $region9: #{tpu_custom_call.1} parent=5 // pred_check
        _
      $region10: #{tpu_custom_call.1} parent=5 // pred_check_branch
        %300 = sbr.rel (%p297) target = $region12
      $region11: #{tpu_custom_call.1} parent=5 // pred_region
        %s301 = ssub.s32 %s25, 1
        // Predicated region
        $region13: #{tpu_custom_call.1} parent=11 // pred_check
          %p302 = pneg %p72
        $region14: #{tpu_custom_call.1} parent=11 // pred_check_branch
          %304 = sbr.rel (%p302) target = $region16
        $region15: #{tpu_custom_call.1} parent=11 // pred_region
          %s306 = ssub.s32 768, 768
          %307 = vsyncadd [#allocation6], %s306
          %s308 = sshll.u32 [#allocation5], 4
          %s309 = int_to_ptr.vmem [resolvable:$true] %s308
          %314 = dma.hbm_to_vmem [thread:$0]  %s1, 768, %s309, [#allocation6], 64, 64, 4
        $region16: #{tpu_custom_call.1} parent=11 // pred_fallthru
          _
        // Predicated region
        $region17: #{tpu_custom_call.1} parent=11 // pred_check
          %p315 = pneg %p93
        $region18: #{tpu_custom_call.1} parent=11 // pred_check_branch
          %317 = sbr.rel (%p315) target = $region20
        $region19: #{tpu_custom_call.1} parent=11 // pred_region
          _
        $region20: #{tpu_custom_call.1} parent=11 // pred_fallthru
          _
        // Predicated region
        $region21: #{tpu_custom_call.1} parent=11 // pred_check
          %p318 = pneg %p114
        $region22: #{tpu_custom_call.1} parent=11 // pred_check_branch
          %320 = sbr.rel (%p318) target = $region24
        $region23: #{tpu_custom_call.1} parent=11 // pred_region
          %s322 = ssub.s32 1536, 1536
          %323 = vsyncadd [#allocation6], %s322
          %s324 = sshll.u32 [#allocation7], 4
          %s325 = int_to_ptr.vmem [resolvable:$true] %s324
          %330 = dma.hbm_to_vmem [thread:$0]  %s3, 1536, %s325, [#allocation6], 64, 64, 4
        $region24: #{tpu_custom_call.1} parent=11 // pred_fallthru
          _
        // Predicated region
        $region25: #{tpu_custom_call.1} parent=11 // pred_check
          %p331 = pneg %p135
        $region26: #{tpu_custom_call.1} parent=11 // pred_check_branch
          %333 = sbr.rel (%p331) target = $region28
        $region27: #{tpu_custom_call.1} parent=11 // pred_region
          %s335 = ssub.s32 32, 32
          %336 = vsyncadd [#allocation9], %s335
          %s337 = sshll.u32 [#allocation8], 4
          %s338 = int_to_ptr.vmem [resolvable:$true] %s337
          %343 = dma.hbm_to_vmem [thread:$0]  %s4, 32, %s338, [#allocation9], 16, 16, 1
        $region28: #{tpu_custom_call.1} parent=11 // pred_fallthru
          _
        // Predicated region
        $region29: #{tpu_custom_call.1} parent=11 // pred_check
          %p344 = pneg %p156
        $region30: #{tpu_custom_call.1} parent=11 // pred_check_branch
          %346 = sbr.rel (%p344) target = $region32
        $region31: #{tpu_custom_call.1} parent=11 // pred_region
          _
        $region32: #{tpu_custom_call.1} parent=11 // pred_fallthru
          _
        // Predicated region
        $region33: #{tpu_custom_call.1} parent=11 // pred_check
          %p347 = pneg %p177
        $region34: #{tpu_custom_call.1} parent=11 // pred_check_branch
          %349 = sbr.rel (%p347) target = $region36
        $region35: #{tpu_custom_call.1} parent=11 // pred_region
          %s351 = ssub.s32 16, 16
          %352 = vsyncadd [#allocation9], %s351
          %s354 = sshll.u32 [#allocation10], 4
          %s355 = int_to_ptr.vmem [resolvable:$true] %s354
          %357 = dma.hbm_to_vmem [thread:$0]  %s6, 16, %s355, [#allocation9]
        $region36: #{tpu_custom_call.1} parent=11 // pred_fallthru
          _
        // Predicated region
        $region37: #{tpu_custom_call.1} parent=11 // pred_check
          %p358 = pneg %p198
        $region38: #{tpu_custom_call.1} parent=11 // pred_check_branch
          %360 = sbr.rel (%p358) target = $region40
        $region39: #{tpu_custom_call.1} parent=11 // pred_region
          _
        $region40: #{tpu_custom_call.1} parent=11 // pred_fallthru
          _
        // Predicated region
        $region41: #{tpu_custom_call.1} parent=11 // pred_check
          %p361 = pneg %p219
        $region42: #{tpu_custom_call.1} parent=11 // pred_check_branch
          %363 = sbr.rel (%p361) target = $region44
        $region43: #{tpu_custom_call.1} parent=11 // pred_region
          _
        $region44: #{tpu_custom_call.1} parent=11 // pred_fallthru
          _
        // Predicated region
        $region45: #{tpu_custom_call.1} parent=11 // pred_check
          %p364 = pneg %p240
        $region46: #{tpu_custom_call.1} parent=11 // pred_check_branch
          %366 = sbr.rel (%p364) target = $region48
        $region47: #{tpu_custom_call.1} parent=11 // pred_region
          _
        $region48: #{tpu_custom_call.1} parent=11 // pred_fallthru
          _
        // Predicated region
        $region49: #{tpu_custom_call.1} parent=11 // pred_check
          %p367 = pneg %p261
        $region50: #{tpu_custom_call.1} parent=11 // pred_check_branch
          %369 = sbr.rel (%p367) target = $region52
        $region51: #{tpu_custom_call.1} parent=11 // pred_region
          _
        $region52: #{tpu_custom_call.1} parent=11 // pred_fallthru
          _
      $region12: #{tpu_custom_call.1} parent=5 // pred_fallthru
        _
      %p370 = scmp.lt.s32.totalorder %s25, 2
      // Predicated region
      $region53: #{tpu_custom_call.1} parent=5 // pred_check
        %p371 = pneg %p370
      $region54: #{tpu_custom_call.1} parent=5 // pred_check_branch
        %373 = sbr.rel (%p371) target = $region56
      $region55: #{tpu_custom_call.1} parent=5 // pred_region
        // Predicated region
        $region57: #{tpu_custom_call.1} parent=55 // pred_check
          %p374 = pneg %p45
        $region58: #{tpu_custom_call.1} parent=55 // pred_check_branch
          %376 = sbr.rel (%p374) target = $region60
        $region59: #{tpu_custom_call.1} parent=55 // pred_region
          %s377 = sand.u32 %s35, 1
          %s378 = scalar_lea.sflag [#allocation3], %s377
          %s379 = sand.u32 %s35, 1
          %s380 = smul.addr %s379, 64
          %s381 = scalar_lea.vmem [#allocation2], %s380
          %s382 = smul.u32 4, %s25
          %s384 = ssub.s32 1024, 1024
          %385 = vsyncadd %s378, %s384
          %s386 = smul.addr %s382, 2
          %s387 = smul.addr %s386, 128
          %s388 = scalar_lea.hbm %s0, %s387
          %s389 = sshll.u32 %s381, 4
          %s390 = int_to_ptr.vmem [resolvable:$true] %s389
          %395 = dma.hbm_to_vmem [thread:$0]  %s388, 1024, %s390, %s378, 128, 128, 8
        $region60: #{tpu_custom_call.1} parent=55 // pred_fallthru
          _
      $region56: #{tpu_custom_call.1} parent=5 // pred_fallthru
        _
      %p396 = scmp.le.s32.totalorder 1, %s25
      %p397 = scmp.lt.s32.totalorder %s25, 3
      %p398 = pnand %p396, %p397
      %p399 = pneg %p398
      // Predicated region
      $region61: #{tpu_custom_call.1} parent=5 // pred_check
        _
      $region62: #{tpu_custom_call.1} parent=5 // pred_check_branch
        %401 = sbr.rel (%p398) target = $region64
      $region63: #{tpu_custom_call.1} parent=5 // pred_region
        %s402 = ssub.s32 %s25, 1
        %s403 = sand.u32 %s38, 1
        %s404 = scalar_lea.sflag [#allocation3], %s403
        %s405 = sand.u32 %s38, 1
        %s406 = smul.addr %s405, 64
        %s407 = scalar_lea.vmem [#allocation2], %s406
        // Predicated region
        $region65: #{tpu_custom_call.1} parent=63 // pred_check
          %p408 = pneg %p51
        $region66: #{tpu_custom_call.1} parent=63 // pred_check_branch
          %410 = sbr.rel (%p408) target = $region68
        $region67: #{tpu_custom_call.1} parent=63 // pred_region
          %411 = dma.done %s404, 1024
        $region68: #{tpu_custom_call.1} parent=63 // pred_fallthru
          _
        // Predicated region
        $region69: #{tpu_custom_call.1} parent=63 // pred_check
          %p412 = pneg %p72
        $region70: #{tpu_custom_call.1} parent=63 // pred_check_branch
          %414 = sbr.rel (%p412) target = $region72
        $region71: #{tpu_custom_call.1} parent=63 // pred_region
          %415 = dma.done [#allocation6], 768
        $region72: #{tpu_custom_call.1} parent=63 // pred_fallthru
          _
        // Predicated region
        $region73: #{tpu_custom_call.1} parent=63 // pred_check
          %p416 = pneg %p114
        $region74: #{tpu_custom_call.1} parent=63 // pred_check_branch
          %418 = sbr.rel (%p416) target = $region76
        $region75: #{tpu_custom_call.1} parent=63 // pred_region
          %419 = dma.done [#allocation6], 1536
        $region76: #{tpu_custom_call.1} parent=63 // pred_fallthru
          _
        // Predicated region
        $region77: #{tpu_custom_call.1} parent=63 // pred_check
          %p420 = pneg %p135
        $region78: #{tpu_custom_call.1} parent=63 // pred_check_branch
          %422 = sbr.rel (%p420) target = $region80
        $region79: #{tpu_custom_call.1} parent=63 // pred_region
          %423 = dma.done [#allocation9], 32
        $region80: #{tpu_custom_call.1} parent=63 // pred_fallthru
          _
        // Predicated region
        $region81: #{tpu_custom_call.1} parent=63 // pred_check
          %p424 = pneg %p177
        $region82: #{tpu_custom_call.1} parent=63 // pred_check_branch
          %426 = sbr.rel (%p424) target = $region84
        $region83: #{tpu_custom_call.1} parent=63 // pred_region
          %427 = dma.done [#allocation9], 16
        $region84: #{tpu_custom_call.1} parent=63 // pred_fallthru
          _
        %s428 = sand.u32 %s38, 1
        %s429 = scalar_lea.sflag [#allocation3], %s428
        %s430 = sand.u32 %s38, 1
        %s431 = smul.addr %s430, 64
        %s432 = scalar_lea.vmem [#allocation2], %s431
        %p433 = pneg %p51
        %p434 = pneg %p48
        %p435 = pneg %p72
        %p436 = pneg %p69
        %p437 = pneg %p93
        %p438 = pneg %p90
        %p439 = pneg %p114
        %p440 = pneg %p111
        %p441 = pneg %p135
        %p442 = pneg %p132
        %p443 = pneg %p156
        %p444 = pneg %p153
        %p445 = pneg %p177
        %p446 = pneg %p174
        %p447 = pneg %p198
        %p448 = pneg %p195
        %p449 = pneg %p219
        %p450 = pneg %p216
        %p451 = pneg %p240
        %p452 = pneg %p237
        %p453 = pneg %p261
        %p454 = pneg %p258
        %p455 = pneg %p287
        %p456 = pneg %p284
        %s457 = sand.u32 %s274, 1
        %s458 = scalar_lea.sflag [#allocation4], %s457
        %s459 = sand.u32 %s274, 1
        %s460 = smul.addr %s459, 64
        %s461 = scalar_lea.vmem [#allocation11], %s460
        %s462 = smul.u32 4, %s30
        %s463 = smul.u32 4, %s30
        %v465 = vld [vmem:[%s407] sm:$0xff]
        %v466 = vld [vmem:[%s407 + $0x8] sm:$0xff]
        %v467 = vld [vmem:[%s407 + $0x10] sm:$0xff]
        %v468 = vld [vmem:[%s407 + $0x18] sm:$0xff]
        %v469 = vld [vmem:[%s407 + $0x20] sm:$0xff]
        %v470 = vld [vmem:[%s407 + $0x28] sm:$0xff]
        %v471 = vld [vmem:[%s407 + $0x30] sm:$0xff]
        %v472 = vld [vmem:[%s407 + $0x38] sm:$0xff]
        %v473 = vlaneseq
        %v474 = vshrl.u32 %v473, 7
        %v475 = vadd.s32 %v474, 8
        %v476 = vsub.s32 %v474, 3
        %v477 = vsub.s32 %v475, 3
        %vm478 = vcmp.ge.s32.totalorder %v476, 0
        %vm479 = vcmp.ge.s32.totalorder %v477, 0
        %vm480 = vcmp.lt.s32.totalorder %v476, 16
        %vm481 = vcmp.lt.s32.totalorder %v477, 16
        %vm482 = vmand %vm478, %vm480
        %vm483 = vmand %vm479, %vm481
        %v484 = vsub.s32 %v474, 4294967293
        %v485 = vsub.s32 %v475, 4294967293
        %vm486 = vcmp.ge.s32.totalorder %v484, 0
        %vm487 = vcmp.ge.s32.totalorder %v485, 0
        %vm488 = vcmp.lt.s32.totalorder %v484, 16
        %vm489 = vcmp.lt.s32.totalorder %v485, 16
        %vm490 = vmand %vm486, %vm488
        %vm491 = vmand %vm487, %vm489
        %v492 = vsub.s32 %v474, 1
        %v493 = vsub.s32 %v475, 1
        %vm494 = vcmp.ge.s32.totalorder %v492, 0
        %vm495 = vcmp.ge.s32.totalorder %v493, 0
        %vm496 = vcmp.lt.s32.totalorder %v492, 16
        %vm497 = vcmp.lt.s32.totalorder %v493, 16
        %vm498 = vmand %vm494, %vm496
        %vm499 = vmand %vm495, %vm497
        %v500 = vsub.s32 %v474, 4294967295
        %v501 = vsub.s32 %v475, 4294967295
        %vm502 = vcmp.ge.s32.totalorder %v500, 0
        %vm503 = vcmp.ge.s32.totalorder %v501, 0
        %vm504 = vcmp.lt.s32.totalorder %v500, 16
        %vm505 = vcmp.lt.s32.totalorder %v501, 16
        %vm506 = vmand %vm502, %vm504
        %vm507 = vmand %vm503, %vm505
        %vm508 = vcmp.gt.f32.partialorder %v465, 0.0
        %vm509 = vcmp.gt.f32.partialorder %v466, 0.0
        %vm510 = vcmp.gt.f32.partialorder %v467, 0.0
        %vm511 = vcmp.gt.f32.partialorder %v468, 0.0
        %vm512 = vcmp.gt.f32.partialorder %v469, 0.0
        %vm513 = vcmp.gt.f32.partialorder %v470, 0.0
        %vm514 = vcmp.gt.f32.partialorder %v471, 0.0
        %vm515 = vcmp.gt.f32.partialorder %v472, 0.0
        %v516 = vmul.f32 %v465, 1.442695
        %v517 = vpow.pop %v516
        %v518 = vmul.f32 %v466, 1.442695
        %v519 = vpow.pop %v518
        %v520 = vmul.f32 %v467, 1.442695
        %v521 = vpow.pop %v520
        %v522 = vmul.f32 %v468, 1.442695
        %v523 = vpow.pop %v522
        %v524 = vmul.f32 %v469, 1.442695
        %v525 = vpow.pop %v524
        %v526 = vmul.f32 %v470, 1.442695
        %v527 = vpow.pop %v526
        %v528 = vmul.f32 %v471, 1.442695
        %v529 = vpow.pop %v528
        %v530 = vmul.f32 %v472, 1.442695
        %v531 = vpow.pop %v530
        %v532 = vsub.f32 %v517, 1.0
        %v533 = vsub.f32 %v519, 1.0
        %v534 = vsub.f32 %v521, 1.0
        %v535 = vsub.f32 %v523, 1.0
        %v536 = vsub.f32 %v525, 1.0
        %v537 = vsub.f32 %v527, 1.0
        %v538 = vsub.f32 %v529, 1.0
        %v539 = vsub.f32 %v531, 1.0
        %v540 = vsel %vm508, %v465, %v532
        %v541 = vsel %vm509, %v466, %v533
        %v542 = vsel %vm510, %v467, %v534
        %v543 = vsel %vm511, %v468, %v535
        %v544 = vsel %vm512, %v469, %v536
        %v545 = vsel %vm513, %v470, %v537
        %v546 = vsel %vm514, %v471, %v538
        %v547 = vsel %vm515, %v472, %v539
        %v548 = vld [vmem:[%s2] sm:$0x1]
        %v549 = vrot.slane %v540, 5
        %v550 = vrot.slane %v541, 5
        %v551 = vrot.slane %v542, 5
        %v552 = vrot.slane %v543, 5
        %v553 = vrot.slane %v544, 5
        %v554 = vrot.slane %v545, 5
        %v555 = vrot.slane %v546, 5
        %v556 = vrot.slane %v547, 5
        %vm557 = vcmp.lt.s32.totalorder %v474, 3
        %v558 = vsel %vm557, %v555, %v556
        %v559 = vsel %vm557, %v554, %v555
        %v560 = vsel %vm557, %v553, %v554
        %v561 = vsel %vm557, %v552, %v553
        %v562 = vsel %vm557, %v551, %v552
        %v563 = vsel %vm557, %v550, %v551
        %v564 = vsel %vm557, %v549, %v550
        %v565 = vsel %vm557, %v556, %v549
        %v566 = vsel %vm482, 1, 0
        %v567 = vsel %vm483, 1, 0
        %vm568 = vcmp.eq.s32.totalorder %v566, 1
        %vm569 = vcmp.eq.s32.totalorder %v567, 1
        %v570 = vsel %vm568, %v565, 0.0
        %v571 = vsel %vm569, %v564, 0.0
        %v572 = vsel %vm568, %v563, 0.0
        %v573 = vsel %vm569, %v562, 0.0
        %v574 = vsel %vm568, %v561, 0.0
        %v575 = vsel %vm569, %v560, 0.0
        %v576 = vsel %vm568, %v559, 0.0
        %v577 = vsel %vm569, %v558, 0.0
        %v578 = vpack.c.bf16 %v571, %v570
        %v579 = vpack.c.bf16 %v573, %v572
        %v580 = vpack.c.bf16 %v575, %v574
        %v581 = vpack.c.bf16 %v577, %v576
        %v582 = vld [vmem:[#allocation5] sm:$0xf]
        %v583 = vld [vmem:[#allocation5 + $0x4] sm:$0xf]
        %v586 = vunpack.c.l.b16 %v582
        %v587 = vunpack.c.l.b16 %v583
        %v588 = vpack.c.b16 %v587, %v586
        %vm590 = vcmask 130048
        %v592 = vsel %vm590, %v578, 0
        %v595 = vsel %vm590, %v579, 0
        %v598 = vsel %vm590, %v580, 0
        %v601 = vsel %vm590, %v581, 0
        %603 = vmatprep.subr.bf16.mxu0 0
        %604 = vmatpush1.bf16.msra.mxu0 %v588
        %605 = vmatprep.subr.bf16.mxu0 0
        %606 = vmatpush1.bf16.msra.mxu0 0
        %607 = vmatprep.subr.bf16.mxu0 0
        %608 = vmatpush1.bf16.msra.mxu0 0
        %609 = vmatprep.subr.bf16.mxu0 0
        %610 = vmatpush1.bf16.msra.mxu0 0
        %611 = vmatprep.subr.bf16.mxu0 0
        %612 = vmatpush1.bf16.msra.mxu0 0
        %613 = vmatprep.subr.bf16.mxu0 0
        %614 = vmatpush1.bf16.msra.mxu0 0
        %615 = vmatprep.subr.bf16.mxu0 0
        %616 = vmatpush1.bf16.msra.mxu0 0
        %617 = vmatprep.subr.bf16.mxu0 0
        %618 = vmatpush1.bf16.msra.mxu0 0
        %619 = vmatprep.subr.bf16.mxu0 0
        %620 = vmatpush1.bf16.msra.mxu0 0
        %621 = vmatprep.subr.bf16.mxu0 0
        %622 = vmatpush1.bf16.msra.mxu0 0
        %623 = vmatprep.subr.bf16.mxu0 0
        %624 = vmatpush1.bf16.msra.mxu0 0
        %625 = vmatprep.subr.bf16.mxu0 0
        %626 = vmatpush1.bf16.msra.mxu0 0
        %627 = vmatprep.subr.bf16.mxu0 0
        %628 = vmatpush1.bf16.msra.mxu0 0
        %629 = vmatprep.subr.bf16.mxu0 0
        %630 = vmatpush1.bf16.msra.mxu0 0
        %631 = vmatprep.subr.bf16.mxu0 0
        %632 = vmatpush1.bf16.msra.mxu0 0
        %633 = vmatprep.subr.bf16.mxu0 0
        %634 = vmatpush1.bf16.msra.mxu0 0
        %635 = vmatprep.mubr.bf16.mxu0 0
        %636 = vmatmul.mubr.bf16.gmra.mrb[0].mxu0 %v592
        %v637 = vpop.f32.mrb[0].mxu0
        %v638 = vadd.f32 0.0, %v637
        %v639 = vpop.f32.mrb[0].mxu0
        %v640 = vpop.f32.mrb[0].mxu0
        %v641 = vadd.f32 0.0, %v640
        %v642 = vpop.f32.mrb[0].mxu0
        %643 = vmatprep.mubr.bf16.mxu0 0
        %644 = vmatmul.mubr.bf16.gmra.mrb[0].mxu0 %v595
        %v645 = vpop.f32.mrb[0].mxu0
        %v646 = vadd.f32 0.0, %v645
        %v647 = vpop.f32.mrb[0].mxu0
        %v648 = vpop.f32.mrb[0].mxu0
        %v649 = vadd.f32 0.0, %v648
        %v650 = vpop.f32.mrb[0].mxu0
        %651 = vmatprep.mubr.bf16.mxu0 0
        %652 = vmatmul.mubr.bf16.gmra.mrb[0].mxu0 %v598
        %v653 = vpop.f32.mrb[0].mxu0
        %v654 = vadd.f32 0.0, %v653
        %v655 = vpop.f32.mrb[0].mxu0
        %v656 = vpop.f32.mrb[0].mxu0
        %v657 = vadd.f32 0.0, %v656
        %v658 = vpop.f32.mrb[0].mxu0
        %659 = vmatprep.mubr.bf16.mxu0 0
        %660 = vmatmul.mubr.bf16.gmra.mrb[0].mxu0 %v601
        %v661 = vpop.f32.mrb[0].mxu0
        %v662 = vadd.f32 0.0, %v661
        %v663 = vpop.f32.mrb[0].mxu0
        %v664 = vpop.f32.mrb[0].mxu0
        %v665 = vadd.f32 0.0, %v664
        %v666 = vpop.f32.mrb[0].mxu0
        %667 = vdwg.mxu0
        %v669 = vlaneseq
        %v670 = vshrl.u32 %v669, 7
        %v671 = vsub.s32 0, %v670
        %v672 = vrot.slane %v548, %v671
        %v674 = vadd.f32 %v672, %v638
        %v675 = vadd.f32 %v672, %v641
        %v676 = vadd.f32 %v672, %v646
        %v677 = vadd.f32 %v672, %v649
        %v678 = vadd.f32 %v672, %v654
        %v679 = vadd.f32 %v672, %v657
        %v680 = vadd.f32 %v672, %v662
        %v681 = vadd.f32 %v672, %v665
        %v682 = vpack.c.bf16 %v541, %v540
        %v683 = vpack.c.bf16 %v543, %v542
        %v684 = vpack.c.bf16 %v545, %v544
        %v685 = vpack.c.bf16 %v547, %v546
        %s686 = scalar_lea.vmem [#allocation5], 8
        %v687 = vld [vmem:[%s686] sm:$0xf]
        %v688 = vld [vmem:[%s686 + $0x4] sm:$0xf]
        %v691 = vunpack.c.l.b16 %v687
        %v692 = vunpack.c.l.b16 %v688
        %v693 = vpack.c.b16 %v692, %v691
        %v696 = vsel %vm590, %v682, 0
        %v699 = vsel %vm590, %v683, 0
        %v702 = vsel %vm590, %v684, 0
        %v705 = vsel %vm590, %v685, 0
        %707 = vmatprep.subr.bf16.mxu0 0
        %708 = vmatpush1.bf16.msra.mxu0 %v693
        %709 = vmatprep.subr.bf16.mxu0 0
        %710 = vmatpush1.bf16.msra.mxu0 0
        %711 = vmatprep.subr.bf16.mxu0 0
        %712 = vmatpush1.bf16.msra.mxu0 0
        %713 = vmatprep.subr.bf16.mxu0 0
        %714 = vmatpush1.bf16.msra.mxu0 0
        %715 = vmatprep.subr.bf16.mxu0 0
        %716 = vmatpush1.bf16.msra.mxu0 0
        %717 = vmatprep.subr.bf16.mxu0 0
        %718 = vmatpush1.bf16.msra.mxu0 0
        %719 = vmatprep.subr.bf16.mxu0 0
        %720 = vmatpush1.bf16.msra.mxu0 0
        %721 = vmatprep.subr.bf16.mxu0 0
        %722 = vmatpush1.bf16.msra.mxu0 0
        %723 = vmatprep.subr.bf16.mxu0 0
        %724 = vmatpush1.bf16.msra.mxu0 0
        %725 = vmatprep.subr.bf16.mxu0 0
        %726 = vmatpush1.bf16.msra.mxu0 0
        %727 = vmatprep.subr.bf16.mxu0 0
        %728 = vmatpush1.bf16.msra.mxu0 0
        %729 = vmatprep.subr.bf16.mxu0 0
        %730 = vmatpush1.bf16.msra.mxu0 0
        %731 = vmatprep.subr.bf16.mxu0 0
        %732 = vmatpush1.bf16.msra.mxu0 0
        %733 = vmatprep.subr.bf16.mxu0 0
        %734 = vmatpush1.bf16.msra.mxu0 0
        %735 = vmatprep.subr.bf16.mxu0 0
        %736 = vmatpush1.bf16.msra.mxu0 0
        %737 = vmatprep.subr.bf16.mxu0 0
        %738 = vmatpush1.bf16.msra.mxu0 0
        %739 = vmatprep.mubr.bf16.mxu0 0
        %740 = vmatmul.mubr.bf16.gmra.mrb[0].mxu0 %v696
        %v741 = vpop.f32.mrb[0].mxu0
        %v742 = vadd.f32 0.0, %v741
        %v743 = vpop.f32.mrb[0].mxu0
        %v744 = vpop.f32.mrb[0].mxu0
        %v745 = vadd.f32 0.0, %v744
        %v746 = vpop.f32.mrb[0].mxu0
        %747 = vmatprep.mubr.bf16.mxu0 0
        %748 = vmatmul.mubr.bf16.gmra.mrb[0].mxu0 %v699
        %v749 = vpop.f32.mrb[0].mxu0
        %v750 = vadd.f32 0.0, %v749
        %v751 = vpop.f32.mrb[0].mxu0
        %v752 = vpop.f32.mrb[0].mxu0
        %v753 = vadd.f32 0.0, %v752
        %v754 = vpop.f32.mrb[0].mxu0
        %755 = vmatprep.mubr.bf16.mxu0 0
        %756 = vmatmul.mubr.bf16.gmra.mrb[0].mxu0 %v702
        %v757 = vpop.f32.mrb[0].mxu0
        %v758 = vadd.f32 0.0, %v757
        %v759 = vpop.f32.mrb[0].mxu0
        %v760 = vpop.f32.mrb[0].mxu0
        %v761 = vadd.f32 0.0, %v760
        %v762 = vpop.f32.mrb[0].mxu0
        %763 = vmatprep.mubr.bf16.mxu0 0
        %764 = vmatmul.mubr.bf16.gmra.mrb[0].mxu0 %v705
        %v765 = vpop.f32.mrb[0].mxu0
        %v766 = vadd.f32 0.0, %v765
        %v767 = vpop.f32.mrb[0].mxu0
        %v768 = vpop.f32.mrb[0].mxu0
        %v769 = vadd.f32 0.0, %v768
        %v770 = vpop.f32.mrb[0].mxu0
        %771 = vdwg.mxu0
        %v772 = vadd.f32 %v674, %v742
        %v773 = vadd.f32 %v675, %v745
        %v774 = vadd.f32 %v676, %v750
        %v775 = vadd.f32 %v677, %v753
        %v776 = vadd.f32 %v678, %v758
        %v777 = vadd.f32 %v679, %v761
        %v778 = vadd.f32 %v680, %v766
        %v779 = vadd.f32 %v681, %v769
        %v780 = vrot.slane %v540, 3
        %v781 = vrot.slane %v541, 3
        %v782 = vrot.slane %v542, 3
        %v783 = vrot.slane %v543, 3
        %v784 = vrot.slane %v544, 3
        %v785 = vrot.slane %v545, 3
        %v786 = vrot.slane %v546, 3
        %v787 = vrot.slane %v547, 3
        %vm788 = vcmp.lt.s32.totalorder %v474, 5
        %v789 = vsel %vm788, %v786, %v787
        %v790 = vsel %vm788, %v785, %v786
        %v791 = vsel %vm788, %v784, %v785
        %v792 = vsel %vm788, %v783, %v784
        %v793 = vsel %vm788, %v782, %v783
        %v794 = vsel %vm788, %v781, %v782
        %v795 = vsel %vm788, %v780, %v781
        %v796 = vsel %vm788, %v787, %v780
        %v797 = vsel %vm490, 1, 0
        %v798 = vsel %vm491, 1, 0
        %vm799 = vcmp.eq.s32.totalorder %v797, 1
        %vm800 = vcmp.eq.s32.totalorder %v798, 1
        %v801 = vsel %vm799, %v795, 0.0
        %v802 = vsel %vm800, %v794, 0.0
        %v803 = vsel %vm799, %v793, 0.0
        %v804 = vsel %vm800, %v792, 0.0
        %v805 = vsel %vm799, %v791, 0.0
        %v806 = vsel %vm800, %v790, 0.0
        %v807 = vsel %vm799, %v789, 0.0
        %v808 = vsel %vm800, %v796, 0.0
        %v809 = vpack.c.bf16 %v802, %v801
        %v810 = vpack.c.bf16 %v804, %v803
        %v811 = vpack.c.bf16 %v806, %v805
        %v812 = vpack.c.bf16 %v808, %v807
        %s813 = scalar_lea.vmem [#allocation5], 16
        %v814 = vld [vmem:[%s813] sm:$0xf]
        %v815 = vld [vmem:[%s813 + $0x4] sm:$0xf]
        %v818 = vunpack.c.l.b16 %v814
        %v819 = vunpack.c.l.b16 %v815
        %v820 = vpack.c.b16 %v819, %v818
        %v823 = vsel %vm590, %v809, 0
        %v826 = vsel %vm590, %v810, 0
        %v829 = vsel %vm590, %v811, 0
        %v832 = vsel %vm590, %v812, 0
        %834 = vmatprep.subr.bf16.mxu0 0
        %835 = vmatpush1.bf16.msra.mxu0 %v820
        %836 = vmatprep.subr.bf16.mxu0 0
        %837 = vmatpush1.bf16.msra.mxu0 0
        %838 = vmatprep.subr.bf16.mxu0 0
        %839 = vmatpush1.bf16.msra.mxu0 0
        %840 = vmatprep.subr.bf16.mxu0 0
        %841 = vmatpush1.bf16.msra.mxu0 0
        %842 = vmatprep.subr.bf16.mxu0 0
        %843 = vmatpush1.bf16.msra.mxu0 0
        %844 = vmatprep.subr.bf16.mxu0 0
        %845 = vmatpush1.bf16.msra.mxu0 0
        %846 = vmatprep.subr.bf16.mxu0 0
        %847 = vmatpush1.bf16.msra.mxu0 0
        %848 = vmatprep.subr.bf16.mxu0 0
        %849 = vmatpush1.bf16.msra.mxu0 0
        %850 = vmatprep.subr.bf16.mxu0 0
        %851 = vmatpush1.bf16.msra.mxu0 0
        %852 = vmatprep.subr.bf16.mxu0 0
        %853 = vmatpush1.bf16.msra.mxu0 0
        %854 = vmatprep.subr.bf16.mxu0 0
        %855 = vmatpush1.bf16.msra.mxu0 0
        %856 = vmatprep.subr.bf16.mxu0 0
        %857 = vmatpush1.bf16.msra.mxu0 0
        %858 = vmatprep.subr.bf16.mxu0 0
        %859 = vmatpush1.bf16.msra.mxu0 0
        %860 = vmatprep.subr.bf16.mxu0 0
        %861 = vmatpush1.bf16.msra.mxu0 0
        %862 = vmatprep.subr.bf16.mxu0 0
        %863 = vmatpush1.bf16.msra.mxu0 0
        %864 = vmatprep.subr.bf16.mxu0 0
        %865 = vmatpush1.bf16.msra.mxu0 0
        %866 = vmatprep.mubr.bf16.mxu0 0
        %867 = vmatmul.mubr.bf16.gmra.mrb[0].mxu0 %v823
        %v868 = vpop.f32.mrb[0].mxu0
        %v869 = vadd.f32 0.0, %v868
        %v870 = vpop.f32.mrb[0].mxu0
        %v871 = vpop.f32.mrb[0].mxu0
        %v872 = vadd.f32 0.0, %v871
        %v873 = vpop.f32.mrb[0].mxu0
        %874 = vmatprep.mubr.bf16.mxu0 0
        %875 = vmatmul.mubr.bf16.gmra.mrb[0].mxu0 %v826
        %v876 = vpop.f32.mrb[0].mxu0
        %v877 = vadd.f32 0.0, %v876
        %v878 = vpop.f32.mrb[0].mxu0
        %v879 = vpop.f32.mrb[0].mxu0
        %v880 = vadd.f32 0.0, %v879
        %v881 = vpop.f32.mrb[0].mxu0
        %882 = vmatprep.mubr.bf16.mxu0 0
        %883 = vmatmul.mubr.bf16.gmra.mrb[0].mxu0 %v829
        %v884 = vpop.f32.mrb[0].mxu0
        %v885 = vadd.f32 0.0, %v884
        %v886 = vpop.f32.mrb[0].mxu0
        %v887 = vpop.f32.mrb[0].mxu0
        %v888 = vadd.f32 0.0, %v887
        %v889 = vpop.f32.mrb[0].mxu0
        %890 = vmatprep.mubr.bf16.mxu0 0
        %891 = vmatmul.mubr.bf16.gmra.mrb[0].mxu0 %v832
        %v892 = vpop.f32.mrb[0].mxu0
        %v893 = vadd.f32 0.0, %v892
        %v894 = vpop.f32.mrb[0].mxu0
        %v895 = vpop.f32.mrb[0].mxu0
        %v896 = vadd.f32 0.0, %v895
        %v897 = vpop.f32.mrb[0].mxu0
        %898 = vdwg.mxu0
        %v899 = vadd.f32 %v772, %v869
        %v900 = vadd.f32 %v773, %v872
        %v901 = vadd.f32 %v774, %v877
        %v902 = vadd.f32 %v775, %v880
        %v903 = vadd.f32 %v776, %v885
        %v904 = vadd.f32 %v777, %v888
        %v905 = vadd.f32 %v778, %v893
        %v906 = vadd.f32 %v779, %v896
        %vm907 = vcmp.gt.f32.partialorder %v899, 0.0
        %vm908 = vcmp.gt.f32.partialorder %v900, 0.0
        %vm909 = vcmp.gt.f32.partialorder %v901, 0.0
        %vm910 = vcmp.gt.f32.partialorder %v902, 0.0
        %vm911 = vcmp.gt.f32.partialorder %v903, 0.0
        %vm912 = vcmp.gt.f32.partialorder %v904, 0.0
        %vm913 = vcmp.gt.f32.partialorder %v905, 0.0
        %vm914 = vcmp.gt.f32.partialorder %v906, 0.0
        %v915 = vmul.f32 %v899, 1.442695
        %v916 = vpow.pop %v915
        %v917 = vmul.f32 %v900, 1.442695
        %v918 = vpow.pop %v917
        %v919 = vmul.f32 %v901, 1.442695
        %v920 = vpow.pop %v919
        %v921 = vmul.f32 %v902, 1.442695
        %v922 = vpow.pop %v921
        %v923 = vmul.f32 %v903, 1.442695
        %v924 = vpow.pop %v923
        %v925 = vmul.f32 %v904, 1.442695
        %v926 = vpow.pop %v925
        %v927 = vmul.f32 %v905, 1.442695
        %v928 = vpow.pop %v927
        %v929 = vmul.f32 %v906, 1.442695
        %v930 = vpow.pop %v929
        %v931 = vsub.f32 %v916, 1.0
        %v932 = vsub.f32 %v918, 1.0
        %v933 = vsub.f32 %v920, 1.0
        %v934 = vsub.f32 %v922, 1.0
        %v935 = vsub.f32 %v924, 1.0
        %v936 = vsub.f32 %v926, 1.0
        %v937 = vsub.f32 %v928, 1.0
        %v938 = vsub.f32 %v930, 1.0
        %v939 = vsel %vm907, %v899, %v931
        %v940 = vsel %vm908, %v900, %v932
        %v941 = vsel %vm909, %v901, %v933
        %v942 = vsel %vm910, %v902, %v934
        %v943 = vsel %vm911, %v903, %v935
        %v944 = vsel %vm912, %v904, %v936
        %v945 = vsel %vm913, %v905, %v937
        %v946 = vsel %vm914, %v906, %v938
        %v947 = vld [vmem:[#allocation8] sm:$0x1]
        %v948 = vrot.slane %v939, 7
        %v949 = vrot.slane %v940, 7
        %v950 = vrot.slane %v941, 7
        %v951 = vrot.slane %v942, 7
        %v952 = vrot.slane %v943, 7
        %v953 = vrot.slane %v944, 7
        %v954 = vrot.slane %v945, 7
        %v955 = vrot.slane %v946, 7
        %vm956 = vcmp.lt.s32.totalorder %v474, 1
        %v957 = vsel %vm956, %v954, %v955
        %v958 = vsel %vm956, %v953, %v954
        %v959 = vsel %vm956, %v952, %v953
        %v960 = vsel %vm956, %v951, %v952
        %v961 = vsel %vm956, %v950, %v951
        %v962 = vsel %vm956, %v949, %v950
        %v963 = vsel %vm956, %v948, %v949
        %v964 = vsel %vm956, %v955, %v948
        %v965 = vsel %vm498, 1, 0
        %v966 = vsel %vm499, 1, 0
        %vm967 = vcmp.eq.s32.totalorder %v965, 1
        %vm968 = vcmp.eq.s32.totalorder %v966, 1
        %v969 = vsel %vm967, %v964, 0.0
        %v970 = vsel %vm968, %v963, 0.0
        %v971 = vsel %vm967, %v962, 0.0
        %v972 = vsel %vm968, %v961, 0.0
        %v973 = vsel %vm967, %v960, 0.0
        %v974 = vsel %vm968, %v959, 0.0
        %v975 = vsel %vm967, %v958, 0.0
        %v976 = vsel %vm968, %v957, 0.0
        %v977 = vpack.c.bf16 %v970, %v969
        %v978 = vpack.c.bf16 %v972, %v971
        %v979 = vpack.c.bf16 %v974, %v973
        %v980 = vpack.c.bf16 %v976, %v975
        %v981 = vld [vmem:[#allocation7] sm:$0xf]
        %v982 = vld [vmem:[#allocation7 + $0x4] sm:$0xf]
        %v983 = vld [vmem:[#allocation7 + $0x8] sm:$0xf]
        %v984 = vld [vmem:[#allocation7 + $0xc] sm:$0xf]
        %v989 = vunpack.c.l.b16 %v981
        %v990 = vunpack.c.l.b16 %v982
        %v991 = vunpack.c.l.b16 %v983
        %v992 = vunpack.c.l.b16 %v984
        %v993 = vpack.c.b16 %v990, %v989
        %v994 = vpack.c.b16 %v992, %v991
        %vm997 = vcmask 261120
        %v999 = vsel %vm997, %v977, 0
        %v1002 = vsel %vm997, %v978, 0
        %v1005 = vsel %vm997, %v979, 0
        %v1008 = vsel %vm997, %v980, 0
        %1010 = vmatprep.subr.bf16.mxu0 0
        %1011 = vmatpush1.bf16.msra.mxu0 %v993
        %1012 = vmatprep.subr.bf16.mxu0 0
        %1013 = vmatpush1.bf16.msra.mxu0 %v994
        %1014 = vmatprep.subr.bf16.mxu0 0
        %1015 = vmatpush1.bf16.msra.mxu0 0
        %1016 = vmatprep.subr.bf16.mxu0 0
        %1017 = vmatpush1.bf16.msra.mxu0 0
        %1018 = vmatprep.subr.bf16.mxu0 0
        %1019 = vmatpush1.bf16.msra.mxu0 0
        %1020 = vmatprep.subr.bf16.mxu0 0
        %1021 = vmatpush1.bf16.msra.mxu0 0
        %1022 = vmatprep.subr.bf16.mxu0 0
        %1023 = vmatpush1.bf16.msra.mxu0 0
        %1024 = vmatprep.subr.bf16.mxu0 0
        %1025 = vmatpush1.bf16.msra.mxu0 0
        %1026 = vmatprep.subr.bf16.mxu0 0
        %1027 = vmatpush1.bf16.msra.mxu0 0
        %1028 = vmatprep.subr.bf16.mxu0 0
        %1029 = vmatpush1.bf16.msra.mxu0 0
        %1030 = vmatprep.subr.bf16.mxu0 0
        %1031 = vmatpush1.bf16.msra.mxu0 0
        %1032 = vmatprep.subr.bf16.mxu0 0
        %1033 = vmatpush1.bf16.msra.mxu0 0
        %1034 = vmatprep.subr.bf16.mxu0 0
        %1035 = vmatpush1.bf16.msra.mxu0 0
        %1036 = vmatprep.subr.bf16.mxu0 0
        %1037 = vmatpush1.bf16.msra.mxu0 0
        %1038 = vmatprep.subr.bf16.mxu0 0
        %1039 = vmatpush1.bf16.msra.mxu0 0
        %1040 = vmatprep.subr.bf16.mxu0 0
        %1041 = vmatpush1.bf16.msra.mxu0 0
        %1042 = vmatprep.mubr.bf16.mxu0 0
        %1043 = vmatmul.mubr.bf16.gmra.mrb[0].mxu0 %v999
        %v1044 = vpop.f32.mrb[0].mxu0
        %v1045 = vadd.f32 0.0, %v1044
        %v1046 = vpop.f32.mrb[0].mxu0
        %v1047 = vpop.f32.mrb[0].mxu0
        %v1048 = vadd.f32 0.0, %v1047
        %v1049 = vpop.f32.mrb[0].mxu0
        %1050 = vmatprep.mubr.bf16.mxu0 0
        %1051 = vmatmul.mubr.bf16.gmra.mrb[0].mxu0 %v1002
        %v1052 = vpop.f32.mrb[0].mxu0
        %v1053 = vadd.f32 0.0, %v1052
        %v1054 = vpop.f32.mrb[0].mxu0
        %v1055 = vpop.f32.mrb[0].mxu0
        %v1056 = vadd.f32 0.0, %v1055
        %v1057 = vpop.f32.mrb[0].mxu0
        %1058 = vmatprep.mubr.bf16.mxu0 0
        %1059 = vmatmul.mubr.bf16.gmra.mrb[0].mxu0 %v1005
        %v1060 = vpop.f32.mrb[0].mxu0
        %v1061 = vadd.f32 0.0, %v1060
        %v1062 = vpop.f32.mrb[0].mxu0
        %v1063 = vpop.f32.mrb[0].mxu0
        %v1064 = vadd.f32 0.0, %v1063
        %v1065 = vpop.f32.mrb[0].mxu0
        %1066 = vmatprep.mubr.bf16.mxu0 0
        %1067 = vmatmul.mubr.bf16.gmra.mrb[0].mxu0 %v1008
        %v1068 = vpop.f32.mrb[0].mxu0
        %v1069 = vadd.f32 0.0, %v1068
        %v1070 = vpop.f32.mrb[0].mxu0
        %v1071 = vpop.f32.mrb[0].mxu0
        %v1072 = vadd.f32 0.0, %v1071
        %v1073 = vpop.f32.mrb[0].mxu0
        %1074 = vdwg.mxu0
        %v1076 = vlaneseq
        %v1077 = vshrl.u32 %v1076, 7
        %v1078 = vsub.s32 0, %v1077
        %v1079 = vrot.slane %v947, %v1078
        %v1081 = vadd.f32 %v1079, %v1045
        %v1082 = vadd.f32 %v1079, %v1048
        %v1083 = vadd.f32 %v1079, %v1053
        %v1084 = vadd.f32 %v1079, %v1056
        %v1085 = vadd.f32 %v1079, %v1061
        %v1086 = vadd.f32 %v1079, %v1064
        %v1087 = vadd.f32 %v1079, %v1069
        %v1088 = vadd.f32 %v1079, %v1072
        %v1089 = vpack.c.bf16 %v940, %v939
        %v1090 = vpack.c.bf16 %v942, %v941
        %v1091 = vpack.c.bf16 %v944, %v943
        %v1092 = vpack.c.bf16 %v946, %v945
        %s1093 = scalar_lea.vmem [#allocation7], 16
        %v1094 = vld [vmem:[%s1093] sm:$0xf]
        %v1095 = vld [vmem:[%s1093 + $0x4] sm:$0xf]
        %v1096 = vld [vmem:[%s1093 + $0x8] sm:$0xf]
        %v1097 = vld [vmem:[%s1093 + $0xc] sm:$0xf]
        %v1102 = vunpack.c.l.b16 %v1094
        %v1103 = vunpack.c.l.b16 %v1095
        %v1104 = vunpack.c.l.b16 %v1096
        %v1105 = vunpack.c.l.b16 %v1097
        %v1106 = vpack.c.b16 %v1103, %v1102
        %v1107 = vpack.c.b16 %v1105, %v1104
        %v1111 = vsel %vm997, %v1089, 0
        %v1114 = vsel %vm997, %v1090, 0
        %v1117 = vsel %vm997, %v1091, 0
        %v1120 = vsel %vm997, %v1092, 0
        %1122 = vmatprep.subr.bf16.mxu0 0
        %1123 = vmatpush1.bf16.msra.mxu0 %v1106
        %1124 = vmatprep.subr.bf16.mxu0 0
        %1125 = vmatpush1.bf16.msra.mxu0 %v1107
        %1126 = vmatprep.subr.bf16.mxu0 0
        %1127 = vmatpush1.bf16.msra.mxu0 0
        %1128 = vmatprep.subr.bf16.mxu0 0
        %1129 = vmatpush1.bf16.msra.mxu0 0
        %1130 = vmatprep.subr.bf16.mxu0 0
        %1131 = vmatpush1.bf16.msra.mxu0 0
        %1132 = vmatprep.subr.bf16.mxu0 0
        %1133 = vmatpush1.bf16.msra.mxu0 0
        %1134 = vmatprep.subr.bf16.mxu0 0
        %1135 = vmatpush1.bf16.msra.mxu0 0
        %1136 = vmatprep.subr.bf16.mxu0 0
        %1137 = vmatpush1.bf16.msra.mxu0 0
        %1138 = vmatprep.subr.bf16.mxu0 0
        %1139 = vmatpush1.bf16.msra.mxu0 0
        %1140 = vmatprep.subr.bf16.mxu0 0
        %1141 = vmatpush1.bf16.msra.mxu0 0
        %1142 = vmatprep.subr.bf16.mxu0 0
        %1143 = vmatpush1.bf16.msra.mxu0 0
        %1144 = vmatprep.subr.bf16.mxu0 0
        %1145 = vmatpush1.bf16.msra.mxu0 0
        %1146 = vmatprep.subr.bf16.mxu0 0
        %1147 = vmatpush1.bf16.msra.mxu0 0
        %1148 = vmatprep.subr.bf16.mxu0 0
        %1149 = vmatpush1.bf16.msra.mxu0 0
        %1150 = vmatprep.subr.bf16.mxu0 0
        %1151 = vmatpush1.bf16.msra.mxu0 0
        %1152 = vmatprep.subr.bf16.mxu0 0
        %1153 = vmatpush1.bf16.msra.mxu0 0
        %1154 = vmatprep.mubr.bf16.mxu0 0
        %1155 = vmatmul.mubr.bf16.gmra.mrb[0].mxu0 %v1111
        %v1156 = vpop.f32.mrb[0].mxu0
        %v1157 = vadd.f32 0.0, %v1156
        %v1158 = vpop.f32.mrb[0].mxu0
        %v1159 = vpop.f32.mrb[0].mxu0
        %v1160 = vadd.f32 0.0, %v1159
        %v1161 = vpop.f32.mrb[0].mxu0
        %1162 = vmatprep.mubr.bf16.mxu0 0
        %1163 = vmatmul.mubr.bf16.gmra.mrb[0].mxu0 %v1114
        %v1164 = vpop.f32.mrb[0].mxu0
        %v1165 = vadd.f32 0.0, %v1164
        %v1166 = vpop.f32.mrb[0].mxu0
        %v1167 = vpop.f32.mrb[0].mxu0
        %v1168 = vadd.f32 0.0, %v1167
        %v1169 = vpop.f32.mrb[0].mxu0
        %1170 = vmatprep.mubr.bf16.mxu0 0
        %1171 = vmatmul.mubr.bf16.gmra.mrb[0].mxu0 %v1117
        %v1172 = vpop.f32.mrb[0].mxu0
        %v1173 = vadd.f32 0.0, %v1172
        %v1174 = vpop.f32.mrb[0].mxu0
        %v1175 = vpop.f32.mrb[0].mxu0
        %v1176 = vadd.f32 0.0, %v1175
        %v1177 = vpop.f32.mrb[0].mxu0
        %1178 = vmatprep.mubr.bf16.mxu0 0
        %1179 = vmatmul.mubr.bf16.gmra.mrb[0].mxu0 %v1120
        %v1180 = vpop.f32.mrb[0].mxu0
        %v1181 = vadd.f32 0.0, %v1180
        %v1182 = vpop.f32.mrb[0].mxu0
        %v1183 = vpop.f32.mrb[0].mxu0
        %v1184 = vadd.f32 0.0, %v1183
        %v1185 = vpop.f32.mrb[0].mxu0
        %1186 = vdwg.mxu0
        %v1187 = vadd.f32 %v1081, %v1157
        %v1188 = vadd.f32 %v1082, %v1160
        %v1189 = vadd.f32 %v1083, %v1165
        %v1190 = vadd.f32 %v1084, %v1168
        %v1191 = vadd.f32 %v1085, %v1173
        %v1192 = vadd.f32 %v1086, %v1176
        %v1193 = vadd.f32 %v1087, %v1181
        %v1194 = vadd.f32 %v1088, %v1184
        %v1195 = vrot.slane %v939, 1
        %v1196 = vrot.slane %v940, 1
        %v1197 = vrot.slane %v941, 1
        %v1198 = vrot.slane %v942, 1
        %v1199 = vrot.slane %v943, 1
        %v1200 = vrot.slane %v944, 1
        %v1201 = vrot.slane %v945, 1
        %v1202 = vrot.slane %v946, 1
        %vm1203 = vcmp.lt.s32.totalorder %v474, 7
        %v1204 = vsel %vm1203, %v1201, %v1202
        %v1205 = vsel %vm1203, %v1200, %v1201
        %v1206 = vsel %vm1203, %v1199, %v1200
        %v1207 = vsel %vm1203, %v1198, %v1199
        %v1208 = vsel %vm1203, %v1197, %v1198
        %v1209 = vsel %vm1203, %v1196, %v1197
        %v1210 = vsel %vm1203, %v1195, %v1196
        %v1211 = vsel %vm1203, %v1202, %v1195
        %v1212 = vsel %vm506, 1, 0
        %v1213 = vsel %vm507, 1, 0
        %vm1214 = vcmp.eq.s32.totalorder %v1212, 1
        %vm1215 = vcmp.eq.s32.totalorder %v1213, 1
        %v1216 = vsel %vm1214, %v1210, 0.0
        %v1217 = vsel %vm1215, %v1209, 0.0
        %v1218 = vsel %vm1214, %v1208, 0.0
        %v1219 = vsel %vm1215, %v1207, 0.0
        %v1220 = vsel %vm1214, %v1206, 0.0
        %v1221 = vsel %vm1215, %v1205, 0.0
        %v1222 = vsel %vm1214, %v1204, 0.0
        %v1223 = vsel %vm1215, %v1211, 0.0
        %v1224 = vpack.c.bf16 %v1217, %v1216
        %v1225 = vpack.c.bf16 %v1219, %v1218
        %v1226 = vpack.c.bf16 %v1221, %v1220
        %v1227 = vpack.c.bf16 %v1223, %v1222
        %s1228 = scalar_lea.vmem [#allocation7], 32
        %v1229 = vld [vmem:[%s1228] sm:$0xf]
        %v1230 = vld [vmem:[%s1228 + $0x4] sm:$0xf]
        %v1231 = vld [vmem:[%s1228 + $0x8] sm:$0xf]
        %v1232 = vld [vmem:[%s1228 + $0xc] sm:$0xf]
        %v1237 = vunpack.c.l.b16 %v1229
        %v1238 = vunpack.c.l.b16 %v1230
        %v1239 = vunpack.c.l.b16 %v1231
        %v1240 = vunpack.c.l.b16 %v1232
        %v1241 = vpack.c.b16 %v1238, %v1237
        %v1242 = vpack.c.b16 %v1240, %v1239
        %v1246 = vsel %vm997, %v1224, 0
        %v1249 = vsel %vm997, %v1225, 0
        %v1252 = vsel %vm997, %v1226, 0
        %v1255 = vsel %vm997, %v1227, 0
        %1257 = vmatprep.subr.bf16.mxu0 0
        %1258 = vmatpush1.bf16.msra.mxu0 %v1241
        %1259 = vmatprep.subr.bf16.mxu0 0
        %1260 = vmatpush1.bf16.msra.mxu0 %v1242
        %1261 = vmatprep.subr.bf16.mxu0 0
        %1262 = vmatpush1.bf16.msra.mxu0 0
        %1263 = vmatprep.subr.bf16.mxu0 0
        %1264 = vmatpush1.bf16.msra.mxu0 0
        %1265 = vmatprep.subr.bf16.mxu0 0
        %1266 = vmatpush1.bf16.msra.mxu0 0
        %1267 = vmatprep.subr.bf16.mxu0 0
        %1268 = vmatpush1.bf16.msra.mxu0 0
        %1269 = vmatprep.subr.bf16.mxu0 0
        %1270 = vmatpush1.bf16.msra.mxu0 0
        %1271 = vmatprep.subr.bf16.mxu0 0
        %1272 = vmatpush1.bf16.msra.mxu0 0
        %1273 = vmatprep.subr.bf16.mxu0 0
        %1274 = vmatpush1.bf16.msra.mxu0 0
        %1275 = vmatprep.subr.bf16.mxu0 0
        %1276 = vmatpush1.bf16.msra.mxu0 0
        %1277 = vmatprep.subr.bf16.mxu0 0
        %1278 = vmatpush1.bf16.msra.mxu0 0
        %1279 = vmatprep.subr.bf16.mxu0 0
        %1280 = vmatpush1.bf16.msra.mxu0 0
        %1281 = vmatprep.subr.bf16.mxu0 0
        %1282 = vmatpush1.bf16.msra.mxu0 0
        %1283 = vmatprep.subr.bf16.mxu0 0
        %1284 = vmatpush1.bf16.msra.mxu0 0
        %1285 = vmatprep.subr.bf16.mxu0 0
        %1286 = vmatpush1.bf16.msra.mxu0 0
        %1287 = vmatprep.subr.bf16.mxu0 0
        %1288 = vmatpush1.bf16.msra.mxu0 0
        %1289 = vmatprep.mubr.bf16.mxu0 0
        %1290 = vmatmul.mubr.bf16.gmra.mrb[0].mxu0 %v1246
        %v1291 = vpop.f32.mrb[0].mxu0
        %v1292 = vadd.f32 0.0, %v1291
        %v1293 = vpop.f32.mrb[0].mxu0
        %v1294 = vpop.f32.mrb[0].mxu0
        %v1295 = vadd.f32 0.0, %v1294
        %v1296 = vpop.f32.mrb[0].mxu0
        %1297 = vmatprep.mubr.bf16.mxu0 0
        %1298 = vmatmul.mubr.bf16.gmra.mrb[0].mxu0 %v1249
        %v1299 = vpop.f32.mrb[0].mxu0
        %v1300 = vadd.f32 0.0, %v1299
        %v1301 = vpop.f32.mrb[0].mxu0
        %v1302 = vpop.f32.mrb[0].mxu0
        %v1303 = vadd.f32 0.0, %v1302
        %v1304 = vpop.f32.mrb[0].mxu0
        %1305 = vmatprep.mubr.bf16.mxu0 0
        %1306 = vmatmul.mubr.bf16.gmra.mrb[0].mxu0 %v1252
        %v1307 = vpop.f32.mrb[0].mxu0
        %v1308 = vadd.f32 0.0, %v1307
        %v1309 = vpop.f32.mrb[0].mxu0
        %v1310 = vpop.f32.mrb[0].mxu0
        %v1311 = vadd.f32 0.0, %v1310
        %v1312 = vpop.f32.mrb[0].mxu0
        %1313 = vmatprep.mubr.bf16.mxu0 0
        %1314 = vmatmul.mubr.bf16.gmra.mrb[0].mxu0 %v1255
        %v1315 = vpop.f32.mrb[0].mxu0
        %v1316 = vadd.f32 0.0, %v1315
        %v1317 = vpop.f32.mrb[0].mxu0
        %v1318 = vpop.f32.mrb[0].mxu0
        %v1319 = vadd.f32 0.0, %v1318
        %v1320 = vpop.f32.mrb[0].mxu0
        %1321 = vdwg.mxu0
        %v1322 = vadd.f32 %v1187, %v1292
        %v1323 = vadd.f32 %v1188, %v1295
        %v1324 = vadd.f32 %v1189, %v1300
        %v1325 = vadd.f32 %v1190, %v1303
        %v1326 = vadd.f32 %v1191, %v1308
        %v1327 = vadd.f32 %v1192, %v1311
        %v1328 = vadd.f32 %v1193, %v1316
        %v1329 = vadd.f32 %v1194, %v1319
        %v1330 = vand.u32 2147483647, %v1322
        %v1331 = vand.u32 2147483647, %v1323
        %v1332 = vand.u32 2147483647, %v1324
        %v1333 = vand.u32 2147483647, %v1325
        %v1334 = vand.u32 2147483647, %v1326
        %v1335 = vand.u32 2147483647, %v1327
        %v1336 = vand.u32 2147483647, %v1328
        %v1337 = vand.u32 2147483647, %v1329
        %v1338 = vsub.f32 0.0, %v1330
        %v1339 = vsub.f32 0.0, %v1331
        %v1340 = vsub.f32 0.0, %v1332
        %v1341 = vsub.f32 0.0, %v1333
        %v1342 = vsub.f32 0.0, %v1334
        %v1343 = vsub.f32 0.0, %v1335
        %v1344 = vsub.f32 0.0, %v1336
        %v1345 = vsub.f32 0.0, %v1337
        %v1346 = vmul.f32 %v1338, 1.442695
        %v1347 = vpow.pop %v1346
        %v1348 = vmul.f32 %v1339, 1.442695
        %v1349 = vpow.pop %v1348
        %v1350 = vmul.f32 %v1340, 1.442695
        %v1351 = vpow.pop %v1350
        %v1352 = vmul.f32 %v1341, 1.442695
        %v1353 = vpow.pop %v1352
        %v1354 = vmul.f32 %v1342, 1.442695
        %v1355 = vpow.pop %v1354
        %v1356 = vmul.f32 %v1343, 1.442695
        %v1357 = vpow.pop %v1356
        %v1358 = vmul.f32 %v1344, 1.442695
        %v1359 = vpow.pop %v1358
        %v1360 = vmul.f32 %v1345, 1.442695
        %v1361 = vpow.pop %v1360
        %v1362 = vadd.f32 %v1347, 1.0
        %v1363 = vadd.f32 %v1349, 1.0
        %v1364 = vadd.f32 %v1351, 1.0
        %v1365 = vadd.f32 %v1353, 1.0
        %v1366 = vadd.f32 %v1355, 1.0
        %v1367 = vadd.f32 %v1357, 1.0
        %v1368 = vadd.f32 %v1359, 1.0
        %v1369 = vadd.f32 %v1361, 1.0
        %v1370 = vrcp.pop %v1362
        %v1371 = vmul.f32 1.0, %v1370
        %v1372 = vrcp.pop %v1363
        %v1373 = vmul.f32 1.0, %v1372
        %v1374 = vrcp.pop %v1364
        %v1375 = vmul.f32 1.0, %v1374
        %v1376 = vrcp.pop %v1365
        %v1377 = vmul.f32 1.0, %v1376
        %v1378 = vrcp.pop %v1366
        %v1379 = vmul.f32 1.0, %v1378
        %v1380 = vrcp.pop %v1367
        %v1381 = vmul.f32 1.0, %v1380
        %v1382 = vrcp.pop %v1368
        %v1383 = vmul.f32 1.0, %v1382
        %v1384 = vrcp.pop %v1369
        %v1385 = vmul.f32 1.0, %v1384
        %vm1386 = vcmp.ge.f32.partialorder %v1322, 0.0
        %vm1387 = vcmp.ge.f32.partialorder %v1323, 0.0
        %vm1388 = vcmp.ge.f32.partialorder %v1324, 0.0
        %vm1389 = vcmp.ge.f32.partialorder %v1325, 0.0
        %vm1390 = vcmp.ge.f32.partialorder %v1326, 0.0
        %vm1391 = vcmp.ge.f32.partialorder %v1327, 0.0
        %vm1392 = vcmp.ge.f32.partialorder %v1328, 0.0
        %vm1393 = vcmp.ge.f32.partialorder %v1329, 0.0
        %v1394 = vmul.f32 %v1347, %v1371
        %v1395 = vmul.f32 %v1349, %v1373
        %v1396 = vmul.f32 %v1351, %v1375
        %v1397 = vmul.f32 %v1353, %v1377
        %v1398 = vmul.f32 %v1355, %v1379
        %v1399 = vmul.f32 %v1357, %v1381
        %v1400 = vmul.f32 %v1359, %v1383
        %v1401 = vmul.f32 %v1361, %v1385
        %v1402 = vsel %vm1386, %v1371, %v1394
        %v1403 = vsel %vm1387, %v1373, %v1395
        %v1404 = vsel %vm1388, %v1375, %v1396
        %v1405 = vsel %vm1389, %v1377, %v1397
        %v1406 = vsel %vm1390, %v1379, %v1398
        %v1407 = vsel %vm1391, %v1381, %v1399
        %v1408 = vsel %vm1392, %v1383, %v1400
        %v1409 = vsel %vm1393, %v1385, %v1401
        %1418 = vrot.lane.b32.xlu0 %v1402, 112
        %v1419 = vpop.permute.xlu0 %1418
        %1420 = vrot.lane.b32.xlu0 %v1403, 112
        %v1421 = vpop.permute.xlu0 %1420
        %1422 = vrot.lane.b32.xlu0 %v1404, 112
        %v1423 = vpop.permute.xlu0 %1422
        %1424 = vrot.lane.b32.xlu0 %v1405, 112
        %v1425 = vpop.permute.xlu0 %1424
        %1426 = vrot.lane.b32.xlu0 %v1406, 112
        %v1427 = vpop.permute.xlu0 %1426
        %1428 = vrot.lane.b32.xlu0 %v1407, 112
        %v1429 = vpop.permute.xlu0 %1428
        %1430 = vrot.lane.b32.xlu0 %v1408, 112
        %v1431 = vpop.permute.xlu0 %1430
        %1432 = vrot.lane.b32.xlu0 %v1409, 112
        %v1433 = vpop.permute.xlu0 %1432
        %v1442 = vmul.f32 %v1322, %v1419
        %v1443 = vmul.f32 %v1323, %v1421
        %v1444 = vmul.f32 %v1324, %v1423
        %v1445 = vmul.f32 %v1325, %v1425
        %v1446 = vmul.f32 %v1326, %v1427
        %v1447 = vmul.f32 %v1327, %v1429
        %v1448 = vmul.f32 %v1328, %v1431
        %v1449 = vmul.f32 %v1329, %v1433
        %v1450 = vadd.f32 %v465, %v1442
        %v1451 = vadd.f32 %v466, %v1443
        %v1452 = vadd.f32 %v467, %v1444
        %v1453 = vadd.f32 %v468, %v1445
        %v1454 = vadd.f32 %v469, %v1446
        %v1455 = vadd.f32 %v470, %v1447
        %v1456 = vadd.f32 %v471, %v1448
        %v1457 = vadd.f32 %v472, %v1449
        %vm1458 = vcmp.gt.f32.partialorder %v1450, 0.0
        %vm1459 = vcmp.gt.f32.partialorder %v1451, 0.0
        %vm1460 = vcmp.gt.f32.partialorder %v1452, 0.0
        %vm1461 = vcmp.gt.f32.partialorder %v1453, 0.0
        %vm1462 = vcmp.gt.f32.partialorder %v1454, 0.0
        %vm1463 = vcmp.gt.f32.partialorder %v1455, 0.0
        %vm1464 = vcmp.gt.f32.partialorder %v1456, 0.0
        %vm1465 = vcmp.gt.f32.partialorder %v1457, 0.0
        %v1466 = vmul.f32 %v1450, 1.442695
        %v1467 = vpow.pop %v1466
        %v1468 = vmul.f32 %v1451, 1.442695
        %v1469 = vpow.pop %v1468
        %v1470 = vmul.f32 %v1452, 1.442695
        %v1471 = vpow.pop %v1470
        %v1472 = vmul.f32 %v1453, 1.442695
        %v1473 = vpow.pop %v1472
        %v1474 = vmul.f32 %v1454, 1.442695
        %v1475 = vpow.pop %v1474
        %v1476 = vmul.f32 %v1455, 1.442695
        %v1477 = vpow.pop %v1476
        %v1478 = vmul.f32 %v1456, 1.442695
        %v1479 = vpow.pop %v1478
        %v1480 = vmul.f32 %v1457, 1.442695
        %v1481 = vpow.pop %v1480
        %v1482 = vsub.f32 %v1467, 1.0
        %v1483 = vsub.f32 %v1469, 1.0
        %v1484 = vsub.f32 %v1471, 1.0
        %v1485 = vsub.f32 %v1473, 1.0
        %v1486 = vsub.f32 %v1475, 1.0
        %v1487 = vsub.f32 %v1477, 1.0
        %v1488 = vsub.f32 %v1479, 1.0
        %v1489 = vsub.f32 %v1481, 1.0
        %v1490 = vsel %vm1458, %v1450, %v1482
        %v1491 = vsel %vm1459, %v1451, %v1483
        %v1492 = vsel %vm1460, %v1452, %v1484
        %v1493 = vsel %vm1461, %v1453, %v1485
        %v1494 = vsel %vm1462, %v1454, %v1486
        %v1495 = vsel %vm1463, %v1455, %v1487
        %v1496 = vsel %vm1464, %v1456, %v1488
        %v1497 = vsel %vm1465, %v1457, %v1489
        %s1498 = scalar_lea.vmem %s2, 1
        %v1499 = vld [vmem:[%s1498] sm:$0x1]
        %v1500 = vrot.slane %v1490, 5
        %v1501 = vrot.slane %v1491, 5
        %v1502 = vrot.slane %v1492, 5
        %v1503 = vrot.slane %v1493, 5
        %v1504 = vrot.slane %v1494, 5
        %v1505 = vrot.slane %v1495, 5
        %v1506 = vrot.slane %v1496, 5
        %v1507 = vrot.slane %v1497, 5
        %v1508 = vsel %vm557, %v1506, %v1507
        %v1509 = vsel %vm557, %v1505, %v1506
        %v1510 = vsel %vm557, %v1504, %v1505
        %v1511 = vsel %vm557, %v1503, %v1504
        %v1512 = vsel %vm557, %v1502, %v1503
        %v1513 = vsel %vm557, %v1501, %v1502
        %v1514 = vsel %vm557, %v1500, %v1501
        %v1515 = vsel %vm557, %v1507, %v1500
        %v1516 = vsel %vm568, %v1515, 0.0
        %v1517 = vsel %vm569, %v1514, 0.0
        %v1518 = vsel %vm568, %v1513, 0.0
        %v1519 = vsel %vm569, %v1512, 0.0
        %v1520 = vsel %vm568, %v1511, 0.0
        %v1521 = vsel %vm569, %v1510, 0.0
        %v1522 = vsel %vm568, %v1509, 0.0
        %v1523 = vsel %vm569, %v1508, 0.0
        %v1524 = vpack.c.bf16 %v1517, %v1516
        %v1525 = vpack.c.bf16 %v1519, %v1518
        %v1526 = vpack.c.bf16 %v1521, %v1520
        %v1527 = vpack.c.bf16 %v1523, %v1522
        %s1528 = scalar_lea.vmem [#allocation5], 24
        %v1529 = vld [vmem:[%s1528] sm:$0xf]
        %v1530 = vld [vmem:[%s1528 + $0x4] sm:$0xf]
        %v1533 = vunpack.c.l.b16 %v1529
        %v1534 = vunpack.c.l.b16 %v1530
        %v1535 = vpack.c.b16 %v1534, %v1533
        %v1538 = vsel %vm590, %v1524, 0
        %v1541 = vsel %vm590, %v1525, 0
        %v1544 = vsel %vm590, %v1526, 0
        %v1547 = vsel %vm590, %v1527, 0
        %1549 = vmatprep.subr.bf16.mxu0 0
        %1550 = vmatpush1.bf16.msra.mxu0 %v1535
        %1551 = vmatprep.subr.bf16.mxu0 0
        %1552 = vmatpush1.bf16.msra.mxu0 0
        %1553 = vmatprep.subr.bf16.mxu0 0
        %1554 = vmatpush1.bf16.msra.mxu0 0
        %1555 = vmatprep.subr.bf16.mxu0 0
        %1556 = vmatpush1.bf16.msra.mxu0 0
        %1557 = vmatprep.subr.bf16.mxu0 0
        %1558 = vmatpush1.bf16.msra.mxu0 0
        %1559 = vmatprep.subr.bf16.mxu0 0
        %1560 = vmatpush1.bf16.msra.mxu0 0
        %1561 = vmatprep.subr.bf16.mxu0 0
        %1562 = vmatpush1.bf16.msra.mxu0 0
        %1563 = vmatprep.subr.bf16.mxu0 0
        %1564 = vmatpush1.bf16.msra.mxu0 0
        %1565 = vmatprep.subr.bf16.mxu0 0
        %1566 = vmatpush1.bf16.msra.mxu0 0
        %1567 = vmatprep.subr.bf16.mxu0 0
        %1568 = vmatpush1.bf16.msra.mxu0 0
        %1569 = vmatprep.subr.bf16.mxu0 0
        %1570 = vmatpush1.bf16.msra.mxu0 0
        %1571 = vmatprep.subr.bf16.mxu0 0
        %1572 = vmatpush1.bf16.msra.mxu0 0
        %1573 = vmatprep.subr.bf16.mxu0 0
        %1574 = vmatpush1.bf16.msra.mxu0 0
        %1575 = vmatprep.subr.bf16.mxu0 0
        %1576 = vmatpush1.bf16.msra.mxu0 0
        %1577 = vmatprep.subr.bf16.mxu0 0
        %1578 = vmatpush1.bf16.msra.mxu0 0
        %1579 = vmatprep.subr.bf16.mxu0 0
        %1580 = vmatpush1.bf16.msra.mxu0 0
        %1581 = vmatprep.mubr.bf16.mxu0 0
        %1582 = vmatmul.mubr.bf16.gmra.mrb[0].mxu0 %v1538
        %v1583 = vpop.f32.mrb[0].mxu0
        %v1584 = vadd.f32 0.0, %v1583
        %v1585 = vpop.f32.mrb[0].mxu0
        %v1586 = vpop.f32.mrb[0].mxu0
        %v1587 = vadd.f32 0.0, %v1586
        %v1588 = vpop.f32.mrb[0].mxu0
        %1589 = vmatprep.mubr.bf16.mxu0 0
        %1590 = vmatmul.mubr.bf16.gmra.mrb[0].mxu0 %v1541
        %v1591 = vpop.f32.mrb[0].mxu0
        %v1592 = vadd.f32 0.0, %v1591
        %v1593 = vpop.f32.mrb[0].mxu0
        %v1594 = vpop.f32.mrb[0].mxu0
        %v1595 = vadd.f32 0.0, %v1594
        %v1596 = vpop.f32.mrb[0].mxu0
        %1597 = vmatprep.mubr.bf16.mxu0 0
        %1598 = vmatmul.mubr.bf16.gmra.mrb[0].mxu0 %v1544
        %v1599 = vpop.f32.mrb[0].mxu0
        %v1600 = vadd.f32 0.0, %v1599
        %v1601 = vpop.f32.mrb[0].mxu0
        %v1602 = vpop.f32.mrb[0].mxu0
        %v1603 = vadd.f32 0.0, %v1602
        %v1604 = vpop.f32.mrb[0].mxu0
        %1605 = vmatprep.mubr.bf16.mxu0 0
        %1606 = vmatmul.mubr.bf16.gmra.mrb[0].mxu0 %v1547
        %v1607 = vpop.f32.mrb[0].mxu0
        %v1608 = vadd.f32 0.0, %v1607
        %v1609 = vpop.f32.mrb[0].mxu0
        %v1610 = vpop.f32.mrb[0].mxu0
        %v1611 = vadd.f32 0.0, %v1610
        %v1612 = vpop.f32.mrb[0].mxu0
        %1613 = vdwg.mxu0
        %v1615 = vlaneseq
        %v1616 = vshrl.u32 %v1615, 7
        %v1617 = vsub.s32 0, %v1616
        %v1618 = vrot.slane %v1499, %v1617
        %v1620 = vadd.f32 %v1618, %v1584
        %v1621 = vadd.f32 %v1618, %v1587
        %v1622 = vadd.f32 %v1618, %v1592
        %v1623 = vadd.f32 %v1618, %v1595
        %v1624 = vadd.f32 %v1618, %v1600
        %v1625 = vadd.f32 %v1618, %v1603
        %v1626 = vadd.f32 %v1618, %v1608
        %v1627 = vadd.f32 %v1618, %v1611
        %v1628 = vpack.c.bf16 %v1491, %v1490
        %v1629 = vpack.c.bf16 %v1493, %v1492
        %v1630 = vpack.c.bf16 %v1495, %v1494
        %v1631 = vpack.c.bf16 %v1497, %v1496
        %s1632 = scalar_lea.vmem [#allocation5], 32
        %v1633 = vld [vmem:[%s1632] sm:$0xf]
        %v1634 = vld [vmem:[%s1632 + $0x4] sm:$0xf]
        %v1637 = vunpack.c.l.b16 %v1633
        %v1638 = vunpack.c.l.b16 %v1634
        %v1639 = vpack.c.b16 %v1638, %v1637
        %v1642 = vsel %vm590, %v1628, 0
        %v1645 = vsel %vm590, %v1629, 0
        %v1648 = vsel %vm590, %v1630, 0
        %v1651 = vsel %vm590, %v1631, 0
        %1653 = vmatprep.subr.bf16.mxu0 0
        %1654 = vmatpush1.bf16.msra.mxu0 %v1639
        %1655 = vmatprep.subr.bf16.mxu0 0
        %1656 = vmatpush1.bf16.msra.mxu0 0
        %1657 = vmatprep.subr.bf16.mxu0 0
        %1658 = vmatpush1.bf16.msra.mxu0 0
        %1659 = vmatprep.subr.bf16.mxu0 0
        %1660 = vmatpush1.bf16.msra.mxu0 0
        %1661 = vmatprep.subr.bf16.mxu0 0
        %1662 = vmatpush1.bf16.msra.mxu0 0
        %1663 = vmatprep.subr.bf16.mxu0 0
        %1664 = vmatpush1.bf16.msra.mxu0 0
        %1665 = vmatprep.subr.bf16.mxu0 0
        %1666 = vmatpush1.bf16.msra.mxu0 0
        %1667 = vmatprep.subr.bf16.mxu0 0
        %1668 = vmatpush1.bf16.msra.mxu0 0
        %1669 = vmatprep.subr.bf16.mxu0 0
        %1670 = vmatpush1.bf16.msra.mxu0 0
        %1671 = vmatprep.subr.bf16.mxu0 0
        %1672 = vmatpush1.bf16.msra.mxu0 0
        %1673 = vmatprep.subr.bf16.mxu0 0
        %1674 = vmatpush1.bf16.msra.mxu0 0
        %1675 = vmatprep.subr.bf16.mxu0 0
        %1676 = vmatpush1.bf16.msra.mxu0 0
        %1677 = vmatprep.subr.bf16.mxu0 0
        %1678 = vmatpush1.bf16.msra.mxu0 0
        %1679 = vmatprep.subr.bf16.mxu0 0
        %1680 = vmatpush1.bf16.msra.mxu0 0
        %1681 = vmatprep.subr.bf16.mxu0 0
        %1682 = vmatpush1.bf16.msra.mxu0 0
        %1683 = vmatprep.subr.bf16.mxu0 0
        %1684 = vmatpush1.bf16.msra.mxu0 0
        %1685 = vmatprep.mubr.bf16.mxu0 0
        %1686 = vmatmul.mubr.bf16.gmra.mrb[0].mxu0 %v1642
        %v1687 = vpop.f32.mrb[0].mxu0
        %v1688 = vadd.f32 0.0, %v1687
        %v1689 = vpop.f32.mrb[0].mxu0
        %v1690 = vpop.f32.mrb[0].mxu0
        %v1691 = vadd.f32 0.0, %v1690
        %v1692 = vpop.f32.mrb[0].mxu0
        %1693 = vmatprep.mubr.bf16.mxu0 0
        %1694 = vmatmul.mubr.bf16.gmra.mrb[0].mxu0 %v1645
        %v1695 = vpop.f32.mrb[0].mxu0
        %v1696 = vadd.f32 0.0, %v1695
        %v1697 = vpop.f32.mrb[0].mxu0
        %v1698 = vpop.f32.mrb[0].mxu0
        %v1699 = vadd.f32 0.0, %v1698
        %v1700 = vpop.f32.mrb[0].mxu0
        %1701 = vmatprep.mubr.bf16.mxu0 0
        %1702 = vmatmul.mubr.bf16.gmra.mrb[0].mxu0 %v1648
        %v1703 = vpop.f32.mrb[0].mxu0
        %v1704 = vadd.f32 0.0, %v1703
        %v1705 = vpop.f32.mrb[0].mxu0
        %v1706 = vpop.f32.mrb[0].mxu0
        %v1707 = vadd.f32 0.0, %v1706
        %v1708 = vpop.f32.mrb[0].mxu0
        %1709 = vmatprep.mubr.bf16.mxu0 0
        %1710 = vmatmul.mubr.bf16.gmra.mrb[0].mxu0 %v1651
        %v1711 = vpop.f32.mrb[0].mxu0
        %v1712 = vadd.f32 0.0, %v1711
        %v1713 = vpop.f32.mrb[0].mxu0
        %v1714 = vpop.f32.mrb[0].mxu0
        %v1715 = vadd.f32 0.0, %v1714
        %v1716 = vpop.f32.mrb[0].mxu0
        %1717 = vdwg.mxu0
        %v1718 = vadd.f32 %v1620, %v1688
        %v1719 = vadd.f32 %v1621, %v1691
        %v1720 = vadd.f32 %v1622, %v1696
        %v1721 = vadd.f32 %v1623, %v1699
        %v1722 = vadd.f32 %v1624, %v1704
        %v1723 = vadd.f32 %v1625, %v1707
        %v1724 = vadd.f32 %v1626, %v1712
        %v1725 = vadd.f32 %v1627, %v1715
        %v1726 = vrot.slane %v1490, 3
        %v1727 = vrot.slane %v1491, 3
        %v1728 = vrot.slane %v1492, 3
        %v1729 = vrot.slane %v1493, 3
        %v1730 = vrot.slane %v1494, 3
        %v1731 = vrot.slane %v1495, 3
        %v1732 = vrot.slane %v1496, 3
        %v1733 = vrot.slane %v1497, 3
        %v1734 = vsel %vm788, %v1732, %v1733
        %v1735 = vsel %vm788, %v1731, %v1732
        %v1736 = vsel %vm788, %v1730, %v1731
        %v1737 = vsel %vm788, %v1729, %v1730
        %v1738 = vsel %vm788, %v1728, %v1729
        %v1739 = vsel %vm788, %v1727, %v1728
        %v1740 = vsel %vm788, %v1726, %v1727
        %v1741 = vsel %vm788, %v1733, %v1726
        %v1742 = vsel %vm799, %v1740, 0.0
        %v1743 = vsel %vm800, %v1739, 0.0
        %v1744 = vsel %vm799, %v1738, 0.0
        %v1745 = vsel %vm800, %v1737, 0.0
        %v1746 = vsel %vm799, %v1736, 0.0
        %v1747 = vsel %vm800, %v1735, 0.0
        %v1748 = vsel %vm799, %v1734, 0.0
        %v1749 = vsel %vm800, %v1741, 0.0
        %v1750 = vpack.c.bf16 %v1743, %v1742
        %v1751 = vpack.c.bf16 %v1745, %v1744
        %v1752 = vpack.c.bf16 %v1747, %v1746
        %v1753 = vpack.c.bf16 %v1749, %v1748
        %s1754 = scalar_lea.vmem [#allocation5], 40
        %v1755 = vld [vmem:[%s1754] sm:$0xf]
        %v1756 = vld [vmem:[%s1754 + $0x4] sm:$0xf]
        %v1759 = vunpack.c.l.b16 %v1755
        %v1760 = vunpack.c.l.b16 %v1756
        %v1761 = vpack.c.b16 %v1760, %v1759
        %v1764 = vsel %vm590, %v1750, 0
        %v1767 = vsel %vm590, %v1751, 0
        %v1770 = vsel %vm590, %v1752, 0
        %v1773 = vsel %vm590, %v1753, 0
        %1775 = vmatprep.subr.bf16.mxu0 0
        %1776 = vmatpush1.bf16.msra.mxu0 %v1761
        %1777 = vmatprep.subr.bf16.mxu0 0
        %1778 = vmatpush1.bf16.msra.mxu0 0
        %1779 = vmatprep.subr.bf16.mxu0 0
        %1780 = vmatpush1.bf16.msra.mxu0 0
        %1781 = vmatprep.subr.bf16.mxu0 0
        %1782 = vmatpush1.bf16.msra.mxu0 0
        %1783 = vmatprep.subr.bf16.mxu0 0
        %1784 = vmatpush1.bf16.msra.mxu0 0
        %1785 = vmatprep.subr.bf16.mxu0 0
        %1786 = vmatpush1.bf16.msra.mxu0 0
        %1787 = vmatprep.subr.bf16.mxu0 0
        %1788 = vmatpush1.bf16.msra.mxu0 0
        %1789 = vmatprep.subr.bf16.mxu0 0
        %1790 = vmatpush1.bf16.msra.mxu0 0
        %1791 = vmatprep.subr.bf16.mxu0 0
        %1792 = vmatpush1.bf16.msra.mxu0 0
        %1793 = vmatprep.subr.bf16.mxu0 0
        %1794 = vmatpush1.bf16.msra.mxu0 0
        %1795 = vmatprep.subr.bf16.mxu0 0
        %1796 = vmatpush1.bf16.msra.mxu0 0
        %1797 = vmatprep.subr.bf16.mxu0 0
        %1798 = vmatpush1.bf16.msra.mxu0 0
        %1799 = vmatprep.subr.bf16.mxu0 0
        %1800 = vmatpush1.bf16.msra.mxu0 0
        %1801 = vmatprep.subr.bf16.mxu0 0
        %1802 = vmatpush1.bf16.msra.mxu0 0
        %1803 = vmatprep.subr.bf16.mxu0 0
        %1804 = vmatpush1.bf16.msra.mxu0 0
        %1805 = vmatprep.subr.bf16.mxu0 0
        %1806 = vmatpush1.bf16.msra.mxu0 0
        %1807 = vmatprep.mubr.bf16.mxu0 0
        %1808 = vmatmul.mubr.bf16.gmra.mrb[0].mxu0 %v1764
        %v1809 = vpop.f32.mrb[0].mxu0
        %v1810 = vadd.f32 0.0, %v1809
        %v1811 = vpop.f32.mrb[0].mxu0
        %v1812 = vpop.f32.mrb[0].mxu0
        %v1813 = vadd.f32 0.0, %v1812
        %v1814 = vpop.f32.mrb[0].mxu0
        %1815 = vmatprep.mubr.bf16.mxu0 0
        %1816 = vmatmul.mubr.bf16.gmra.mrb[0].mxu0 %v1767
        %v1817 = vpop.f32.mrb[0].mxu0
        %v1818 = vadd.f32 0.0, %v1817
        %v1819 = vpop.f32.mrb[0].mxu0
        %v1820 = vpop.f32.mrb[0].mxu0
        %v1821 = vadd.f32 0.0, %v1820
        %v1822 = vpop.f32.mrb[0].mxu0
        %1823 = vmatprep.mubr.bf16.mxu0 0
        %1824 = vmatmul.mubr.bf16.gmra.mrb[0].mxu0 %v1770
        %v1825 = vpop.f32.mrb[0].mxu0
        %v1826 = vadd.f32 0.0, %v1825
        %v1827 = vpop.f32.mrb[0].mxu0
        %v1828 = vpop.f32.mrb[0].mxu0
        %v1829 = vadd.f32 0.0, %v1828
        %v1830 = vpop.f32.mrb[0].mxu0
        %1831 = vmatprep.mubr.bf16.mxu0 0
        %1832 = vmatmul.mubr.bf16.gmra.mrb[0].mxu0 %v1773
        %v1833 = vpop.f32.mrb[0].mxu0
        %v1834 = vadd.f32 0.0, %v1833
        %v1835 = vpop.f32.mrb[0].mxu0
        %v1836 = vpop.f32.mrb[0].mxu0
        %v1837 = vadd.f32 0.0, %v1836
        %v1838 = vpop.f32.mrb[0].mxu0
        %1839 = vdwg.mxu0
        %v1840 = vadd.f32 %v1718, %v1810
        %v1841 = vadd.f32 %v1719, %v1813
        %v1842 = vadd.f32 %v1720, %v1818
        %v1843 = vadd.f32 %v1721, %v1821
        %v1844 = vadd.f32 %v1722, %v1826
        %v1845 = vadd.f32 %v1723, %v1829
        %v1846 = vadd.f32 %v1724, %v1834
        %v1847 = vadd.f32 %v1725, %v1837
        %vm1848 = vcmp.gt.f32.partialorder %v1840, 0.0
        %vm1849 = vcmp.gt.f32.partialorder %v1841, 0.0
        %vm1850 = vcmp.gt.f32.partialorder %v1842, 0.0
        %vm1851 = vcmp.gt.f32.partialorder %v1843, 0.0
        %vm1852 = vcmp.gt.f32.partialorder %v1844, 0.0
        %vm1853 = vcmp.gt.f32.partialorder %v1845, 0.0
        %vm1854 = vcmp.gt.f32.partialorder %v1846, 0.0
        %vm1855 = vcmp.gt.f32.partialorder %v1847, 0.0
        %v1856 = vmul.f32 %v1840, 1.442695
        %v1857 = vpow.pop %v1856
        %v1858 = vmul.f32 %v1841, 1.442695
        %v1859 = vpow.pop %v1858
        %v1860 = vmul.f32 %v1842, 1.442695
        %v1861 = vpow.pop %v1860
        %v1862 = vmul.f32 %v1843, 1.442695
        %v1863 = vpow.pop %v1862
        %v1864 = vmul.f32 %v1844, 1.442695
        %v1865 = vpow.pop %v1864
        %v1866 = vmul.f32 %v1845, 1.442695
        %v1867 = vpow.pop %v1866
        %v1868 = vmul.f32 %v1846, 1.442695
        %v1869 = vpow.pop %v1868
        %v1870 = vmul.f32 %v1847, 1.442695
        %v1871 = vpow.pop %v1870
        %v1872 = vsub.f32 %v1857, 1.0
        %v1873 = vsub.f32 %v1859, 1.0
        %v1874 = vsub.f32 %v1861, 1.0
        %v1875 = vsub.f32 %v1863, 1.0
        %v1876 = vsub.f32 %v1865, 1.0
        %v1877 = vsub.f32 %v1867, 1.0
        %v1878 = vsub.f32 %v1869, 1.0
        %v1879 = vsub.f32 %v1871, 1.0
        %v1880 = vsel %vm1848, %v1840, %v1872
        %v1881 = vsel %vm1849, %v1841, %v1873
        %v1882 = vsel %vm1850, %v1842, %v1874
        %v1883 = vsel %vm1851, %v1843, %v1875
        %v1884 = vsel %vm1852, %v1844, %v1876
        %v1885 = vsel %vm1853, %v1845, %v1877
        %v1886 = vsel %vm1854, %v1846, %v1878
        %v1887 = vsel %vm1855, %v1847, %v1879
        %s1888 = scalar_lea.vmem [#allocation8], 1
        %v1889 = vld [vmem:[%s1888] sm:$0x1]
        %v1890 = vrot.slane %v1880, 7
        %v1891 = vrot.slane %v1881, 7
        %v1892 = vrot.slane %v1882, 7
        %v1893 = vrot.slane %v1883, 7
        %v1894 = vrot.slane %v1884, 7
        %v1895 = vrot.slane %v1885, 7
        %v1896 = vrot.slane %v1886, 7
        %v1897 = vrot.slane %v1887, 7
        %v1898 = vsel %vm956, %v1896, %v1897
        %v1899 = vsel %vm956, %v1895, %v1896
        %v1900 = vsel %vm956, %v1894, %v1895
        %v1901 = vsel %vm956, %v1893, %v1894
        %v1902 = vsel %vm956, %v1892, %v1893
        %v1903 = vsel %vm956, %v1891, %v1892
        %v1904 = vsel %vm956, %v1890, %v1891
        %v1905 = vsel %vm956, %v1897, %v1890
        %v1906 = vsel %vm967, %v1905, 0.0
        %v1907 = vsel %vm968, %v1904, 0.0
        %v1908 = vsel %vm967, %v1903, 0.0
        %v1909 = vsel %vm968, %v1902, 0.0
        %v1910 = vsel %vm967, %v1901, 0.0
        %v1911 = vsel %vm968, %v1900, 0.0
        %v1912 = vsel %vm967, %v1899, 0.0
        %v1913 = vsel %vm968, %v1898, 0.0
        %v1914 = vpack.c.bf16 %v1907, %v1906
        %v1915 = vpack.c.bf16 %v1909, %v1908
        %v1916 = vpack.c.bf16 %v1911, %v1910
        %v1917 = vpack.c.bf16 %v1913, %v1912
        %s1918 = scalar_lea.vmem [#allocation7], 48
        %v1919 = vld [vmem:[%s1918] sm:$0xf]
        %v1920 = vld [vmem:[%s1918 + $0x4] sm:$0xf]
        %v1921 = vld [vmem:[%s1918 + $0x8] sm:$0xf]
        %v1922 = vld [vmem:[%s1918 + $0xc] sm:$0xf]
        %v1927 = vunpack.c.l.b16 %v1919
        %v1928 = vunpack.c.l.b16 %v1920
        %v1929 = vunpack.c.l.b16 %v1921
        %v1930 = vunpack.c.l.b16 %v1922
        %v1931 = vpack.c.b16 %v1928, %v1927
        %v1932 = vpack.c.b16 %v1930, %v1929
        %v1936 = vsel %vm997, %v1914, 0
        %v1939 = vsel %vm997, %v1915, 0
        %v1942 = vsel %vm997, %v1916, 0
        %v1945 = vsel %vm997, %v1917, 0
        %1947 = vmatprep.subr.bf16.mxu0 0
        %1948 = vmatpush1.bf16.msra.mxu0 %v1931
        %1949 = vmatprep.subr.bf16.mxu0 0
        %1950 = vmatpush1.bf16.msra.mxu0 %v1932
        %1951 = vmatprep.subr.bf16.mxu0 0
        %1952 = vmatpush1.bf16.msra.mxu0 0
        %1953 = vmatprep.subr.bf16.mxu0 0
        %1954 = vmatpush1.bf16.msra.mxu0 0
        %1955 = vmatprep.subr.bf16.mxu0 0
        %1956 = vmatpush1.bf16.msra.mxu0 0
        %1957 = vmatprep.subr.bf16.mxu0 0
        %1958 = vmatpush1.bf16.msra.mxu0 0
        %1959 = vmatprep.subr.bf16.mxu0 0
        %1960 = vmatpush1.bf16.msra.mxu0 0
        %1961 = vmatprep.subr.bf16.mxu0 0
        %1962 = vmatpush1.bf16.msra.mxu0 0
        %1963 = vmatprep.subr.bf16.mxu0 0
        %1964 = vmatpush1.bf16.msra.mxu0 0
        %1965 = vmatprep.subr.bf16.mxu0 0
        %1966 = vmatpush1.bf16.msra.mxu0 0
        %1967 = vmatprep.subr.bf16.mxu0 0
        %1968 = vmatpush1.bf16.msra.mxu0 0
        %1969 = vmatprep.subr.bf16.mxu0 0
        %1970 = vmatpush1.bf16.msra.mxu0 0
        %1971 = vmatprep.subr.bf16.mxu0 0
        %1972 = vmatpush1.bf16.msra.mxu0 0
        %1973 = vmatprep.subr.bf16.mxu0 0
        %1974 = vmatpush1.bf16.msra.mxu0 0
        %1975 = vmatprep.subr.bf16.mxu0 0
        %1976 = vmatpush1.bf16.msra.mxu0 0
        %1977 = vmatprep.subr.bf16.mxu0 0
        %1978 = vmatpush1.bf16.msra.mxu0 0
        %1979 = vmatprep.mubr.bf16.mxu0 0
        %1980 = vmatmul.mubr.bf16.gmra.mrb[0].mxu0 %v1936
        %v1981 = vpop.f32.mrb[0].mxu0
        %v1982 = vadd.f32 0.0, %v1981
        %v1983 = vpop.f32.mrb[0].mxu0
        %v1984 = vpop.f32.mrb[0].mxu0
        %v1985 = vadd.f32 0.0, %v1984
        %v1986 = vpop.f32.mrb[0].mxu0
        %1987 = vmatprep.mubr.bf16.mxu0 0
        %1988 = vmatmul.mubr.bf16.gmra.mrb[0].mxu0 %v1939
        %v1989 = vpop.f32.mrb[0].mxu0
        %v1990 = vadd.f32 0.0, %v1989
        %v1991 = vpop.f32.mrb[0].mxu0
        %v1992 = vpop.f32.mrb[0].mxu0
        %v1993 = vadd.f32 0.0, %v1992
        %v1994 = vpop.f32.mrb[0].mxu0
        %1995 = vmatprep.mubr.bf16.mxu0 0
        %1996 = vmatmul.mubr.bf16.gmra.mrb[0].mxu0 %v1942
        %v1997 = vpop.f32.mrb[0].mxu0
        %v1998 = vadd.f32 0.0, %v1997
        %v1999 = vpop.f32.mrb[0].mxu0
        %v2000 = vpop.f32.mrb[0].mxu0
        %v2001 = vadd.f32 0.0, %v2000
        %v2002 = vpop.f32.mrb[0].mxu0
        %2003 = vmatprep.mubr.bf16.mxu0 0
        %2004 = vmatmul.mubr.bf16.gmra.mrb[0].mxu0 %v1945
        %v2005 = vpop.f32.mrb[0].mxu0
        %v2006 = vadd.f32 0.0, %v2005
        %v2007 = vpop.f32.mrb[0].mxu0
        %v2008 = vpop.f32.mrb[0].mxu0
        %v2009 = vadd.f32 0.0, %v2008
        %v2010 = vpop.f32.mrb[0].mxu0
        %2011 = vdwg.mxu0
        %v2013 = vlaneseq
        %v2014 = vshrl.u32 %v2013, 7
        %v2015 = vsub.s32 0, %v2014
        %v2016 = vrot.slane %v1889, %v2015
        %v2018 = vadd.f32 %v2016, %v1982
        %v2019 = vadd.f32 %v2016, %v1985
        %v2020 = vadd.f32 %v2016, %v1990
        %v2021 = vadd.f32 %v2016, %v1993
        %v2022 = vadd.f32 %v2016, %v1998
        %v2023 = vadd.f32 %v2016, %v2001
        %v2024 = vadd.f32 %v2016, %v2006
        %v2025 = vadd.f32 %v2016, %v2009
        %v2026 = vpack.c.bf16 %v1881, %v1880
        %v2027 = vpack.c.bf16 %v1883, %v1882
        %v2028 = vpack.c.bf16 %v1885, %v1884
        %v2029 = vpack.c.bf16 %v1887, %v1886
        %s2030 = scalar_lea.vmem [#allocation7], 64
        %v2031 = vld [vmem:[%s2030] sm:$0xf]
        %v2032 = vld [vmem:[%s2030 + $0x4] sm:$0xf]
        %v2033 = vld [vmem:[%s2030 + $0x8] sm:$0xf]
        %v2034 = vld [vmem:[%s2030 + $0xc] sm:$0xf]
        %v2039 = vunpack.c.l.b16 %v2031
        %v2040 = vunpack.c.l.b16 %v2032
        %v2041 = vunpack.c.l.b16 %v2033
        %v2042 = vunpack.c.l.b16 %v2034
        %v2043 = vpack.c.b16 %v2040, %v2039
        %v2044 = vpack.c.b16 %v2042, %v2041
        %v2048 = vsel %vm997, %v2026, 0
        %v2051 = vsel %vm997, %v2027, 0
        %v2054 = vsel %vm997, %v2028, 0
        %v2057 = vsel %vm997, %v2029, 0
        %2059 = vmatprep.subr.bf16.mxu0 0
        %2060 = vmatpush1.bf16.msra.mxu0 %v2043
        %2061 = vmatprep.subr.bf16.mxu0 0
        %2062 = vmatpush1.bf16.msra.mxu0 %v2044
        %2063 = vmatprep.subr.bf16.mxu0 0
        %2064 = vmatpush1.bf16.msra.mxu0 0
        %2065 = vmatprep.subr.bf16.mxu0 0
        %2066 = vmatpush1.bf16.msra.mxu0 0
        %2067 = vmatprep.subr.bf16.mxu0 0
        %2068 = vmatpush1.bf16.msra.mxu0 0
        %2069 = vmatprep.subr.bf16.mxu0 0
        %2070 = vmatpush1.bf16.msra.mxu0 0
        %2071 = vmatprep.subr.bf16.mxu0 0
        %2072 = vmatpush1.bf16.msra.mxu0 0
        %2073 = vmatprep.subr.bf16.mxu0 0
        %2074 = vmatpush1.bf16.msra.mxu0 0
        %2075 = vmatprep.subr.bf16.mxu0 0
        %2076 = vmatpush1.bf16.msra.mxu0 0
        %2077 = vmatprep.subr.bf16.mxu0 0
        %2078 = vmatpush1.bf16.msra.mxu0 0
        %2079 = vmatprep.subr.bf16.mxu0 0
        %2080 = vmatpush1.bf16.msra.mxu0 0
        %2081 = vmatprep.subr.bf16.mxu0 0
        %2082 = vmatpush1.bf16.msra.mxu0 0
        %2083 = vmatprep.subr.bf16.mxu0 0
        %2084 = vmatpush1.bf16.msra.mxu0 0
        %2085 = vmatprep.subr.bf16.mxu0 0
        %2086 = vmatpush1.bf16.msra.mxu0 0
        %2087 = vmatprep.subr.bf16.mxu0 0
        %2088 = vmatpush1.bf16.msra.mxu0 0
        %2089 = vmatprep.subr.bf16.mxu0 0
        %2090 = vmatpush1.bf16.msra.mxu0 0
        %2091 = vmatprep.mubr.bf16.mxu0 0
        %2092 = vmatmul.mubr.bf16.gmra.mrb[0].mxu0 %v2048
        %v2093 = vpop.f32.mrb[0].mxu0
        %v2094 = vadd.f32 0.0, %v2093
        %v2095 = vpop.f32.mrb[0].mxu0
        %v2096 = vpop.f32.mrb[0].mxu0
        %v2097 = vadd.f32 0.0, %v2096
        %v2098 = vpop.f32.mrb[0].mxu0
        %2099 = vmatprep.mubr.bf16.mxu0 0
        %2100 = vmatmul.mubr.bf16.gmra.mrb[0].mxu0 %v2051
        %v2101 = vpop.f32.mrb[0].mxu0
        %v2102 = vadd.f32 0.0, %v2101
        %v2103 = vpop.f32.mrb[0].mxu0
        %v2104 = vpop.f32.mrb[0].mxu0
        %v2105 = vadd.f32 0.0, %v2104
        %v2106 = vpop.f32.mrb[0].mxu0
        %2107 = vmatprep.mubr.bf16.mxu0 0
        %2108 = vmatmul.mubr.bf16.gmra.mrb[0].mxu0 %v2054
        %v2109 = vpop.f32.mrb[0].mxu0
        %v2110 = vadd.f32 0.0, %v2109
        %v2111 = vpop.f32.mrb[0].mxu0
        %v2112 = vpop.f32.mrb[0].mxu0
        %v2113 = vadd.f32 0.0, %v2112
        %v2114 = vpop.f32.mrb[0].mxu0
        %2115 = vmatprep.mubr.bf16.mxu0 0
        %2116 = vmatmul.mubr.bf16.gmra.mrb[0].mxu0 %v2057
        %v2117 = vpop.f32.mrb[0].mxu0
        %v2118 = vadd.f32 0.0, %v2117
        %v2119 = vpop.f32.mrb[0].mxu0
        %v2120 = vpop.f32.mrb[0].mxu0
        %v2121 = vadd.f32 0.0, %v2120
        %v2122 = vpop.f32.mrb[0].mxu0
        %2123 = vdwg.mxu0
        %v2124 = vadd.f32 %v2018, %v2094
        %v2125 = vadd.f32 %v2019, %v2097
        %v2126 = vadd.f32 %v2020, %v2102
        %v2127 = vadd.f32 %v2021, %v2105
        %v2128 = vadd.f32 %v2022, %v2110
        %v2129 = vadd.f32 %v2023, %v2113
        %v2130 = vadd.f32 %v2024, %v2118
        %v2131 = vadd.f32 %v2025, %v2121
        %v2132 = vrot.slane %v1880, 1
        %v2133 = vrot.slane %v1881, 1
        %v2134 = vrot.slane %v1882, 1
        %v2135 = vrot.slane %v1883, 1
        %v2136 = vrot.slane %v1884, 1
        %v2137 = vrot.slane %v1885, 1
        %v2138 = vrot.slane %v1886, 1
        %v2139 = vrot.slane %v1887, 1
        %v2140 = vsel %vm1203, %v2138, %v2139
        %v2141 = vsel %vm1203, %v2137, %v2138
        %v2142 = vsel %vm1203, %v2136, %v2137
        %v2143 = vsel %vm1203, %v2135, %v2136
        %v2144 = vsel %vm1203, %v2134, %v2135
        %v2145 = vsel %vm1203, %v2133, %v2134
        %v2146 = vsel %vm1203, %v2132, %v2133
        %v2147 = vsel %vm1203, %v2139, %v2132
        %v2148 = vsel %vm1214, %v2146, 0.0
        %v2149 = vsel %vm1215, %v2145, 0.0
        %v2150 = vsel %vm1214, %v2144, 0.0
        %v2151 = vsel %vm1215, %v2143, 0.0
        %v2152 = vsel %vm1214, %v2142, 0.0
        %v2153 = vsel %vm1215, %v2141, 0.0
        %v2154 = vsel %vm1214, %v2140, 0.0
        %v2155 = vsel %vm1215, %v2147, 0.0
        %v2156 = vpack.c.bf16 %v2149, %v2148
        %v2157 = vpack.c.bf16 %v2151, %v2150
        %v2158 = vpack.c.bf16 %v2153, %v2152
        %v2159 = vpack.c.bf16 %v2155, %v2154
        %s2160 = scalar_lea.vmem [#allocation7], 80
        %v2161 = vld [vmem:[%s2160] sm:$0xf]
        %v2162 = vld [vmem:[%s2160 + $0x4] sm:$0xf]
        %v2163 = vld [vmem:[%s2160 + $0x8] sm:$0xf]
        %v2164 = vld [vmem:[%s2160 + $0xc] sm:$0xf]
        %v2169 = vunpack.c.l.b16 %v2161
        %v2170 = vunpack.c.l.b16 %v2162
        %v2171 = vunpack.c.l.b16 %v2163
        %v2172 = vunpack.c.l.b16 %v2164
        %v2173 = vpack.c.b16 %v2170, %v2169
        %v2174 = vpack.c.b16 %v2172, %v2171
        %v2178 = vsel %vm997, %v2156, 0
        %v2181 = vsel %vm997, %v2157, 0
        %v2184 = vsel %vm997, %v2158, 0
        %v2187 = vsel %vm997, %v2159, 0
        %2189 = vmatprep.subr.bf16.mxu0 0
        %2190 = vmatpush1.bf16.msra.mxu0 %v2173
        %2191 = vmatprep.subr.bf16.mxu0 0
        %2192 = vmatpush1.bf16.msra.mxu0 %v2174
        %2193 = vmatprep.subr.bf16.mxu0 0
        %2194 = vmatpush1.bf16.msra.mxu0 0
        %2195 = vmatprep.subr.bf16.mxu0 0
        %2196 = vmatpush1.bf16.msra.mxu0 0
        %2197 = vmatprep.subr.bf16.mxu0 0
        %2198 = vmatpush1.bf16.msra.mxu0 0
        %2199 = vmatprep.subr.bf16.mxu0 0
        %2200 = vmatpush1.bf16.msra.mxu0 0
        %2201 = vmatprep.subr.bf16.mxu0 0
        %2202 = vmatpush1.bf16.msra.mxu0 0
        %2203 = vmatprep.subr.bf16.mxu0 0
        %2204 = vmatpush1.bf16.msra.mxu0 0
        %2205 = vmatprep.subr.bf16.mxu0 0
        %2206 = vmatpush1.bf16.msra.mxu0 0
        %2207 = vmatprep.subr.bf16.mxu0 0
        %2208 = vmatpush1.bf16.msra.mxu0 0
        %2209 = vmatprep.subr.bf16.mxu0 0
        %2210 = vmatpush1.bf16.msra.mxu0 0
        %2211 = vmatprep.subr.bf16.mxu0 0
        %2212 = vmatpush1.bf16.msra.mxu0 0
        %2213 = vmatprep.subr.bf16.mxu0 0
        %2214 = vmatpush1.bf16.msra.mxu0 0
        %2215 = vmatprep.subr.bf16.mxu0 0
        %2216 = vmatpush1.bf16.msra.mxu0 0
        %2217 = vmatprep.subr.bf16.mxu0 0
        %2218 = vmatpush1.bf16.msra.mxu0 0
        %2219 = vmatprep.subr.bf16.mxu0 0
        %2220 = vmatpush1.bf16.msra.mxu0 0
        %2221 = vmatprep.mubr.bf16.mxu0 0
        %2222 = vmatmul.mubr.bf16.gmra.mrb[0].mxu0 %v2178
        %v2223 = vpop.f32.mrb[0].mxu0
        %v2224 = vadd.f32 0.0, %v2223
        %v2225 = vpop.f32.mrb[0].mxu0
        %v2226 = vpop.f32.mrb[0].mxu0
        %v2227 = vadd.f32 0.0, %v2226
        %v2228 = vpop.f32.mrb[0].mxu0
        %2229 = vmatprep.mubr.bf16.mxu0 0
        %2230 = vmatmul.mubr.bf16.gmra.mrb[0].mxu0 %v2181
        %v2231 = vpop.f32.mrb[0].mxu0
        %v2232 = vadd.f32 0.0, %v2231
        %v2233 = vpop.f32.mrb[0].mxu0
        %v2234 = vpop.f32.mrb[0].mxu0
        %v2235 = vadd.f32 0.0, %v2234
        %v2236 = vpop.f32.mrb[0].mxu0
        %2237 = vmatprep.mubr.bf16.mxu0 0
        %2238 = vmatmul.mubr.bf16.gmra.mrb[0].mxu0 %v2184
        %v2239 = vpop.f32.mrb[0].mxu0
        %v2240 = vadd.f32 0.0, %v2239
        %v2241 = vpop.f32.mrb[0].mxu0
        %v2242 = vpop.f32.mrb[0].mxu0
        %v2243 = vadd.f32 0.0, %v2242
        %v2244 = vpop.f32.mrb[0].mxu0
        %2245 = vmatprep.mubr.bf16.mxu0 0
        %2246 = vmatmul.mubr.bf16.gmra.mrb[0].mxu0 %v2187
        %v2247 = vpop.f32.mrb[0].mxu0
        %v2248 = vadd.f32 0.0, %v2247
        %v2249 = vpop.f32.mrb[0].mxu0
        %v2250 = vpop.f32.mrb[0].mxu0
        %v2251 = vadd.f32 0.0, %v2250
        %v2252 = vpop.f32.mrb[0].mxu0
        %2253 = vdwg.mxu0
        %v2254 = vadd.f32 %v2124, %v2224
        %v2255 = vadd.f32 %v2125, %v2227
        %v2256 = vadd.f32 %v2126, %v2232
        %v2257 = vadd.f32 %v2127, %v2235
        %v2258 = vadd.f32 %v2128, %v2240
        %v2259 = vadd.f32 %v2129, %v2243
        %v2260 = vadd.f32 %v2130, %v2248
        %v2261 = vadd.f32 %v2131, %v2251
        %v2262 = vand.u32 2147483647, %v2254
        %v2263 = vand.u32 2147483647, %v2255
        %v2264 = vand.u32 2147483647, %v2256
        %v2265 = vand.u32 2147483647, %v2257
        %v2266 = vand.u32 2147483647, %v2258
        %v2267 = vand.u32 2147483647, %v2259
        %v2268 = vand.u32 2147483647, %v2260
        %v2269 = vand.u32 2147483647, %v2261
        %v2270 = vsub.f32 0.0, %v2262
        %v2271 = vsub.f32 0.0, %v2263
        %v2272 = vsub.f32 0.0, %v2264
        %v2273 = vsub.f32 0.0, %v2265
        %v2274 = vsub.f32 0.0, %v2266
        %v2275 = vsub.f32 0.0, %v2267
        %v2276 = vsub.f32 0.0, %v2268
        %v2277 = vsub.f32 0.0, %v2269
        %v2278 = vmul.f32 %v2270, 1.442695
        %v2279 = vpow.pop %v2278
        %v2280 = vmul.f32 %v2271, 1.442695
        %v2281 = vpow.pop %v2280
        %v2282 = vmul.f32 %v2272, 1.442695
        %v2283 = vpow.pop %v2282
        %v2284 = vmul.f32 %v2273, 1.442695
        %v2285 = vpow.pop %v2284
        %v2286 = vmul.f32 %v2274, 1.442695
        %v2287 = vpow.pop %v2286
        %v2288 = vmul.f32 %v2275, 1.442695
        %v2289 = vpow.pop %v2288
        %v2290 = vmul.f32 %v2276, 1.442695
        %v2291 = vpow.pop %v2290
        %v2292 = vmul.f32 %v2277, 1.442695
        %v2293 = vpow.pop %v2292
        %v2294 = vadd.f32 %v2279, 1.0
        %v2295 = vadd.f32 %v2281, 1.0
        %v2296 = vadd.f32 %v2283, 1.0
        %v2297 = vadd.f32 %v2285, 1.0
        %v2298 = vadd.f32 %v2287, 1.0
        %v2299 = vadd.f32 %v2289, 1.0
        %v2300 = vadd.f32 %v2291, 1.0
        %v2301 = vadd.f32 %v2293, 1.0
        %v2302 = vrcp.pop %v2294
        %v2303 = vmul.f32 1.0, %v2302
        %v2304 = vrcp.pop %v2295
        %v2305 = vmul.f32 1.0, %v2304
        %v2306 = vrcp.pop %v2296
        %v2307 = vmul.f32 1.0, %v2306
        %v2308 = vrcp.pop %v2297
        %v2309 = vmul.f32 1.0, %v2308
        %v2310 = vrcp.pop %v2298
        %v2311 = vmul.f32 1.0, %v2310
        %v2312 = vrcp.pop %v2299
        %v2313 = vmul.f32 1.0, %v2312
        %v2314 = vrcp.pop %v2300
        %v2315 = vmul.f32 1.0, %v2314
        %v2316 = vrcp.pop %v2301
        %v2317 = vmul.f32 1.0, %v2316
        %vm2318 = vcmp.ge.f32.partialorder %v2254, 0.0
        %vm2319 = vcmp.ge.f32.partialorder %v2255, 0.0
        %vm2320 = vcmp.ge.f32.partialorder %v2256, 0.0
        %vm2321 = vcmp.ge.f32.partialorder %v2257, 0.0
        %vm2322 = vcmp.ge.f32.partialorder %v2258, 0.0
        %vm2323 = vcmp.ge.f32.partialorder %v2259, 0.0
        %vm2324 = vcmp.ge.f32.partialorder %v2260, 0.0
        %vm2325 = vcmp.ge.f32.partialorder %v2261, 0.0
        %v2326 = vmul.f32 %v2279, %v2303
        %v2327 = vmul.f32 %v2281, %v2305
        %v2328 = vmul.f32 %v2283, %v2307
        %v2329 = vmul.f32 %v2285, %v2309
        %v2330 = vmul.f32 %v2287, %v2311
        %v2331 = vmul.f32 %v2289, %v2313
        %v2332 = vmul.f32 %v2291, %v2315
        %v2333 = vmul.f32 %v2293, %v2317
        %v2334 = vsel %vm2318, %v2303, %v2326
        %v2335 = vsel %vm2319, %v2305, %v2327
        %v2336 = vsel %vm2320, %v2307, %v2328
        %v2337 = vsel %vm2321, %v2309, %v2329
        %v2338 = vsel %vm2322, %v2311, %v2330
        %v2339 = vsel %vm2323, %v2313, %v2331
        %v2340 = vsel %vm2324, %v2315, %v2332
        %v2341 = vsel %vm2325, %v2317, %v2333
        %2350 = vrot.lane.b32.xlu0 %v2334, 112
        %v2351 = vpop.permute.xlu0 %2350
        %2352 = vrot.lane.b32.xlu0 %v2335, 112
        %v2353 = vpop.permute.xlu0 %2352
        %2354 = vrot.lane.b32.xlu0 %v2336, 112
        %v2355 = vpop.permute.xlu0 %2354
        %2356 = vrot.lane.b32.xlu0 %v2337, 112
        %v2357 = vpop.permute.xlu0 %2356
        %2358 = vrot.lane.b32.xlu0 %v2338, 112
        %v2359 = vpop.permute.xlu0 %2358
        %2360 = vrot.lane.b32.xlu0 %v2339, 112
        %v2361 = vpop.permute.xlu0 %2360
        %2362 = vrot.lane.b32.xlu0 %v2340, 112
        %v2363 = vpop.permute.xlu0 %2362
        %2364 = vrot.lane.b32.xlu0 %v2341, 112
        %v2365 = vpop.permute.xlu0 %2364
        %v2374 = vmul.f32 %v2254, %v2351
        %v2375 = vmul.f32 %v2255, %v2353
        %v2376 = vmul.f32 %v2256, %v2355
        %v2377 = vmul.f32 %v2257, %v2357
        %v2378 = vmul.f32 %v2258, %v2359
        %v2379 = vmul.f32 %v2259, %v2361
        %v2380 = vmul.f32 %v2260, %v2363
        %v2381 = vmul.f32 %v2261, %v2365
        %v2382 = vadd.f32 %v1450, %v2374
        %v2383 = vadd.f32 %v1451, %v2375
        %v2384 = vadd.f32 %v1452, %v2376
        %v2385 = vadd.f32 %v1453, %v2377
        %v2386 = vadd.f32 %v1454, %v2378
        %v2387 = vadd.f32 %v1455, %v2379
        %v2388 = vadd.f32 %v1456, %v2380
        %v2389 = vadd.f32 %v1457, %v2381
        %v2390 = vpack.c.bf16 %v2383, %v2382
        %v2391 = vpack.c.bf16 %v2385, %v2384
        %v2392 = vpack.c.bf16 %v2387, %v2386
        %v2393 = vpack.c.bf16 %v2389, %v2388
        %v2394 = vld [vmem:[%s5] sm:$0xf]
        %v2395 = vld [vmem:[%s5 + $0x4] sm:$0xf]
        %v2396 = vld [vmem:[#allocation10] sm:$0x1]
        %v2398 = vlaneseq
        %v2399 = vshrl.u32 %v2398, 7
        %v2400 = vsub.s32 0, %v2399
        %v2401 = vrot.slane %v2396, %v2400
        %v2405 = vunpack.c.l.b16 %v2394
        %v2406 = vunpack.c.l.b16 %v2395
        %v2407 = vpack.c.b16 %v2406, %v2405
        %v2410 = vsel %vm590, %v2390, 0
        %v2413 = vsel %vm590, %v2391, 0
        %v2416 = vsel %vm590, %v2392, 0
        %v2419 = vsel %vm590, %v2393, 0
        %2421 = vmatprep.subr.bf16.mxu0 0
        %2422 = vmatpush1.bf16.msra.mxu0 %v2407
        %2423 = vmatprep.subr.bf16.mxu0 0
        %2424 = vmatpush1.bf16.msra.mxu0 0
        %2425 = vmatprep.subr.bf16.mxu0 0
        %2426 = vmatpush1.bf16.msra.mxu0 0
        %2427 = vmatprep.subr.bf16.mxu0 0
        %2428 = vmatpush1.bf16.msra.mxu0 0
        %2429 = vmatprep.subr.bf16.mxu0 0
        %2430 = vmatpush1.bf16.msra.mxu0 0
        %2431 = vmatprep.subr.bf16.mxu0 0
        %2432 = vmatpush1.bf16.msra.mxu0 0
        %2433 = vmatprep.subr.bf16.mxu0 0
        %2434 = vmatpush1.bf16.msra.mxu0 0
        %2435 = vmatprep.subr.bf16.mxu0 0
        %2436 = vmatpush1.bf16.msra.mxu0 0
        %2437 = vmatprep.subr.bf16.mxu0 0
        %2438 = vmatpush1.bf16.msra.mxu0 0
        %2439 = vmatprep.subr.bf16.mxu0 0
        %2440 = vmatpush1.bf16.msra.mxu0 0
        %2441 = vmatprep.subr.bf16.mxu0 0
        %2442 = vmatpush1.bf16.msra.mxu0 0
        %2443 = vmatprep.subr.bf16.mxu0 0
        %2444 = vmatpush1.bf16.msra.mxu0 0
        %2445 = vmatprep.subr.bf16.mxu0 0
        %2446 = vmatpush1.bf16.msra.mxu0 0
        %2447 = vmatprep.subr.bf16.mxu0 0
        %2448 = vmatpush1.bf16.msra.mxu0 0
        %2449 = vmatprep.subr.bf16.mxu0 0
        %2450 = vmatpush1.bf16.msra.mxu0 0
        %2451 = vmatprep.subr.bf16.mxu0 0
        %2452 = vmatpush1.bf16.msra.mxu0 0
        %2453 = vmatprep.mubr.bf16.mxu0 0
        %2454 = vmatmul.mubr.bf16.gmra.mrb[0].mxu0 %v2410
        %v2455 = vpop.f32.mrb[0].mxu0
        %v2456 = vadd.f32 %v2401, %v2455
        %v2457 = vpop.f32.mrb[0].mxu0
        %v2458 = vpop.f32.mrb[0].mxu0
        %v2459 = vadd.f32 %v2401, %v2458
        %v2460 = vpop.f32.mrb[0].mxu0
        %2461 = vmatprep.mubr.bf16.mxu0 0
        %2462 = vmatmul.mubr.bf16.gmra.mrb[0].mxu0 %v2413
        %v2463 = vpop.f32.mrb[0].mxu0
        %v2464 = vadd.f32 %v2401, %v2463
        %v2465 = vpop.f32.mrb[0].mxu0
        %v2466 = vpop.f32.mrb[0].mxu0
        %v2467 = vadd.f32 %v2401, %v2466
        %v2468 = vpop.f32.mrb[0].mxu0
        %2469 = vmatprep.mubr.bf16.mxu0 0
        %2470 = vmatmul.mubr.bf16.gmra.mrb[0].mxu0 %v2416
        %v2471 = vpop.f32.mrb[0].mxu0
        %v2472 = vadd.f32 %v2401, %v2471
        %v2473 = vpop.f32.mrb[0].mxu0
        %v2474 = vpop.f32.mrb[0].mxu0
        %v2475 = vadd.f32 %v2401, %v2474
        %v2476 = vpop.f32.mrb[0].mxu0
        %2477 = vmatprep.mubr.bf16.mxu0 0
        %2478 = vmatmul.mubr.bf16.gmra.mrb[0].mxu0 %v2419
        %v2479 = vpop.f32.mrb[0].mxu0
        %v2480 = vadd.f32 %v2401, %v2479
        %v2481 = vpop.f32.mrb[0].mxu0
        %v2482 = vpop.f32.mrb[0].mxu0
        %v2483 = vadd.f32 %v2401, %v2482
        %v2484 = vpop.f32.mrb[0].mxu0
        %2485 = vdwg.mxu0
        %v2486 = vpack.c.bf16 %v2459, %v2456
        %v2487 = vpack.c.bf16 %v2467, %v2464
        %v2488 = vpack.c.bf16 %v2475, %v2472
        %v2489 = vpack.c.bf16 %v2483, %v2480
        %2491 = vrot.lane.b32.xlu0 %v2486, 124
        %v2492 = vpop.permute.xlu0 %2491
        %vm2493 = vcmask 31744
        %v2495 = vsel %vm2493, %v2486, 0
        %v2498 = vsel %vm2493, %v2492, 0
        %2500 = vmatprep.subr.bf16.mxu0 0
        %2501 = vmatpush1.bf16.xpose.msra.mxu0 %v2498
        %2502 = vmatprep.subr.bf16.mxu0 0
        %2503 = vmatpush1.bf16.xpose.msra.mxu0 0
        %2504 = vmatprep.subr.bf16.mxu0 0
        %2505 = vmatpush1.bf16.xpose.msra.mxu0 0
        %2506 = vmatprep.subr.bf16.mxu0 0
        %2507 = vmatpush1.bf16.xpose.msra.mxu0 0
        %2508 = vmatprep.subr.bf16.mxu0 0
        %2509 = vmatpush1.bf16.xpose.msra.mxu0 0
        %2510 = vmatprep.subr.bf16.mxu0 0
        %2511 = vmatpush1.bf16.xpose.msra.mxu0 0
        %2512 = vmatprep.subr.bf16.mxu0 0
        %2513 = vmatpush1.bf16.xpose.msra.mxu0 0
        %2514 = vmatprep.subr.bf16.mxu0 0
        %2515 = vmatpush1.bf16.xpose.msra.mxu0 0
        %2516 = vmatprep.subr.bf16.mxu0 0
        %2517 = vmatpush1.bf16.xpose.msra.mxu0 0
        %2518 = vmatprep.subr.bf16.mxu0 0
        %2519 = vmatpush1.bf16.xpose.msra.mxu0 0
        %2520 = vmatprep.subr.bf16.mxu0 0
        %2521 = vmatpush1.bf16.xpose.msra.mxu0 0
        %2522 = vmatprep.subr.bf16.mxu0 0
        %2523 = vmatpush1.bf16.xpose.msra.mxu0 0
        %2524 = vmatprep.subr.bf16.mxu0 0
        %2525 = vmatpush1.bf16.xpose.msra.mxu0 0
        %2526 = vmatprep.subr.bf16.mxu0 0
        %2527 = vmatpush1.bf16.xpose.msra.mxu0 0
        %2528 = vmatprep.subr.bf16.mxu0 0
        %2529 = vmatpush1.bf16.xpose.msra.mxu0 0
        %2530 = vmatprep.subr.bf16.mxu0 0
        %2531 = vmatpush1.bf16.xpose.msra.mxu0 0
        %2532 = vmatprep.mubr.bf16.mxu0 0
        %2533 = vmatmul.mubr.bf16.gmra.mrb[0].mxu0 %v2495
        %v2534 = vpop.f32.mrb[0].mxu0
        %v2535 = vadd.f32 0.0, %v2534
        %v2536 = vpop.f32.mrb[0].mxu0
        %v2537 = vpop.f32.mrb[0].mxu0
        %v2538 = vadd.f32 0.0, %v2537
        %v2539 = vpop.f32.mrb[0].mxu0
        %2540 = vdwg.mxu0
        %2542 = vrot.lane.b32.xlu0 %v2487, 124
        %v2543 = vpop.permute.xlu0 %2542
        %v2545 = vsel %vm2493, %v2487, 0
        %v2548 = vsel %vm2493, %v2543, 0
        %2550 = vmatprep.subr.bf16.mxu0 0
        %2551 = vmatpush1.bf16.xpose.msra.mxu0 %v2548
        %2552 = vmatprep.subr.bf16.mxu0 0
        %2553 = vmatpush1.bf16.xpose.msra.mxu0 0
        %2554 = vmatprep.subr.bf16.mxu0 0
        %2555 = vmatpush1.bf16.xpose.msra.mxu0 0
        %2556 = vmatprep.subr.bf16.mxu0 0
        %2557 = vmatpush1.bf16.xpose.msra.mxu0 0
        %2558 = vmatprep.subr.bf16.mxu0 0
        %2559 = vmatpush1.bf16.xpose.msra.mxu0 0
        %2560 = vmatprep.subr.bf16.mxu0 0
        %2561 = vmatpush1.bf16.xpose.msra.mxu0 0
        %2562 = vmatprep.subr.bf16.mxu0 0
        %2563 = vmatpush1.bf16.xpose.msra.mxu0 0
        %2564 = vmatprep.subr.bf16.mxu0 0
        %2565 = vmatpush1.bf16.xpose.msra.mxu0 0
        %2566 = vmatprep.subr.bf16.mxu0 0
        %2567 = vmatpush1.bf16.xpose.msra.mxu0 0
        %2568 = vmatprep.subr.bf16.mxu0 0
        %2569 = vmatpush1.bf16.xpose.msra.mxu0 0
        %2570 = vmatprep.subr.bf16.mxu0 0
        %2571 = vmatpush1.bf16.xpose.msra.mxu0 0
        %2572 = vmatprep.subr.bf16.mxu0 0
        %2573 = vmatpush1.bf16.xpose.msra.mxu0 0
        %2574 = vmatprep.subr.bf16.mxu0 0
        %2575 = vmatpush1.bf16.xpose.msra.mxu0 0
        %2576 = vmatprep.subr.bf16.mxu0 0
        %2577 = vmatpush1.bf16.xpose.msra.mxu0 0
        %2578 = vmatprep.subr.bf16.mxu0 0
        %2579 = vmatpush1.bf16.xpose.msra.mxu0 0
        %2580 = vmatprep.subr.bf16.mxu0 0
        %2581 = vmatpush1.bf16.xpose.msra.mxu0 0
        %2582 = vmatprep.mubr.bf16.mxu0 0
        %2583 = vmatmul.mubr.bf16.gmra.mrb[0].mxu0 %v2545
        %v2584 = vpop.f32.mrb[0].mxu0
        %v2585 = vadd.f32 0.0, %v2584
        %v2586 = vpop.f32.mrb[0].mxu0
        %v2587 = vpop.f32.mrb[0].mxu0
        %v2588 = vadd.f32 0.0, %v2587
        %v2589 = vpop.f32.mrb[0].mxu0
        %2590 = vdwg.mxu0
        %2592 = vrot.lane.b32.xlu0 %v2488, 124
        %v2593 = vpop.permute.xlu0 %2592
        %v2595 = vsel %vm2493, %v2488, 0
        %v2598 = vsel %vm2493, %v2593, 0
        %2600 = vmatprep.subr.bf16.mxu0 0
        %2601 = vmatpush1.bf16.xpose.msra.mxu0 %v2598
        %2602 = vmatprep.subr.bf16.mxu0 0
        %2603 = vmatpush1.bf16.xpose.msra.mxu0 0
        %2604 = vmatprep.subr.bf16.mxu0 0
        %2605 = vmatpush1.bf16.xpose.msra.mxu0 0
        %2606 = vmatprep.subr.bf16.mxu0 0
        %2607 = vmatpush1.bf16.xpose.msra.mxu0 0
        %2608 = vmatprep.subr.bf16.mxu0 0
        %2609 = vmatpush1.bf16.xpose.msra.mxu0 0
        %2610 = vmatprep.subr.bf16.mxu0 0
        %2611 = vmatpush1.bf16.xpose.msra.mxu0 0
        %2612 = vmatprep.subr.bf16.mxu0 0
        %2613 = vmatpush1.bf16.xpose.msra.mxu0 0
        %2614 = vmatprep.subr.bf16.mxu0 0
        %2615 = vmatpush1.bf16.xpose.msra.mxu0 0
        %2616 = vmatprep.subr.bf16.mxu0 0
        %2617 = vmatpush1.bf16.xpose.msra.mxu0 0
        %2618 = vmatprep.subr.bf16.mxu0 0
        %2619 = vmatpush1.bf16.xpose.msra.mxu0 0
        %2620 = vmatprep.subr.bf16.mxu0 0
        %2621 = vmatpush1.bf16.xpose.msra.mxu0 0
        %2622 = vmatprep.subr.bf16.mxu0 0
        %2623 = vmatpush1.bf16.xpose.msra.mxu0 0
        %2624 = vmatprep.subr.bf16.mxu0 0
        %2625 = vmatpush1.bf16.xpose.msra.mxu0 0
        %2626 = vmatprep.subr.bf16.mxu0 0
        %2627 = vmatpush1.bf16.xpose.msra.mxu0 0
        %2628 = vmatprep.subr.bf16.mxu0 0
        %2629 = vmatpush1.bf16.xpose.msra.mxu0 0
        %2630 = vmatprep.subr.bf16.mxu0 0
        %2631 = vmatpush1.bf16.xpose.msra.mxu0 0
        %2632 = vmatprep.mubr.bf16.mxu0 0
        %2633 = vmatmul.mubr.bf16.gmra.mrb[0].mxu0 %v2595
        %v2634 = vpop.f32.mrb[0].mxu0
        %v2635 = vadd.f32 0.0, %v2634
        %v2636 = vpop.f32.mrb[0].mxu0
        %v2637 = vpop.f32.mrb[0].mxu0
        %v2638 = vadd.f32 0.0, %v2637
        %v2639 = vpop.f32.mrb[0].mxu0
        %2640 = vdwg.mxu0
        %2642 = vrot.lane.b32.xlu0 %v2489, 124
        %v2643 = vpop.permute.xlu0 %2642
        %v2645 = vsel %vm2493, %v2489, 0
        %v2648 = vsel %vm2493, %v2643, 0
        %2650 = vmatprep.subr.bf16.mxu0 0
        %2651 = vmatpush1.bf16.xpose.msra.mxu0 %v2648
        %2652 = vmatprep.subr.bf16.mxu0 0
        %2653 = vmatpush1.bf16.xpose.msra.mxu0 0
        %2654 = vmatprep.subr.bf16.mxu0 0
        %2655 = vmatpush1.bf16.xpose.msra.mxu0 0
        %2656 = vmatprep.subr.bf16.mxu0 0
        %2657 = vmatpush1.bf16.xpose.msra.mxu0 0
        %2658 = vmatprep.subr.bf16.mxu0 0
        %2659 = vmatpush1.bf16.xpose.msra.mxu0 0
        %2660 = vmatprep.subr.bf16.mxu0 0
        %2661 = vmatpush1.bf16.xpose.msra.mxu0 0
        %2662 = vmatprep.subr.bf16.mxu0 0
        %2663 = vmatpush1.bf16.xpose.msra.mxu0 0
        %2664 = vmatprep.subr.bf16.mxu0 0
        %2665 = vmatpush1.bf16.xpose.msra.mxu0 0
        %2666 = vmatprep.subr.bf16.mxu0 0
        %2667 = vmatpush1.bf16.xpose.msra.mxu0 0
        %2668 = vmatprep.subr.bf16.mxu0 0
        %2669 = vmatpush1.bf16.xpose.msra.mxu0 0
        %2670 = vmatprep.subr.bf16.mxu0 0
        %2671 = vmatpush1.bf16.xpose.msra.mxu0 0
        %2672 = vmatprep.subr.bf16.mxu0 0
        %2673 = vmatpush1.bf16.xpose.msra.mxu0 0
        %2674 = vmatprep.subr.bf16.mxu0 0
        %2675 = vmatpush1.bf16.xpose.msra.mxu0 0
        %2676 = vmatprep.subr.bf16.mxu0 0
        %2677 = vmatpush1.bf16.xpose.msra.mxu0 0
        %2678 = vmatprep.subr.bf16.mxu0 0
        %2679 = vmatpush1.bf16.xpose.msra.mxu0 0
        %2680 = vmatprep.subr.bf16.mxu0 0
        %2681 = vmatpush1.bf16.xpose.msra.mxu0 0
        %2682 = vmatprep.mubr.bf16.mxu0 0
        %2683 = vmatmul.mubr.bf16.gmra.mrb[0].mxu0 %v2645
        %v2684 = vpop.f32.mrb[0].mxu0
        %v2685 = vadd.f32 0.0, %v2684
        %v2686 = vpop.f32.mrb[0].mxu0
        %v2687 = vpop.f32.mrb[0].mxu0
        %v2688 = vadd.f32 0.0, %v2687
        %v2689 = vpop.f32.mrb[0].mxu0
        %2690 = vdwg.mxu0
        %v2691 = vsel %vm590, %v2535, -inf
        %2692 = vmax.xlane.f32.xlu0 %v2691
        %v2693 = vpop.xlane.xlu0 %2692
        %v2694 = vsel %vm590, %v2538, -inf
        %2695 = vmax.xlane.f32.xlu0 %v2694
        %v2696 = vpop.xlane.xlu0 %2695
        %v2697 = vsel %vm590, %v2585, -inf
        %2698 = vmax.xlane.f32.xlu0 %v2697
        %v2699 = vpop.xlane.xlu0 %2698
        %v2700 = vsel %vm590, %v2588, -inf
        %2701 = vmax.xlane.f32.xlu0 %v2700
        %v2702 = vpop.xlane.xlu0 %2701
        %v2703 = vsel %vm590, %v2635, -inf
        %2704 = vmax.xlane.f32.xlu0 %v2703
        %v2705 = vpop.xlane.xlu0 %2704
        %v2706 = vsel %vm590, %v2638, -inf
        %2707 = vmax.xlane.f32.xlu0 %v2706
        %v2708 = vpop.xlane.xlu0 %2707
        %v2709 = vsel %vm590, %v2685, -inf
        %2710 = vmax.xlane.f32.xlu0 %v2709
        %v2711 = vpop.xlane.xlu0 %2710
        %v2712 = vsel %vm590, %v2688, -inf
        %2713 = vmax.xlane.f32.xlu0 %v2712
        %v2714 = vpop.xlane.xlu0 %2713
        %v2715 = vsub.f32 %v2535, %v2693
        %v2716 = vsub.f32 %v2538, %v2696
        %v2717 = vsub.f32 %v2585, %v2699
        %v2718 = vsub.f32 %v2588, %v2702
        %v2719 = vsub.f32 %v2635, %v2705
        %v2720 = vsub.f32 %v2638, %v2708
        %v2721 = vsub.f32 %v2685, %v2711
        %v2722 = vsub.f32 %v2688, %v2714
        %v2723 = vmul.f32 %v2715, 1.442695
        %v2724 = vpow.pop %v2723
        %v2725 = vmul.f32 %v2716, 1.442695
        %v2726 = vpow.pop %v2725
        %v2727 = vmul.f32 %v2717, 1.442695
        %v2728 = vpow.pop %v2727
        %v2729 = vmul.f32 %v2718, 1.442695
        %v2730 = vpow.pop %v2729
        %v2731 = vmul.f32 %v2719, 1.442695
        %v2732 = vpow.pop %v2731
        %v2733 = vmul.f32 %v2720, 1.442695
        %v2734 = vpow.pop %v2733
        %v2735 = vmul.f32 %v2721, 1.442695
        %v2736 = vpow.pop %v2735
        %v2737 = vmul.f32 %v2722, 1.442695
        %v2738 = vpow.pop %v2737
        %v2739 = vsel %vm590, %v2724, 0.0
        %2740 = vadd.xlane.f32.xlu0 %v2739
        %v2741 = vpop.xlane.xlu0 %2740
        %v2742 = vsel %vm590, %v2726, 0.0
        %2743 = vadd.xlane.f32.xlu0 %v2742
        %v2744 = vpop.xlane.xlu0 %2743
        %v2745 = vsel %vm590, %v2728, 0.0
        %2746 = vadd.xlane.f32.xlu0 %v2745
        %v2747 = vpop.xlane.xlu0 %2746
        %v2748 = vsel %vm590, %v2730, 0.0
        %2749 = vadd.xlane.f32.xlu0 %v2748
        %v2750 = vpop.xlane.xlu0 %2749
        %v2751 = vsel %vm590, %v2732, 0.0
        %2752 = vadd.xlane.f32.xlu0 %v2751
        %v2753 = vpop.xlane.xlu0 %2752
        %v2754 = vsel %vm590, %v2734, 0.0
        %2755 = vadd.xlane.f32.xlu0 %v2754
        %v2756 = vpop.xlane.xlu0 %2755
        %v2757 = vsel %vm590, %v2736, 0.0
        %2758 = vadd.xlane.f32.xlu0 %v2757
        %v2759 = vpop.xlane.xlu0 %2758
        %v2760 = vsel %vm590, %v2738, 0.0
        %2761 = vadd.xlane.f32.xlu0 %v2760
        %v2762 = vpop.xlane.xlu0 %2761
        %v2763 = vrcp.pop %v2741
        %v2764 = vrcp.pop %v2744
        %v2765 = vrcp.pop %v2747
        %v2766 = vrcp.pop %v2750
        %v2767 = vrcp.pop %v2753
        %v2768 = vrcp.pop %v2756
        %v2769 = vrcp.pop %v2759
        %v2770 = vrcp.pop %v2762
        %v2771 = vmul.f32 %v2724, %v2763
        %v2772 = vmul.f32 %v2726, %v2764
        %v2773 = vmul.f32 %v2728, %v2765
        %v2774 = vmul.f32 %v2730, %v2766
        %v2775 = vmul.f32 %v2732, %v2767
        %v2776 = vmul.f32 %v2734, %v2768
        %v2777 = vmul.f32 %v2736, %v2769
        %v2778 = vmul.f32 %v2738, %v2770
        %v2779 = vpack.c.bf16 %v2772, %v2771
        %v2780 = vpack.c.bf16 %v2774, %v2773
        %v2781 = vpack.c.bf16 %v2776, %v2775
        %v2782 = vpack.c.bf16 %v2778, %v2777
        %2783 = vrot.lane.b32.xlu0 %v2486, 120
        %v2784 = vpop.permute.xlu0 %2783
        %v2787 = vsel %vm590, %v2779, 0
        %2789 = vmatprep.subr.bf16.mxu0 0
        %2790 = vmatpush1.bf16.msra.mxu0 %v2784
        %2791 = vmatprep.subr.bf16.mxu0 0
        %2792 = vmatpush1.bf16.msra.mxu0 0
        %2793 = vmatprep.subr.bf16.mxu0 0
        %2794 = vmatpush1.bf16.msra.mxu0 0
        %2795 = vmatprep.subr.bf16.mxu0 0
        %2796 = vmatpush1.bf16.msra.mxu0 0
        %2797 = vmatprep.subr.bf16.mxu0 0
        %2798 = vmatpush1.bf16.msra.mxu0 0
        %2799 = vmatprep.subr.bf16.mxu0 0
        %2800 = vmatpush1.bf16.msra.mxu0 0
        %2801 = vmatprep.subr.bf16.mxu0 0
        %2802 = vmatpush1.bf16.msra.mxu0 0
        %2803 = vmatprep.subr.bf16.mxu0 0
        %2804 = vmatpush1.bf16.msra.mxu0 0
        %2805 = vmatprep.subr.bf16.mxu0 0
        %2806 = vmatpush1.bf16.msra.mxu0 0
        %2807 = vmatprep.subr.bf16.mxu0 0
        %2808 = vmatpush1.bf16.msra.mxu0 0
        %2809 = vmatprep.subr.bf16.mxu0 0
        %2810 = vmatpush1.bf16.msra.mxu0 0
        %2811 = vmatprep.subr.bf16.mxu0 0
        %2812 = vmatpush1.bf16.msra.mxu0 0
        %2813 = vmatprep.subr.bf16.mxu0 0
        %2814 = vmatpush1.bf16.msra.mxu0 0
        %2815 = vmatprep.subr.bf16.mxu0 0
        %2816 = vmatpush1.bf16.msra.mxu0 0
        %2817 = vmatprep.subr.bf16.mxu0 0
        %2818 = vmatpush1.bf16.msra.mxu0 0
        %2819 = vmatprep.subr.bf16.mxu0 0
        %2820 = vmatpush1.bf16.msra.mxu0 0
        %2821 = vmatprep.mubr.bf16.mxu0 0
        %2822 = vmatmul.mubr.bf16.gmra.mrb[0].mxu0 %v2787
        %v2823 = vpop.f32.mrb[0].mxu0
        %v2824 = vadd.f32 0.0, %v2823
        %v2825 = vpop.f32.mrb[0].mxu0
        %v2826 = vpop.f32.mrb[0].mxu0
        %v2827 = vadd.f32 0.0, %v2826
        %v2828 = vpop.f32.mrb[0].mxu0
        %2829 = vdwg.mxu0
        %2830 = vrot.lane.b32.xlu0 %v2487, 120
        %v2831 = vpop.permute.xlu0 %2830
        %v2834 = vsel %vm590, %v2780, 0
        %2836 = vmatprep.subr.bf16.mxu0 0
        %2837 = vmatpush1.bf16.msra.mxu0 %v2831
        %2838 = vmatprep.subr.bf16.mxu0 0
        %2839 = vmatpush1.bf16.msra.mxu0 0
        %2840 = vmatprep.subr.bf16.mxu0 0
        %2841 = vmatpush1.bf16.msra.mxu0 0
        %2842 = vmatprep.subr.bf16.mxu0 0
        %2843 = vmatpush1.bf16.msra.mxu0 0
        %2844 = vmatprep.subr.bf16.mxu0 0
        %2845 = vmatpush1.bf16.msra.mxu0 0
        %2846 = vmatprep.subr.bf16.mxu0 0
        %2847 = vmatpush1.bf16.msra.mxu0 0
        %2848 = vmatprep.subr.bf16.mxu0 0
        %2849 = vmatpush1.bf16.msra.mxu0 0
        %2850 = vmatprep.subr.bf16.mxu0 0
        %2851 = vmatpush1.bf16.msra.mxu0 0
        %2852 = vmatprep.subr.bf16.mxu0 0
        %2853 = vmatpush1.bf16.msra.mxu0 0
        %2854 = vmatprep.subr.bf16.mxu0 0
        %2855 = vmatpush1.bf16.msra.mxu0 0
        %2856 = vmatprep.subr.bf16.mxu0 0
        %2857 = vmatpush1.bf16.msra.mxu0 0
        %2858 = vmatprep.subr.bf16.mxu0 0
        %2859 = vmatpush1.bf16.msra.mxu0 0
        %2860 = vmatprep.subr.bf16.mxu0 0
        %2861 = vmatpush1.bf16.msra.mxu0 0
        %2862 = vmatprep.subr.bf16.mxu0 0
        %2863 = vmatpush1.bf16.msra.mxu0 0
        %2864 = vmatprep.subr.bf16.mxu0 0
        %2865 = vmatpush1.bf16.msra.mxu0 0
        %2866 = vmatprep.subr.bf16.mxu0 0
        %2867 = vmatpush1.bf16.msra.mxu0 0
        %2868 = vmatprep.mubr.bf16.mxu0 0
        %2869 = vmatmul.mubr.bf16.gmra.mrb[0].mxu0 %v2834
        %v2870 = vpop.f32.mrb[0].mxu0
        %v2871 = vadd.f32 0.0, %v2870
        %v2872 = vpop.f32.mrb[0].mxu0
        %v2873 = vpop.f32.mrb[0].mxu0
        %v2874 = vadd.f32 0.0, %v2873
        %v2875 = vpop.f32.mrb[0].mxu0
        %2876 = vdwg.mxu0
        %2877 = vrot.lane.b32.xlu0 %v2488, 120
        %v2878 = vpop.permute.xlu0 %2877
        %v2881 = vsel %vm590, %v2781, 0
        %2883 = vmatprep.subr.bf16.mxu0 0
        %2884 = vmatpush1.bf16.msra.mxu0 %v2878
        %2885 = vmatprep.subr.bf16.mxu0 0
        %2886 = vmatpush1.bf16.msra.mxu0 0
        %2887 = vmatprep.subr.bf16.mxu0 0
        %2888 = vmatpush1.bf16.msra.mxu0 0
        %2889 = vmatprep.subr.bf16.mxu0 0
        %2890 = vmatpush1.bf16.msra.mxu0 0
        %2891 = vmatprep.subr.bf16.mxu0 0
        %2892 = vmatpush1.bf16.msra.mxu0 0
        %2893 = vmatprep.subr.bf16.mxu0 0
        %2894 = vmatpush1.bf16.msra.mxu0 0
        %2895 = vmatprep.subr.bf16.mxu0 0
        %2896 = vmatpush1.bf16.msra.mxu0 0
        %2897 = vmatprep.subr.bf16.mxu0 0
        %2898 = vmatpush1.bf16.msra.mxu0 0
        %2899 = vmatprep.subr.bf16.mxu0 0
        %2900 = vmatpush1.bf16.msra.mxu0 0
        %2901 = vmatprep.subr.bf16.mxu0 0
        %2902 = vmatpush1.bf16.msra.mxu0 0
        %2903 = vmatprep.subr.bf16.mxu0 0
        %2904 = vmatpush1.bf16.msra.mxu0 0
        %2905 = vmatprep.subr.bf16.mxu0 0
        %2906 = vmatpush1.bf16.msra.mxu0 0
        %2907 = vmatprep.subr.bf16.mxu0 0
        %2908 = vmatpush1.bf16.msra.mxu0 0
        %2909 = vmatprep.subr.bf16.mxu0 0
        %2910 = vmatpush1.bf16.msra.mxu0 0
        %2911 = vmatprep.subr.bf16.mxu0 0
        %2912 = vmatpush1.bf16.msra.mxu0 0
        %2913 = vmatprep.subr.bf16.mxu0 0
        %2914 = vmatpush1.bf16.msra.mxu0 0
        %2915 = vmatprep.mubr.bf16.mxu0 0
        %2916 = vmatmul.mubr.bf16.gmra.mrb[0].mxu0 %v2881
        %v2917 = vpop.f32.mrb[0].mxu0
        %v2918 = vadd.f32 0.0, %v2917
        %v2919 = vpop.f32.mrb[0].mxu0
        %v2920 = vpop.f32.mrb[0].mxu0
        %v2921 = vadd.f32 0.0, %v2920
        %v2922 = vpop.f32.mrb[0].mxu0
        %2923 = vdwg.mxu0
        %2924 = vrot.lane.b32.xlu0 %v2489, 120
        %v2925 = vpop.permute.xlu0 %2924
        %v2928 = vsel %vm590, %v2782, 0
        %2930 = vmatprep.subr.bf16.mxu0 0
        %2931 = vmatpush1.bf16.msra.mxu0 %v2925
        %2932 = vmatprep.subr.bf16.mxu0 0
        %2933 = vmatpush1.bf16.msra.mxu0 0
        %2934 = vmatprep.subr.bf16.mxu0 0
        %2935 = vmatpush1.bf16.msra.mxu0 0
        %2936 = vmatprep.subr.bf16.mxu0 0
        %2937 = vmatpush1.bf16.msra.mxu0 0
        %2938 = vmatprep.subr.bf16.mxu0 0
        %2939 = vmatpush1.bf16.msra.mxu0 0
        %2940 = vmatprep.subr.bf16.mxu0 0
        %2941 = vmatpush1.bf16.msra.mxu0 0
        %2942 = vmatprep.subr.bf16.mxu0 0
        %2943 = vmatpush1.bf16.msra.mxu0 0
        %2944 = vmatprep.subr.bf16.mxu0 0
        %2945 = vmatpush1.bf16.msra.mxu0 0
        %2946 = vmatprep.subr.bf16.mxu0 0
        %2947 = vmatpush1.bf16.msra.mxu0 0
        %2948 = vmatprep.subr.bf16.mxu0 0
        %2949 = vmatpush1.bf16.msra.mxu0 0
        %2950 = vmatprep.subr.bf16.mxu0 0
        %2951 = vmatpush1.bf16.msra.mxu0 0
        %2952 = vmatprep.subr.bf16.mxu0 0
        %2953 = vmatpush1.bf16.msra.mxu0 0
        %2954 = vmatprep.subr.bf16.mxu0 0
        %2955 = vmatpush1.bf16.msra.mxu0 0
        %2956 = vmatprep.subr.bf16.mxu0 0
        %2957 = vmatpush1.bf16.msra.mxu0 0
        %2958 = vmatprep.subr.bf16.mxu0 0
        %2959 = vmatpush1.bf16.msra.mxu0 0
        %2960 = vmatprep.subr.bf16.mxu0 0
        %2961 = vmatpush1.bf16.msra.mxu0 0
        %2962 = vmatprep.mubr.bf16.mxu0 0
        %2963 = vmatmul.mubr.bf16.gmra.mrb[0].mxu0 %v2928
        %v2964 = vpop.f32.mrb[0].mxu0
        %v2965 = vadd.f32 0.0, %v2964
        %v2966 = vpop.f32.mrb[0].mxu0
        %v2967 = vpop.f32.mrb[0].mxu0
        %v2968 = vadd.f32 0.0, %v2967
        %v2969 = vpop.f32.mrb[0].mxu0
        %2970 = vdwg.mxu0
        %v2971 = vadd.f32 %v2382, %v2824
        %v2972 = vadd.f32 %v2383, %v2827
        %v2973 = vadd.f32 %v2384, %v2871
        %v2974 = vadd.f32 %v2385, %v2874
        %v2975 = vadd.f32 %v2386, %v2918
        %v2976 = vadd.f32 %v2387, %v2921
        %v2977 = vadd.f32 %v2388, %v2965
        %v2978 = vadd.f32 %v2389, %v2968
        %v2979 = vpack.c.bf16 %v2972, %v2971
        %v2980 = vpack.c.bf16 %v2974, %v2973
        %v2981 = vpack.c.bf16 %v2976, %v2975
        %v2982 = vpack.c.bf16 %v2978, %v2977
        %v2983 = vld [vmem:[%s7] sm:$0xf]
        %v2984 = vld [vmem:[%s7 + $0x4] sm:$0xf]
        %v2985 = vrot.slane %v2971, 7
        %v2986 = vrot.slane %v2972, 7
        %v2987 = vrot.slane %v2973, 7
        %v2988 = vrot.slane %v2974, 7
        %v2989 = vrot.slane %v2975, 7
        %v2990 = vrot.slane %v2976, 7
        %v2991 = vrot.slane %v2977, 7
        %v2992 = vrot.slane %v2978, 7
        %v2993 = vsel %vm956, %v2991, %v2992
        %v2994 = vsel %vm956, %v2990, %v2991
        %v2995 = vsel %vm956, %v2989, %v2990
        %v2996 = vsel %vm956, %v2988, %v2989
        %v2997 = vsel %vm956, %v2987, %v2988
        %v2998 = vsel %vm956, %v2986, %v2987
        %v2999 = vsel %vm956, %v2985, %v2986
        %v3000 = vsel %vm956, %v2992, %v2985
        %v3001 = vsel %vm967, %v3000, 0.0
        %v3002 = vsel %vm968, %v2999, 0.0
        %v3003 = vsel %vm967, %v2998, 0.0
        %v3004 = vsel %vm968, %v2997, 0.0
        %v3005 = vsel %vm967, %v2996, 0.0
        %v3006 = vsel %vm968, %v2995, 0.0
        %v3007 = vsel %vm967, %v2994, 0.0
        %v3008 = vsel %vm968, %v2993, 0.0
        %v3009 = vpack.c.bf16 %v3002, %v3001
        %v3010 = vpack.c.bf16 %v3004, %v3003
        %v3011 = vpack.c.bf16 %v3006, %v3005
        %v3012 = vpack.c.bf16 %v3008, %v3007
        %v3013 = vld [vmem:[%s8] sm:$0xf]
        %v3014 = vld [vmem:[%s8 + $0x4] sm:$0xf]
        %v3017 = vunpack.c.l.b16 %v3013
        %v3018 = vunpack.c.l.b16 %v3014
        %v3019 = vpack.c.b16 %v3018, %v3017
        %v3022 = vsel %vm590, %v3009, 0
        %v3025 = vsel %vm590, %v3010, 0
        %v3028 = vsel %vm590, %v3011, 0
        %v3031 = vsel %vm590, %v3012, 0
        %3033 = vmatprep.subr.bf16.mxu0 0
        %3034 = vmatpush1.bf16.msra.mxu0 %v3019
        %3035 = vmatprep.subr.bf16.mxu0 0
        %3036 = vmatpush1.bf16.msra.mxu0 0
        %3037 = vmatprep.subr.bf16.mxu0 0
        %3038 = vmatpush1.bf16.msra.mxu0 0
        %3039 = vmatprep.subr.bf16.mxu0 0
        %3040 = vmatpush1.bf16.msra.mxu0 0
        %3041 = vmatprep.subr.bf16.mxu0 0
        %3042 = vmatpush1.bf16.msra.mxu0 0
        %3043 = vmatprep.subr.bf16.mxu0 0
        %3044 = vmatpush1.bf16.msra.mxu0 0
        %3045 = vmatprep.subr.bf16.mxu0 0
        %3046 = vmatpush1.bf16.msra.mxu0 0
        %3047 = vmatprep.subr.bf16.mxu0 0
        %3048 = vmatpush1.bf16.msra.mxu0 0
        %3049 = vmatprep.subr.bf16.mxu0 0
        %3050 = vmatpush1.bf16.msra.mxu0 0
        %3051 = vmatprep.subr.bf16.mxu0 0
        %3052 = vmatpush1.bf16.msra.mxu0 0
        %3053 = vmatprep.subr.bf16.mxu0 0
        %3054 = vmatpush1.bf16.msra.mxu0 0
        %3055 = vmatprep.subr.bf16.mxu0 0
        %3056 = vmatpush1.bf16.msra.mxu0 0
        %3057 = vmatprep.subr.bf16.mxu0 0
        %3058 = vmatpush1.bf16.msra.mxu0 0
        %3059 = vmatprep.subr.bf16.mxu0 0
        %3060 = vmatpush1.bf16.msra.mxu0 0
        %3061 = vmatprep.subr.bf16.mxu0 0
        %3062 = vmatpush1.bf16.msra.mxu0 0
        %3063 = vmatprep.subr.bf16.mxu0 0
        %3064 = vmatpush1.bf16.msra.mxu0 0
        %3065 = vmatprep.mubr.bf16.mxu0 0
        %3066 = vmatmul.mubr.bf16.gmra.mrb[0].mxu0 %v3022
        %v3067 = vpop.f32.mrb[0].mxu0
        %v3068 = vadd.f32 0.0, %v3067
        %v3069 = vpop.f32.mrb[0].mxu0
        %v3070 = vpop.f32.mrb[0].mxu0
        %v3071 = vadd.f32 0.0, %v3070
        %v3072 = vpop.f32.mrb[0].mxu0
        %3073 = vmatprep.mubr.bf16.mxu0 0
        %3074 = vmatmul.mubr.bf16.gmra.mrb[0].mxu0 %v3025
        %v3075 = vpop.f32.mrb[0].mxu0
        %v3076 = vadd.f32 0.0, %v3075
        %v3077 = vpop.f32.mrb[0].mxu0
        %v3078 = vpop.f32.mrb[0].mxu0
        %v3079 = vadd.f32 0.0, %v3078
        %v3080 = vpop.f32.mrb[0].mxu0
        %3081 = vmatprep.mubr.bf16.mxu0 0
        %3082 = vmatmul.mubr.bf16.gmra.mrb[0].mxu0 %v3028
        %v3083 = vpop.f32.mrb[0].mxu0
        %v3084 = vadd.f32 0.0, %v3083
        %v3085 = vpop.f32.mrb[0].mxu0
        %v3086 = vpop.f32.mrb[0].mxu0
        %v3087 = vadd.f32 0.0, %v3086
        %v3088 = vpop.f32.mrb[0].mxu0
        %3089 = vmatprep.mubr.bf16.mxu0 0
        %3090 = vmatmul.mubr.bf16.gmra.mrb[0].mxu0 %v3031
        %v3091 = vpop.f32.mrb[0].mxu0
        %v3092 = vadd.f32 0.0, %v3091
        %v3093 = vpop.f32.mrb[0].mxu0
        %v3094 = vpop.f32.mrb[0].mxu0
        %v3095 = vadd.f32 0.0, %v3094
        %v3096 = vpop.f32.mrb[0].mxu0
        %3097 = vdwg.mxu0
        %v3100 = vunpack.c.l.b16 %v2983
        %v3101 = vunpack.c.l.b16 %v2984
        %v3102 = vpack.c.b16 %v3101, %v3100
        %v3105 = vsel %vm590, %v2979, 0
        %v3108 = vsel %vm590, %v2980, 0
        %v3111 = vsel %vm590, %v2981, 0
        %v3114 = vsel %vm590, %v2982, 0
        %3116 = vmatprep.subr.bf16.mxu0 0
        %3117 = vmatpush1.bf16.msra.mxu0 %v3102
        %3118 = vmatprep.subr.bf16.mxu0 0
        %3119 = vmatpush1.bf16.msra.mxu0 0
        %3120 = vmatprep.subr.bf16.mxu0 0
        %3121 = vmatpush1.bf16.msra.mxu0 0
        %3122 = vmatprep.subr.bf16.mxu0 0
        %3123 = vmatpush1.bf16.msra.mxu0 0
        %3124 = vmatprep.subr.bf16.mxu0 0
        %3125 = vmatpush1.bf16.msra.mxu0 0
        %3126 = vmatprep.subr.bf16.mxu0 0
        %3127 = vmatpush1.bf16.msra.mxu0 0
        %3128 = vmatprep.subr.bf16.mxu0 0
        %3129 = vmatpush1.bf16.msra.mxu0 0
        %3130 = vmatprep.subr.bf16.mxu0 0
        %3131 = vmatpush1.bf16.msra.mxu0 0
        %3132 = vmatprep.subr.bf16.mxu0 0
        %3133 = vmatpush1.bf16.msra.mxu0 0
        %3134 = vmatprep.subr.bf16.mxu0 0
        %3135 = vmatpush1.bf16.msra.mxu0 0
        %3136 = vmatprep.subr.bf16.mxu0 0
        %3137 = vmatpush1.bf16.msra.mxu0 0
        %3138 = vmatprep.subr.bf16.mxu0 0
        %3139 = vmatpush1.bf16.msra.mxu0 0
        %3140 = vmatprep.subr.bf16.mxu0 0
        %3141 = vmatpush1.bf16.msra.mxu0 0
        %3142 = vmatprep.subr.bf16.mxu0 0
        %3143 = vmatpush1.bf16.msra.mxu0 0
        %3144 = vmatprep.subr.bf16.mxu0 0
        %3145 = vmatpush1.bf16.msra.mxu0 0
        %3146 = vmatprep.subr.bf16.mxu0 0
        %3147 = vmatpush1.bf16.msra.mxu0 0
        %3148 = vmatprep.mubr.bf16.mxu0 0
        %3149 = vmatmul.mubr.bf16.gmra.mrb[0].mxu0 %v3105
        %v3150 = vpop.f32.mrb[0].mxu0
        %v3151 = vadd.f32 %v3068, %v3150
        %v3152 = vpop.f32.mrb[0].mxu0
        %v3153 = vpop.f32.mrb[0].mxu0
        %v3154 = vadd.f32 %v3071, %v3153
        %v3155 = vpop.f32.mrb[0].mxu0
        %3156 = vmatprep.mubr.bf16.mxu0 0
        %3157 = vmatmul.mubr.bf16.gmra.mrb[0].mxu0 %v3108
        %v3158 = vpop.f32.mrb[0].mxu0
        %v3159 = vadd.f32 %v3076, %v3158
        %v3160 = vpop.f32.mrb[0].mxu0
        %v3161 = vpop.f32.mrb[0].mxu0
        %v3162 = vadd.f32 %v3079, %v3161
        %v3163 = vpop.f32.mrb[0].mxu0
        %3164 = vmatprep.mubr.bf16.mxu0 0
        %3165 = vmatmul.mubr.bf16.gmra.mrb[0].mxu0 %v3111
        %v3166 = vpop.f32.mrb[0].mxu0
        %v3167 = vadd.f32 %v3084, %v3166
        %v3168 = vpop.f32.mrb[0].mxu0
        %v3169 = vpop.f32.mrb[0].mxu0
        %v3170 = vadd.f32 %v3087, %v3169
        %v3171 = vpop.f32.mrb[0].mxu0
        %3172 = vmatprep.mubr.bf16.mxu0 0
        %3173 = vmatmul.mubr.bf16.gmra.mrb[0].mxu0 %v3114
        %v3174 = vpop.f32.mrb[0].mxu0
        %v3175 = vadd.f32 %v3092, %v3174
        %v3176 = vpop.f32.mrb[0].mxu0
        %v3177 = vpop.f32.mrb[0].mxu0
        %v3178 = vadd.f32 %v3095, %v3177
        %v3179 = vpop.f32.mrb[0].mxu0
        %3180 = vdwg.mxu0
        %v3181 = vrot.slane %v2971, 1
        %v3182 = vrot.slane %v2972, 1
        %v3183 = vrot.slane %v2973, 1
        %v3184 = vrot.slane %v2974, 1
        %v3185 = vrot.slane %v2975, 1
        %v3186 = vrot.slane %v2976, 1
        %v3187 = vrot.slane %v2977, 1
        %v3188 = vrot.slane %v2978, 1
        %v3189 = vsel %vm1203, %v3187, %v3188
        %v3190 = vsel %vm1203, %v3186, %v3187
        %v3191 = vsel %vm1203, %v3185, %v3186
        %v3192 = vsel %vm1203, %v3184, %v3185
        %v3193 = vsel %vm1203, %v3183, %v3184
        %v3194 = vsel %vm1203, %v3182, %v3183
        %v3195 = vsel %vm1203, %v3181, %v3182
        %v3196 = vsel %vm1203, %v3188, %v3181
        %v3197 = vsel %vm1214, %v3195, 0.0
        %v3198 = vsel %vm1215, %v3194, 0.0
        %v3199 = vsel %vm1214, %v3193, 0.0
        %v3200 = vsel %vm1215, %v3192, 0.0
        %v3201 = vsel %vm1214, %v3191, 0.0
        %v3202 = vsel %vm1215, %v3190, 0.0
        %v3203 = vsel %vm1214, %v3189, 0.0
        %v3204 = vsel %vm1215, %v3196, 0.0
        %v3205 = vpack.c.bf16 %v3198, %v3197
        %v3206 = vpack.c.bf16 %v3200, %v3199
        %v3207 = vpack.c.bf16 %v3202, %v3201
        %v3208 = vpack.c.bf16 %v3204, %v3203
        %v3209 = vld [vmem:[%s9] sm:$0xf]
        %v3210 = vld [vmem:[%s9 + $0x4] sm:$0xf]
        %v3213 = vunpack.c.l.b16 %v3209
        %v3214 = vunpack.c.l.b16 %v3210
        %v3215 = vpack.c.b16 %v3214, %v3213
        %v3218 = vsel %vm590, %v3205, 0
        %v3221 = vsel %vm590, %v3206, 0
        %v3224 = vsel %vm590, %v3207, 0
        %v3227 = vsel %vm590, %v3208, 0
        %3229 = vmatprep.subr.bf16.mxu0 0
        %3230 = vmatpush1.bf16.msra.mxu0 %v3215
        %3231 = vmatprep.subr.bf16.mxu0 0
        %3232 = vmatpush1.bf16.msra.mxu0 0
        %3233 = vmatprep.subr.bf16.mxu0 0
        %3234 = vmatpush1.bf16.msra.mxu0 0
        %3235 = vmatprep.subr.bf16.mxu0 0
        %3236 = vmatpush1.bf16.msra.mxu0 0
        %3237 = vmatprep.subr.bf16.mxu0 0
        %3238 = vmatpush1.bf16.msra.mxu0 0
        %3239 = vmatprep.subr.bf16.mxu0 0
        %3240 = vmatpush1.bf16.msra.mxu0 0
        %3241 = vmatprep.subr.bf16.mxu0 0
        %3242 = vmatpush1.bf16.msra.mxu0 0
        %3243 = vmatprep.subr.bf16.mxu0 0
        %3244 = vmatpush1.bf16.msra.mxu0 0
        %3245 = vmatprep.subr.bf16.mxu0 0
        %3246 = vmatpush1.bf16.msra.mxu0 0
        %3247 = vmatprep.subr.bf16.mxu0 0
        %3248 = vmatpush1.bf16.msra.mxu0 0
        %3249 = vmatprep.subr.bf16.mxu0 0
        %3250 = vmatpush1.bf16.msra.mxu0 0
        %3251 = vmatprep.subr.bf16.mxu0 0
        %3252 = vmatpush1.bf16.msra.mxu0 0
        %3253 = vmatprep.subr.bf16.mxu0 0
        %3254 = vmatpush1.bf16.msra.mxu0 0
        %3255 = vmatprep.subr.bf16.mxu0 0
        %3256 = vmatpush1.bf16.msra.mxu0 0
        %3257 = vmatprep.subr.bf16.mxu0 0
        %3258 = vmatpush1.bf16.msra.mxu0 0
        %3259 = vmatprep.subr.bf16.mxu0 0
        %3260 = vmatpush1.bf16.msra.mxu0 0
        %3261 = vmatprep.mubr.bf16.mxu0 0
        %3262 = vmatmul.mubr.bf16.gmra.mrb[0].mxu0 %v3218
        %v3263 = vpop.f32.mrb[0].mxu0
        %v3264 = vadd.f32 0.0, %v3263
        %v3265 = vpop.f32.mrb[0].mxu0
        %v3266 = vpop.f32.mrb[0].mxu0
        %v3267 = vadd.f32 0.0, %v3266
        %v3268 = vpop.f32.mrb[0].mxu0
        %3269 = vmatprep.mubr.bf16.mxu0 0
        %3270 = vmatmul.mubr.bf16.gmra.mrb[0].mxu0 %v3221
        %v3271 = vpop.f32.mrb[0].mxu0
        %v3272 = vadd.f32 0.0, %v3271
        %v3273 = vpop.f32.mrb[0].mxu0
        %v3274 = vpop.f32.mrb[0].mxu0
        %v3275 = vadd.f32 0.0, %v3274
        %v3276 = vpop.f32.mrb[0].mxu0
        %3277 = vmatprep.mubr.bf16.mxu0 0
        %3278 = vmatmul.mubr.bf16.gmra.mrb[0].mxu0 %v3224
        %v3279 = vpop.f32.mrb[0].mxu0
        %v3280 = vadd.f32 0.0, %v3279
        %v3281 = vpop.f32.mrb[0].mxu0
        %v3282 = vpop.f32.mrb[0].mxu0
        %v3283 = vadd.f32 0.0, %v3282
        %v3284 = vpop.f32.mrb[0].mxu0
        %3285 = vmatprep.mubr.bf16.mxu0 0
        %3286 = vmatmul.mubr.bf16.gmra.mrb[0].mxu0 %v3227
        %v3287 = vpop.f32.mrb[0].mxu0
        %v3288 = vadd.f32 0.0, %v3287
        %v3289 = vpop.f32.mrb[0].mxu0
        %v3290 = vpop.f32.mrb[0].mxu0
        %v3291 = vadd.f32 0.0, %v3290
        %v3292 = vpop.f32.mrb[0].mxu0
        %3293 = vdwg.mxu0
        %v3294 = vadd.f32 %v3151, %v3264
        %v3295 = vadd.f32 %v3154, %v3267
        %v3296 = vadd.f32 %v3159, %v3272
        %v3297 = vadd.f32 %v3162, %v3275
        %v3298 = vadd.f32 %v3167, %v3280
        %v3299 = vadd.f32 %v3170, %v3283
        %v3300 = vadd.f32 %v3175, %v3288
        %v3301 = vadd.f32 %v3178, %v3291
        %v3302 = vld [vmem:[%s10] sm:$0x1]
        %v3304 = vlaneseq
        %v3305 = vshrl.u32 %v3304, 7
        %v3306 = vsub.s32 0, %v3305
        %v3307 = vrot.slane %v3302, %v3306
        %v3309 = vadd.f32 %v3294, %v3307
        %v3310 = vadd.f32 %v3295, %v3307
        %v3311 = vadd.f32 %v3296, %v3307
        %v3312 = vadd.f32 %v3297, %v3307
        %v3313 = vadd.f32 %v3298, %v3307
        %v3314 = vadd.f32 %v3299, %v3307
        %v3315 = vadd.f32 %v3300, %v3307
        %v3316 = vadd.f32 %v3301, %v3307
        %3317 = vst [vmem:[%s461] sm:$0xff] %v3309
        %3318 = vst [vmem:[%s461 + $0x8] sm:$0xff] %v3310
        %3319 = vst [vmem:[%s461 + $0x10] sm:$0xff] %v3311
        %3320 = vst [vmem:[%s461 + $0x18] sm:$0xff] %v3312
        %3321 = vst [vmem:[%s461 + $0x20] sm:$0xff] %v3313
        %3322 = vst [vmem:[%s461 + $0x28] sm:$0xff] %v3314
        %3323 = vst [vmem:[%s461 + $0x30] sm:$0xff] %v3315
        %3324 = vst [vmem:[%s461 + $0x38] sm:$0xff] %v3316
        %s3325 = sand.u32 %s274, 1
        %s3326 = scalar_lea.sflag [#allocation4], %s3325
        %s3327 = sand.u32 %s274, 1
        %s3328 = smul.addr %s3327, 64
        %s3329 = scalar_lea.vmem [#allocation11], %s3328
        // Predicated region
        $region85: #{tpu_custom_call.1} parent=63 // pred_check
          %p3330 = pneg %p284
        $region86: #{tpu_custom_call.1} parent=63 // pred_check_branch
          %3332 = sbr.rel (%p3330) target = $region88
        $region87: #{tpu_custom_call.1} parent=63 // pred_region
          %s3333 = smul.u32 4, %s30
          %s3335 = ssub.s32 1024, 1024
          %3336 = vsyncadd %s3326, %s3335
          %s3337 = smul.addr %s3333, 2
          %s3338 = smul.addr %s3337, 128
          %s3339 = scalar_lea.hbm %s11, %s3338
          %s3340 = sshll.u32 %s3329, 4
          %s3341 = int_to_ptr.vmem [resolvable:$true] %s3340
          %3346 = dma.vmem_to_hbm [thread:$0]  %s3341, 1024, %s3339, %s3326, 128, 128, 8
        $region88: #{tpu_custom_call.1} parent=63 // pred_fallthru
          _
      $region64: #{tpu_custom_call.1} parent=5 // pred_fallthru
        _
      %p3347 = scmp.le.s32.totalorder 2, %s25
      // Predicated region
      $region89: #{tpu_custom_call.1} parent=5 // pred_check
        %p3348 = pneg %p3347
      $region90: #{tpu_custom_call.1} parent=5 // pred_check_branch
        %3350 = sbr.rel (%p3348) target = $region92
      $region91: #{tpu_custom_call.1} parent=5 // pred_region
        %s3351 = ssub.s32 %s25, 2
        // Predicated region
        $region93: #{tpu_custom_call.1} parent=91 // pred_check
          %p3352 = pneg %p290
        $region94: #{tpu_custom_call.1} parent=91 // pred_check_branch
          %3354 = sbr.rel (%p3352) target = $region96
        $region95: #{tpu_custom_call.1} parent=91 // pred_region
          %s3355 = sand.u32 %s275, 1
          %s3356 = scalar_lea.sflag [#allocation4], %s3355
          %s3357 = sand.u32 %s275, 1
          %s3358 = smul.addr %s3357, 64
          %s3359 = scalar_lea.vmem [#allocation11], %s3358
          %3360 = dma.done %s3356, 1024
        $region96: #{tpu_custom_call.1} parent=91 // pred_fallthru
          _
      $region92: #{tpu_custom_call.1} parent=5 // pred_fallthru
        _
    $region6: #{tpu_custom_call.1} parent=1 // loop_footer
      %s29 = sadd.s32 1, %s25
    $region7: #{tpu_custom_call.1} parent=1 // loop_footer_branch
      %24 = sbr.rel target = $region3
    $region8: #{tpu_custom_call.1} parent=1 // loop_exit
      _
    %3361 = vsyncpa [#allocation3], 1
    %s3362 = scalar_lea.sflag [#allocation3], 1
    %3363 = vsyncpa %s3362, 1
    %3364 = vsyncpa [#allocation6], 1
    %3365 = vsyncpa [#allocation9], 1
    %3366 = vsyncpa [#allocation4], 1
    %s3367 = scalar_lea.sflag [#allocation4], 1
    %3368 = vsyncpa %s3367, 1

</llo_original>
